<compile_context>
chip_gen: v7x
topology: tpu7x:2x2x1
jax: 0.10.0
libtpu: 0.0.40
codegen_flags: <defaults>
</compile_context>

<pallas_src>
import numpy as np

import jax
import jax.numpy as jnp
from jax.experimental import pallas as pl
from jax.experimental.pallas import tpu as pltpu

# ----------------------------- model configuration (scaled) -----------------
SR = 16000                      # orig sr == 16000 -> torchaudio resample is identity
AUDIO_LEN = 2560                # waveform samples per utterance
BATCH = 4                       # utterances per call (grid axis, "parallel")
CONV_KERNELS = (10, 3, 3, 3, 3, 2, 2)   # wav2vec2-base kernel sizes
CONV_STRIDES = (5, 2, 2, 2, 2, 2, 2)    # wav2vec2-base strides (x320 downsample)
CONV_DIM = 32                   # scaled from 512
HIDDEN = 32                     # scaled from 768
FFN = 64                        # scaled from 3072
NUM_LAYERS = 2                  # scaled from 12
NUM_HEADS = 2                   # scaled from 12
HEAD_DIM = HIDDEN // NUM_HEADS
VOCAB_SIZE = 32                 # true wav2vec2-base-960h CTC vocab size
POS_K = 4                       # scaled from 128 (even -> SamePad trims one frame)
POS_PAD = POS_K // 2

VOCAB = ["<pad>", "<s>", "</s>", "<unk>", "|", "E", "T", "A", "O", "N", "I",
         "H", "S", "R", "D", "L", "U", "M", "W", "C", "F", "G", "Y", "P", "B",
         "V", "K", "'", "X", "J", "Q", "Z"]


# ----------------------------- derived constants -----------------------------
def _conv_out_times():
    ts, t = [], AUDIO_LEN
    for k, s in zip(CONV_KERNELS, CONV_STRIDES):
        t = (t - k) // s + 1
        ts.append(t)
    return tuple(ts)


CONV_T = _conv_out_times()             # (511, 255, 127, 63, 31, 15, 7)
T_FINAL = CONV_T[-1]                   # 7 encoder frames

# Folded activation layout for the first conv layers (contiguous unfolds):
#   waveform folded by 20 samples/row -> conv0 output fold-4 (4 frames x 32 ch)
#   -> conv1 output fold-2 -> conv2 output dense.
WAVE_FOLD = 4 * CONV_STRIDES[0]        # 20 samples per waveform row
WAVE_ROWS = AUDIO_LEN // WAVE_FOLD     # 128
F0_ROWS = WAVE_ROWS                    # conv0 fold-4 rows
F1_ROWS = WAVE_ROWS                    # conv1 fold-2 rows

assert AUDIO_LEN % WAVE_FOLD == 0
assert CONV_KERNELS[0] == 2 * CONV_STRIDES[0]
assert CONV_T[0] == 4 * F0_ROWS - 1          # 511
assert CONV_T[1] == 2 * F1_ROWS - 1          # 255
assert CONV_T[2] == F1_ROWS - 1              # 127
assert CONV_DIM == HIDDEN                    # scratch shared by conv tail & pos-conv
assert T_FINAL + 2 * POS_PAD <= 64


# ----------------------------- packed parameter layout ----------------------
def _build_layout():
    """All weights live in one (PARAM_ROWS, 128) f32 array (static row offsets)."""
    layout = {}
    off = 0

    def add(name, nrows, ncols, align=8):
        nonlocal off
        off = (off + align - 1) // align * align
        layout[name] = (off, nrows, ncols)
        off += nrows

    add("conv0_w", 5 * CONV_STRIDES[0], 4 * CONV_DIM)   # (25,128) fold-4 block-Toeplitz
    add("conv1_w", 5 * CONV_DIM, 2 * CONV_DIM)          # (160,64) fold-4 -> fold-2
    for i in range(2, len(CONV_KERNELS)):
        add(f"conv{i}_w", CONV_KERNELS[i] * CONV_DIM, CONV_DIM)
    add("fp_w", CONV_DIM, HIDDEN)
    add("pos_w", POS_K * HIDDEN, HIDDEN)
    for l in range(NUM_LAYERS):
        add(f"l{l}_wqkv", HIDDEN, 3 * HIDDEN)           # wq|wk|wv fused
        add(f"l{l}_wo", HIDDEN, HIDDEN)
        add(f"l{l}_ffn_wi", HIDDEN, FFN)
        add(f"l{l}_ffn_wo", FFN, HIDDEN)
    add("lm_w", HIDDEN, VOCAB_SIZE)
    # 1-row vectors, packed densely at the tail.
    add("gn_g", 1, 4 * CONV_DIM, align=1)               # pre-tiled x4 for fold-4 layout
    add("gn_b", 1, 4 * CONV_DIM, align=1)
    for nm in ("fp_ln_g", "fp_ln_b", "fp_b", "pos_b", "enc_ln_g", "enc_ln_b"):
        add(nm, 1, HIDDEN, align=1)
    for l in range(NUM_LAYERS):
        add(f"l{l}_bqkv", 1, 3 * HIDDEN, align=1)
        add(f"l{l}_bo", 1, HIDDEN, align=1)
        add(f"l{l}_ln1_g", 1, HIDDEN, align=1)
        add(f"l{l}_ln1_b", 1, HIDDEN, align=1)
        add(f"l{l}_ffn_bi", 1, FFN, align=1)
        add(f"l{l}_ffn_bo", 1, HIDDEN, align=1)
        add(f"l{l}_ln2_g", 1, HIDDEN, align=1)
        add(f"l{l}_ln2_b", 1, HIDDEN, align=1)
    add("lm_b", 1, VOCAB_SIZE, align=1)
    total = (off + 7) // 8 * 8
    return layout, total


_LAYOUT, PARAM_ROWS = _build_layout()


# ----------------------------- small helpers --------------------------------
def _gelu(x):
    # tanh-approx GELU (EUP friendly); see TODO(synk) above.
    return jax.nn.gelu(x, approximate=True)


def _layer_norm(x, g, b, eps=1e-5):
    mean = jnp.mean(x, axis=-1, keepdims=True)
    var = jnp.mean((x - mean) ** 2, axis=-1, keepdims=True)
    return (x - mean) * jax.lax.rsqrt(var + eps) * g + b


def _w(p_ref, name):
    """Load one packed parameter (full 128-lane read, lane-slice the value)."""
    off, nrows, ncols = _LAYOUT[name]
    v = p_ref[pl.ds(off, nrows), :]
    return v if ncols == 128 else v[:, :ncols]


# ----------------------------- the fused Pallas kernel ----------------------
def wav2vec2_kernel(x_ref, p_ref, ids_ref, bufw, bufm, bufa, bufb):
    """Entire wav2vec2 forward for one utterance; weights/activations VMEM-resident."""
    C = CONV_DIM
    f32 = jnp.float32

    # -- Wav2Vec2Processor: zero-mean / unit-variance over the waveform -------
    xw = x_ref[pl.ds(0, WAVE_ROWS), :]                    # (128, 20) real samples
    mean = jnp.mean(xw)
    inv_std = jax.lax.rsqrt(jnp.mean((xw - mean) ** 2) + 1e-7)

    # -- conv0 (K=10, s=5) emitted directly in a time-fold-4 layout ------------
    # xa[r, l] == waveform sample 20*r + l (l = 0..24); last 5 lanes come from
    # the next row (the final row reads the zero-pad row appended in the wrapper).
    xa = jnp.concatenate(
        [xw, x_ref[pl.ds(1, WAVE_ROWS), :][:, :CONV_STRIDES[0]]], axis=-1)   # (128, 25)
    xa = (xa - mean) * inv_std                            # norm commutes with unfold
    f0 = jnp.dot(xa, _w(p_ref, "conv0_w"), preferred_element_type=f32)       # (128, 128)

    # GroupNorm(num_groups == num_channels) over the 511 valid frames; the last
    # 32-lane block of the last row is the nonexistent frame 511 (excluded).
    t0 = CONV_T[0]
    blocks = [f0[:, 0:C], f0[:, C:2 * C], f0[:, 2 * C:3 * C],
              f0[0:F0_ROWS - 1, 3 * C:4 * C]]
    gsum = sum(jnp.sum(b, axis=0, keepdims=True) for b in blocks)
    gsq = sum(jnp.sum(b * b, axis=0, keepdims=True) for b in blocks)
    gmu = gsum * (1.0 / t0)
    gvar = gsq * (1.0 / t0) - gmu * gmu
    mu4 = jnp.concatenate([gmu] * 4, axis=-1)
    inv4 = jnp.concatenate([jax.lax.rsqrt(gvar + 1e-5)] * 4, axis=-1)
    f0 = _gelu((f0 - mu4) * inv4 * _w(p_ref, "gn_g") + _w(p_ref, "gn_b"))
    bufw[pl.ds(0, F0_ROWS), :] = f0
    bufw[pl.ds(F0_ROWS, 8), :] = jnp.zeros((8, 4 * C), f32)   # tap over-read guard

    # -- conv1 (K=3, s=2): fold-4 input -> fold-2 output, contiguous reads -----
    xa1 = jnp.concatenate([bufw[pl.ds(0, F1_ROWS), :],
                           bufw[pl.ds(1, F1_ROWS), :][:, :C]], axis=-1)      # (128, 160)
    f1 = _gelu(jnp.dot(xa1, _w(p_ref, "conv1_w"), preferred_element_type=f32))  # (128, 64)
    bufm[...] = f1

    # -- conv2 (K=3, s=2): fold-2 input -> dense output, contiguous reads ------
    t2 = CONV_T[2]
    xa2 = jnp.concatenate([bufm[pl.ds(0, t2), :],
                           bufm[pl.ds(1, t2), :][:, :C]], axis=-1)           # (127, 96)
    y = _gelu(jnp.dot(xa2, _w(p_ref, "conv2_w"), preferred_element_type=f32))
    bufa[pl.ds(0, t2), :] = y

    # -- conv3..conv6: strided unfold + matmul + GELU (tiny row counts) --------
    src, dst = bufa, bufb
    for i in range(3, len(CONV_KERNELS)):
        K, st, t_out = CONV_KERNELS[i], CONV_STRIDES[i], CONV_T[i]
        taps = [src[pl.ds(k, t_out, stride=st), :] for k in range(K)]
        xc = jnp.concatenate(taps, axis=-1)               # (t_out, K*C)
        y = _gelu(jnp.dot(xc, _w(p_ref, f"conv{i}_w"), preferred_element_type=f32))
        if i + 1 < len(CONV_KERNELS):
            dst[pl.ds(0, t_out), :] = y
            src, dst = dst, src
    h = y                                                 # (T_FINAL, C), kept in vregs

    T = T_FINAL

    # -- feature projection: LayerNorm -> Linear (dropout == identity) ---------
    h = _layer_norm(h, _w(p_ref, "fp_ln_g"), _w(p_ref, "fp_ln_b"))
    h = jnp.dot(h, _w(p_ref, "fp_w"), preferred_element_type=f32) + _w(p_ref, "fp_b")

    # -- positional conv: pad -> conv(K=POS_K) -> SamePad trim -> GELU -> add -> LN
    t_pos = T + 2 * POS_PAD - POS_K + 1
    pbuf = bufa                                           # 32-wide scratch (y4 is dead)
    pbuf[pl.ds(0, POS_PAD), :] = jnp.zeros((POS_PAD, HIDDEN), f32)       # only pad rows
    pbuf[pl.ds(POS_PAD, T), :] = h
    pbuf[pl.ds(POS_PAD + T, POS_PAD), :] = jnp.zeros((POS_PAD, HIDDEN), f32)
    taps = [pbuf[pl.ds(k, t_pos), :] for k in range(POS_K)]
    pos = jnp.dot(jnp.concatenate(taps, axis=-1), _w(p_ref, "pos_w"),
                  preferred_element_type=f32) + _w(p_ref, "pos_b")       # (t_pos, H)
    pos = _gelu(pos)[0:T, :]                              # even kernel -> drop last frame
    h = _layer_norm(h + pos, _w(p_ref, "enc_ln_g"), _w(p_ref, "enc_ln_b"))

    # -- transformer encoder (post-norm, as in wav2vec2-base) ------------------
    scale = HEAD_DIM ** -0.5
    for l in range(NUM_LAYERS):
        qkv = (jnp.dot(h, _w(p_ref, f"l{l}_wqkv"), preferred_element_type=f32)
               + _w(p_ref, f"l{l}_bqkv"))                 # fused QKV: (T, 3H)
        q = qkv[:, 0:HIDDEN] * scale
        kx = qkv[:, HIDDEN:2 * HIDDEN]
        v = qkv[:, 2 * HIDDEN:3 * HIDDEN]
        ctx = []
        for hh in range(NUM_HEADS):
            lo = hh * HEAD_DIM
            qh = q[:, lo:lo + HEAD_DIM]
            kh = kx[:, lo:lo + HEAD_DIM]
            vh = v[:, lo:lo + HEAD_DIM]
            s = jnp.dot(qh, kh.T, preferred_element_type=f32)             # (T, T)
            s = s - jnp.max(s, axis=-1, keepdims=True)
            e = jnp.exp(s)
            prob = e * pl.reciprocal(jnp.sum(e, axis=-1, keepdims=True), approx=True)
            ctx.append(jnp.dot(prob, vh, preferred_element_type=f32))     # (T, hd)
        attn = (jnp.dot(jnp.concatenate(ctx, axis=-1), _w(p_ref, f"l{l}_wo"),
                        preferred_element_type=f32) + _w(p_ref, f"l{l}_bo"))
        h = _layer_norm(h + attn, _w(p_ref, f"l{l}_ln1_g"), _w(p_ref, f"l{l}_ln1_b"))
        ff = _gelu(jnp.dot(h, _w(p_ref, f"l{l}_ffn_wi"),
                           preferred_element_type=f32) + _w(p_ref, f"l{l}_ffn_bi"))
        ff = jnp.dot(ff, _w(p_ref, f"l{l}_ffn_wo"),
                     preferred_element_type=f32) + _w(p_ref, f"l{l}_ffn_bo")
        h = _layer_norm(h + ff, _w(p_ref, f"l{l}_ln2_g"), _w(p_ref, f"l{l}_ln2_b"))

    # -- lm_head + argmax over vocab; ids emitted as one (1, T) int32 row ------
    logits = jnp.dot(h, _w(p_ref, "lm_w"), preferred_element_type=f32) + _w(p_ref, "lm_b")
    lt = logits.T                                         # (VOCAB, T): vocab on sublanes
    mx = jnp.max(lt, axis=0, keepdims=True)               # (1, T)
    idx = jax.lax.broadcasted_iota(jnp.int32, lt.shape, 0).astype(f32)
    ids = jnp.min(jnp.where(lt >= mx, idx, jnp.float32(VOCAB_SIZE)),
                  axis=0, keepdims=True)                  # lowest index of the max
    ids_ref[...] = ids.astype(jnp.int32)


# ----------------------------- parameters -----------------------------------
def init_params(key):
    """Builds the single packed (PARAM_ROWS, 128) f32 parameter array."""
    P = np.zeros((PARAM_ROWS, 128), np.float32)
    kit = iter(jax.random.split(key, 64))

    def nrm(shape):
        return np.asarray(jax.random.normal(next(kit), shape, jnp.float32)) * 0.05

    def put(name, val):
        off, nrows, ncols = _LAYOUT[name]
        val = np.asarray(val, np.float32)
        assert val.shape == (nrows, ncols), (name, val.shape, (nrows, ncols))
        P[off:off + nrows, :ncols] = val

    C = CONV_DIM
    # conv0: base (10, 32) kernel -> fold-4 block-Toeplitz (25, 128).
    w0 = nrm((CONV_KERNELS[0], C))
    w0_4 = np.zeros((5 * CONV_STRIDES[0], 4 * C), np.float32)
    for j in range(4):
        w0_4[5 * j:5 * j + CONV_KERNELS[0], C * j:C * (j + 1)] = w0
    put("conv0_w", w0_4)
    # conv1: base flattened (K*C, C) kernel -> fold-4 -> fold-2 block form (160, 64).
    w1 = nrm((CONV_KERNELS[1] * C, C))
    w1_2 = np.zeros((5 * C, 2 * C), np.float32)
    w1_2[0:3 * C, 0:C] = w1
    w1_2[2 * C:5 * C, C:2 * C] = w1
    put("conv1_w", w1_2)
    for i in range(2, len(CONV_KERNELS)):
        put(f"conv{i}_w", nrm((CONV_KERNELS[i] * C, C)))
    # NOTE: conv_bias=False in wav2vec2-base -> conv biases are exactly zero (dropped).
    put("gn_g", np.tile(np.ones((1, C), np.float32), (1, 4)))
    put("gn_b", np.zeros((1, 4 * C), np.float32))
    put("fp_ln_g", np.ones((1, C), np.float32))
    put("fp_ln_b", np.zeros((1, C), np.float32))
    put("fp_w", nrm((C, HIDDEN)))
    put("fp_b", np.zeros((1, HIDDEN), np.float32))
    put("pos_w", nrm((POS_K * HIDDEN, HIDDEN)))
    put("pos_b", np.zeros((1, HIDDEN), np.float32))
    put("enc_ln_g", np.ones((1, HIDDEN), np.float32))
    put("enc_ln_b", np.zeros((1, HIDDEN), np.float32))
    for l in range(NUM_LAYERS):
        put(f"l{l}_wqkv", np.concatenate([nrm((HIDDEN, HIDDEN)) for _ in range(3)], axis=1))
        put(f"l{l}_bqkv", np.zeros((1, 3 * HIDDEN), np.float32))
        put(f"l{l}_wo", nrm((HIDDEN, HIDDEN)))
        put(f"l{l}_bo", np.zeros((1, HIDDEN), np.float32))
        put(f"l{l}_ln1_g", np.ones((1, HIDDEN), np.float32))
        put(f"l{l}_ln1_b", np.zeros((1, HIDDEN), np.float32))
        put(f"l{l}_ffn_wi", nrm((HIDDEN, FFN)))
        put(f"l{l}_ffn_bi", np.zeros((1, FFN), np.float32))
        put(f"l{l}_ffn_wo", nrm((FFN, HIDDEN)))
        put(f"l{l}_ffn_bo", np.zeros((1, HIDDEN), np.float32))
        put(f"l{l}_ln2_g", np.ones((1, HIDDEN), np.float32))
        put(f"l{l}_ln2_b", np.zeros((1, HIDDEN), np.float32))
    put("lm_w", nrm((HIDDEN, VOCAB_SIZE)))
    put("lm_b", np.zeros((1, VOCAB_SIZE), np.float32))
    return jnp.asarray(P)


# ----------------------------- forward ---------------------------------------
@jax.jit
def wav2vec2_forward(audio, packed_params):
    """audio: (B, AUDIO_LEN) waveforms at 16 kHz (resample 16k->16k is identity)."""
    b = audio.shape[0]
    # Time-fold the waveform by 20 samples/row so conv0's fold-4 unfold is two
    # contiguous in-kernel reads; one zero row is appended for the last tap.
    x = audio.reshape(b, WAVE_ROWS, WAVE_FOLD).astype(jnp.float32)
    x = jnp.pad(x, ((0, 0), (0, 1), (0, 0)))
    ids = pl.pallas_call(
        wav2vec2_kernel,
        grid=(b,),
        out_shape=jax.ShapeDtypeStruct((b, 1, T_FINAL), jnp.int32),
        in_specs=[
            pl.BlockSpec((None, WAVE_ROWS + 1, WAVE_FOLD), lambda i: (i, 0, 0)),
            # constant index_map -> the packed weights are DMA'd once and stay resident
            pl.BlockSpec((PARAM_ROWS, 128), lambda i: (0, 0)),
        ],
        out_specs=pl.BlockSpec((None, 1, T_FINAL), lambda i: (i, 0, 0)),
        scratch_shapes=[
            pltpu.VMEM((F0_ROWS + 8, 4 * CONV_DIM), jnp.float32),   # conv0 fold-4 output
            pltpu.VMEM((F1_ROWS, 2 * CONV_DIM), jnp.float32),       # conv1 fold-2 output
            pltpu.VMEM((128, CONV_DIM), jnp.float32),               # dense ping
            pltpu.VMEM((64, CONV_DIM), jnp.float32),                # dense pong / pos pad
        ],
        compiler_params=pltpu.CompilerParams(dimension_semantics=("parallel",)),
    )(x, packed_params)
    return ids[:, 0, :]


def ctc_decode(pred_ids):
    # processor.decode: collapse repeats, drop <pad>/specials, "|" -> " ".
    ids = [int(i) for i in np.asarray(jax.device_get(pred_ids)).tolist()]
    collapsed, prev = [], None
    for i in ids:
        if i != prev:
            collapsed.append(i)
        prev = i
    toks = [VOCAB[i] for i in collapsed
            if VOCAB[i] not in ("<pad>", "<s>", "</s>", "<unk>")]
    return "".join(toks).replace("|", " ").strip()


# ----------------------------- main ------------------------------------------
if __name__ == "__main__":
    key = jax.random.PRNGKey(0)
    k_audio, k_params = jax.random.split(key)

    # Batch of waveforms `s` sampled at SR = 16 kHz.
    audio = jax.random.normal(k_audio, (BATCH, AUDIO_LEN), dtype=jnp.float32)
    params = init_params(k_params)

    pred_ids = wav2vec2_forward(audio, params)
    pred_ids = jax.block_until_ready(pred_ids)

    transcriptions = [ctc_decode(pred_ids[b]) for b in range(BATCH)]   # host-side decode
    assert pred_ids.shape == (BATCH, T_FINAL) and pred_ids.dtype == jnp.int32
    assert all(isinstance(t, str) for t in transcriptions)

    print("KERNEL_OK")
</pallas_src>

<mosaic_0001>
module attributes {stable_mosaic.version = 11 : i64} {
  func.func @wav2vec2_kernel(%arg0: i32, %arg1: memref<1x129x20xf32, #tpu.memory_space<vmem>>, %arg2: memref<1152x128xf32, #tpu.memory_space<vmem>>, %arg3: memref<1x1x7xi32, #tpu.memory_space<vmem>>, %arg4: memref<136x128xf32, #tpu.memory_space<vmem>>, %arg5: memref<128x64xf32, #tpu.memory_space<vmem>>, %arg6: memref<128x32xf32, #tpu.memory_space<vmem>>, %arg7: memref<64x32xf32, #tpu.memory_space<vmem>>) attributes {dimension_semantics = [#tpu.dimension_semantics<parallel>], iteration_bounds = array<i64: 4>, scalar_prefetch = 0 : i64, scratch_operands = 4 : i64, tpu.core_type = #tpu.core_type<tc>, window_params = [{transform_indices = @transform_0, window_bounds = array<i64: 1, 129, 20>}, {pipeline_mode = #tpu.pipeline_mode<synchronous>, transform_indices = @transform_1, window_bounds = array<i64: 1152, 128>}, {transform_indices = @transform_2, window_bounds = array<i64: 1, 1, 7>}]} {
    %c0 = arith.constant 0 : index
    %c0_0 = arith.constant 0 : index
    %c0_1 = arith.constant 0 : index
    %0 = vector.load %arg1[%c0, %c0_0, %c0_1] : memref<1x129x20xf32, #tpu.memory_space<vmem>>, vector<1x128x20xf32>
    %1 = vector.shape_cast %0 : vector<1x128x20xf32> to vector<128x20xf32>
    %2 = vector.shape_cast %1 : vector<128x20xf32> to vector<1x128x20xf32>
    %cst = arith.constant dense<0.000000e+00> : vector<1xf32>
    %3 = vector.multi_reduction <add>, %2, %cst [1, 2] : vector<1x128x20xf32> to vector<1xf32>
    %4 = vector.shape_cast %3 : vector<1xf32> to vector<1x1x1xf32>
    %5 = vector.extract %4[0, 0, 0] : f32 from vector<1x1x1xf32>
    %cst_2 = arith.constant 2.560000e+03 : f32
    %6 = arith.divf %5, %cst_2 : f32
    %7 = vector.broadcast %6 : f32 to vector<128x20xf32>
    %8 = arith.subf %1, %7 : vector<128x20xf32>
    %9 = arith.mulf %8, %8 : vector<128x20xf32>
    %10 = vector.shape_cast %9 : vector<128x20xf32> to vector<1x128x20xf32>
    %cst_3 = arith.constant dense<0.000000e+00> : vector<1xf32>
    %11 = vector.multi_reduction <add>, %10, %cst_3 [1, 2] : vector<1x128x20xf32> to vector<1xf32>
    %12 = vector.shape_cast %11 : vector<1xf32> to vector<1x1x1xf32>
    %13 = vector.extract %12[0, 0, 0] : f32 from vector<1x1x1xf32>
    %cst_4 = arith.constant 2.560000e+03 : f32
    %14 = arith.divf %13, %cst_4 : f32
    %cst_5 = arith.constant 1.000000e-07 : f32
    %15 = arith.addf %14, %cst_5 : f32
    %16 = math.rsqrt %15 : f32
    %c0_6 = arith.constant 0 : index
    %c1 = arith.constant 1 : index
    %c0_7 = arith.constant 0 : index
    %17 = vector.load %arg1[%c0_6, %c1, %c0_7] : memref<1x129x20xf32, #tpu.memory_space<vmem>>, vector<1x128x20xf32>
    %18 = vector.shape_cast %17 : vector<1x128x20xf32> to vector<128x20xf32>
    %19 = vector.extract_strided_slice %18 {offsets = [0, 0], sizes = [128, 5], strides = [1, 1]} : vector<128x20xf32> to vector<128x5xf32>
    %20 = tpu.concatenate %1, %19 in 1 : vector<128x20xf32>, vector<128x5xf32> -> vector<128x25xf32>
    %21 = vector.broadcast %6 : f32 to vector<128x25xf32>
    %22 = arith.subf %20, %21 : vector<128x25xf32>
    %23 = vector.broadcast %16 : f32 to vector<128x25xf32>
    %24 = arith.mulf %22, %23 : vector<128x25xf32>
    %c0_8 = arith.constant 0 : index
    %c0_9 = arith.constant 0 : index
    %25 = vector.load %arg2[%c0_8, %c0_9] : memref<1152x128xf32, #tpu.memory_space<vmem>>, vector<25x128xf32>
    %cst_10 = arith.constant dense<0.000000e+00> : vector<128x128xf32>
    %26 = tpu.matmul %24, %25, %cst_10 {dimension_numbers = #tpu.dot_dimension_numbers<[1], [0], [0], [1], [0, 0, 1, 1], [], []>} : vector<128x25xf32>, vector<25x128xf32>, vector<128x128xf32> -> vector<128x128xf32>
    %27 = vector.extract_strided_slice %26 {offsets = [0, 0], sizes = [128, 32], strides = [1, 1]} : vector<128x128xf32> to vector<128x32xf32>
    %28 = vector.extract_strided_slice %26 {offsets = [0, 32], sizes = [128, 32], strides = [1, 1]} : vector<128x128xf32> to vector<128x32xf32>
    %29 = vector.extract_strided_slice %26 {offsets = [0, 64], sizes = [128, 32], strides = [1, 1]} : vector<128x128xf32> to vector<128x32xf32>
    %30 = vector.extract_strided_slice %26 {offsets = [0, 96], sizes = [127, 32], strides = [1, 1]} : vector<128x128xf32> to vector<127x32xf32>
    %cst_11 = arith.constant dense<0.000000e+00> : vector<32xf32>
    %31 = vector.multi_reduction <add>, %27, %cst_11 [0] : vector<128x32xf32> to vector<32xf32>
    %32 = vector.shape_cast %31 : vector<32xf32> to vector<1x32xf32>
    %cst_12 = arith.constant 0.000000e+00 : f32
    %33 = vector.broadcast %cst_12 : f32 to vector<1x32xf32>
    %34 = arith.addf %33, %32 : vector<1x32xf32>
    %cst_13 = arith.constant dense<0.000000e+00> : vector<32xf32>
    %35 = vector.multi_reduction <add>, %28, %cst_13 [0] : vector<128x32xf32> to vector<32xf32>
    %36 = vector.shape_cast %35 : vector<32xf32> to vector<1x32xf32>
    %37 = arith.addf %34, %36 : vector<1x32xf32>
    %cst_14 = arith.constant dense<0.000000e+00> : vector<32xf32>
    %38 = vector.multi_reduction <add>, %29, %cst_14 [0] : vector<128x32xf32> to vector<32xf32>
    %39 = vector.shape_cast %38 : vector<32xf32> to vector<1x32xf32>
    %40 = arith.addf %37, %39 : vector<1x32xf32>
    %cst_15 = arith.constant dense<0.000000e+00> : vector<32xf32>
    %41 = vector.multi_reduction <add>, %30, %cst_15 [0] : vector<127x32xf32> to vector<32xf32>
    %42 = vector.shape_cast %41 : vector<32xf32> to vector<1x32xf32>
    %43 = arith.addf %40, %42 : vector<1x32xf32>
    %44 = arith.mulf %27, %27 : vector<128x32xf32>
    %cst_16 = arith.constant dense<0.000000e+00> : vector<32xf32>
    %45 = vector.multi_reduction <add>, %44, %cst_16 [0] : vector<128x32xf32> to vector<32xf32>
    %46 = vector.shape_cast %45 : vector<32xf32> to vector<1x32xf32>
    %cst_17 = arith.constant 0.000000e+00 : f32
    %47 = vector.broadcast %cst_17 : f32 to vector<1x32xf32>
    %48 = arith.addf %47, %46 : vector<1x32xf32>
    %49 = arith.mulf %28, %28 : vector<128x32xf32>
    %cst_18 = arith.constant dense<0.000000e+00> : vector<32xf32>
    %50 = vector.multi_reduction <add>, %49, %cst_18 [0] : vector<128x32xf32> to vector<32xf32>
    %51 = vector.shape_cast %50 : vector<32xf32> to vector<1x32xf32>
    %52 = arith.addf %48, %51 : vector<1x32xf32>
    %53 = arith.mulf %29, %29 : vector<128x32xf32>
    %cst_19 = arith.constant dense<0.000000e+00> : vector<32xf32>
    %54 = vector.multi_reduction <add>, %53, %cst_19 [0] : vector<128x32xf32> to vector<32xf32>
    %55 = vector.shape_cast %54 : vector<32xf32> to vector<1x32xf32>
    %56 = arith.addf %52, %55 : vector<1x32xf32>
    %57 = arith.mulf %30, %30 : vector<127x32xf32>
    %cst_20 = arith.constant dense<0.000000e+00> : vector<32xf32>
    %58 = vector.multi_reduction <add>, %57, %cst_20 [0] : vector<127x32xf32> to vector<32xf32>
    %59 = vector.shape_cast %58 : vector<32xf32> to vector<1x32xf32>
    %60 = arith.addf %56, %59 : vector<1x32xf32>
    %cst_21 = arith.constant 0.00195694715 : f32
    %61 = vector.broadcast %cst_21 : f32 to vector<1x32xf32>
    %62 = arith.mulf %43, %61 : vector<1x32xf32>
    %cst_22 = arith.constant 0.00195694715 : f32
    %63 = vector.broadcast %cst_22 : f32 to vector<1x32xf32>
    %64 = arith.mulf %60, %63 : vector<1x32xf32>
    %65 = arith.mulf %62, %62 : vector<1x32xf32>
    %66 = arith.subf %64, %65 : vector<1x32xf32>
    %67 = tpu.concatenate %62, %62, %62, %62 in 1 : vector<1x32xf32>, vector<1x32xf32>, vector<1x32xf32>, vector<1x32xf32> -> vector<1x128xf32>
    %cst_23 = arith.constant 9.99999974E-6 : f32
    %68 = vector.broadcast %cst_23 : f32 to vector<1x32xf32>
    %69 = arith.addf %66, %68 : vector<1x32xf32>
    %70 = math.rsqrt %69 : vector<1x32xf32>
    %71 = tpu.concatenate %70, %70, %70, %70 in 1 : vector<1x32xf32>, vector<1x32xf32>, vector<1x32xf32>, vector<1x32xf32> -> vector<1x128xf32>
    %72 = vector.broadcast %67 : vector<1x128xf32> to vector<128x128xf32>
    %73 = arith.subf %26, %72 : vector<128x128xf32>
    %74 = vector.broadcast %71 : vector<1x128xf32> to vector<128x128xf32>
    %75 = arith.mulf %73, %74 : vector<128x128xf32>
    %c1120 = arith.constant 1120 : index
    %c0_24 = arith.constant 0 : index
    %76 = vector.load %arg2[%c1120, %c0_24] : memref<1152x128xf32, #tpu.memory_space<vmem>>, vector<1x128xf32>
    %77 = vector.broadcast %76 : vector<1x128xf32> to vector<128x128xf32>
    %78 = arith.mulf %75, %77 : vector<128x128xf32>
    %c1121 = arith.constant 1121 : index
    %c0_25 = arith.constant 0 : index
    %79 = vector.load %arg2[%c1121, %c0_25] : memref<1152x128xf32, #tpu.memory_space<vmem>>, vector<1x128xf32>
    %80 = vector.broadcast %79 : vector<1x128xf32> to vector<128x128xf32>
    %81 = arith.addf %78, %80 : vector<128x128xf32>
    %82 = arith.mulf %81, %81 : vector<128x128xf32>
    %83 = arith.mulf %81, %82 : vector<128x128xf32>
    %cst_26 = arith.constant 4.471500e-02 : f32
    %84 = vector.broadcast %cst_26 : f32 to vector<128x128xf32>
    %85 = arith.mulf %84, %83 : vector<128x128xf32>
    %86 = arith.addf %81, %85 : vector<128x128xf32>
    %cst_27 = arith.constant 0.797884583 : f32
    %87 = vector.broadcast %cst_27 : f32 to vector<128x128xf32>
    %88 = arith.mulf %87, %86 : vector<128x128xf32>
    %89 = math.tanh %88 : vector<128x128xf32>
    %cst_28 = arith.constant 1.000000e+00 : f32
    %90 = vector.broadcast %cst_28 : f32 to vector<128x128xf32>
    %91 = arith.addf %90, %89 : vector<128x128xf32>
    %cst_29 = arith.constant 5.000000e-01 : f32
    %92 = vector.broadcast %cst_29 : f32 to vector<128x128xf32>
    %93 = arith.mulf %92, %91 : vector<128x128xf32>
    %94 = arith.mulf %81, %93 : vector<128x128xf32>
    %c0_30 = arith.constant 0 : index
    %c0_31 = arith.constant 0 : index
    %95 = vector.load %arg4[%c0_30, %c0_31] : memref<136x128xf32, #tpu.memory_space<vmem>>, vector<128x128xf32>
    tpu.vector_store %arg4[%c0_30, %c0_31], %94 {strides = array<i32>} : memref<136x128xf32, #tpu.memory_space<vmem>>, vector<128x128xf32>,
    %cst_32 = arith.constant 0.000000e+00 : f32
    %96 = vector.broadcast %cst_32 : f32 to vector<8x128xf32>
    %c128 = arith.constant 128 : index
    %c0_33 = arith.constant 0 : index
    %97 = vector.load %arg4[%c128, %c0_33] : memref<136x128xf32, #tpu.memory_space<vmem>>, vector<8x128xf32>
    tpu.vector_store %arg4[%c128, %c0_33], %96 {strides = array<i32>} : memref<136x128xf32, #tpu.memory_space<vmem>>, vector<8x128xf32>,
    %c0_34 = arith.constant 0 : index
    %c0_35 = arith.constant 0 : index
    %98 = vector.load %arg4[%c0_34, %c0_35] : memref<136x128xf32, #tpu.memory_space<vmem>>, vector<128x128xf32>
    %c1_36 = arith.constant 1 : index
    %c0_37 = arith.constant 0 : index
    %99 = vector.load %arg4[%c1_36, %c0_37] : memref<136x128xf32, #tpu.memory_space<vmem>>, vector<128x128xf32>
    %100 = vector.extract_strided_slice %99 {offsets = [0, 0], sizes = [128, 32], strides = [1, 1]} : vector<128x128xf32> to vector<128x32xf32>
    %101 = tpu.concatenate %98, %100 in 1 : vector<128x128xf32>, vector<128x32xf32> -> vector<128x160xf32>
    %c32 = arith.constant 32 : index
    %c0_38 = arith.constant 0 : index
    %102 = vector.load %arg2[%c32, %c0_38] : memref<1152x128xf32, #tpu.memory_space<vmem>>, vector<160x128xf32>
    %103 = vector.extract_strided_slice %102 {offsets = [0, 0], sizes = [160, 64], strides = [1, 1]} : vector<160x128xf32> to vector<160x64xf32>
    %cst_39 = arith.constant dense<0.000000e+00> : vector<128x64xf32>
    %104 = tpu.matmul %101, %103, %cst_39 {dimension_numbers = #tpu.dot_dimension_numbers<[1], [0], [0], [1], [0, 0, 1, 1], [], []>} : vector<128x160xf32>, vector<160x64xf32>, vector<128x64xf32> -> vector<128x64xf32>
    %105 = arith.mulf %104, %104 : vector<128x64xf32>
    %106 = arith.mulf %104, %105 : vector<128x64xf32>
    %cst_40 = arith.constant 4.471500e-02 : f32
    %107 = vector.broadcast %cst_40 : f32 to vector<128x64xf32>
    %108 = arith.mulf %107, %106 : vector<128x64xf32>
    %109 = arith.addf %104, %108 : vector<128x64xf32>
    %cst_41 = arith.constant 0.797884583 : f32
    %110 = vector.broadcast %cst_41 : f32 to vector<128x64xf32>
    %111 = arith.mulf %110, %109 : vector<128x64xf32>
    %112 = math.tanh %111 : vector<128x64xf32>
    %cst_42 = arith.constant 1.000000e+00 : f32
    %113 = vector.broadcast %cst_42 : f32 to vector<128x64xf32>
    %114 = arith.addf %113, %112 : vector<128x64xf32>
    %cst_43 = arith.constant 5.000000e-01 : f32
    %115 = vector.broadcast %cst_43 : f32 to vector<128x64xf32>
    %116 = arith.mulf %115, %114 : vector<128x64xf32>
    %117 = arith.mulf %104, %116 : vector<128x64xf32>
    %c0_44 = arith.constant 0 : index
    %c0_45 = arith.constant 0 : index
    %118 = vector.load %arg5[%c0_44, %c0_45] : memref<128x64xf32, #tpu.memory_space<vmem>>, vector<128x64xf32>
    tpu.vector_store %arg5[%c0_44, %c0_45], %117 {strides = array<i32>} : memref<128x64xf32, #tpu.memory_space<vmem>>, vector<128x64xf32>,
    %c0_46 = arith.constant 0 : index
    %c0_47 = arith.constant 0 : index
    %119 = vector.load %arg5[%c0_46, %c0_47] : memref<128x64xf32, #tpu.memory_space<vmem>>, vector<127x64xf32>
    %c1_48 = arith.constant 1 : index
    %c0_49 = arith.constant 0 : index
    %120 = vector.load %arg5[%c1_48, %c0_49] : memref<128x64xf32, #tpu.memory_space<vmem>>, vector<127x64xf32>
    %121 = vector.extract_strided_slice %120 {offsets = [0, 0], sizes = [127, 32], strides = [1, 1]} : vector<127x64xf32> to vector<127x32xf32>
    %122 = tpu.concatenate %119, %121 in 1 : vector<127x64xf32>, vector<127x32xf32> -> vector<127x96xf32>
    %c192 = arith.constant 192 : index
    %c0_50 = arith.constant 0 : index
    %123 = vector.load %arg2[%c192, %c0_50] : memref<1152x128xf32, #tpu.memory_space<vmem>>, vector<96x128xf32>
    %124 = vector.extract_strided_slice %123 {offsets = [0, 0], sizes = [96, 32], strides = [1, 1]} : vector<96x128xf32> to vector<96x32xf32>
    %cst_51 = arith.constant dense<0.000000e+00> : vector<127x32xf32>
    %125 = tpu.matmul %122, %124, %cst_51 {dimension_numbers = #tpu.dot_dimension_numbers<[1], [0], [0], [1], [0, 0, 1, 1], [], []>} : vector<127x96xf32>, vector<96x32xf32>, vector<127x32xf32> -> vector<127x32xf32>
    %126 = arith.mulf %125, %125 : vector<127x32xf32>
    %127 = arith.mulf %125, %126 : vector<127x32xf32>
    %cst_52 = arith.constant 4.471500e-02 : f32
    %128 = vector.broadcast %cst_52 : f32 to vector<127x32xf32>
    %129 = arith.mulf %128, %127 : vector<127x32xf32>
    %130 = arith.addf %125, %129 : vector<127x32xf32>
    %cst_53 = arith.constant 0.797884583 : f32
    %131 = vector.broadcast %cst_53 : f32 to vector<127x32xf32>
    %132 = arith.mulf %131, %130 : vector<127x32xf32>
    %133 = math.tanh %132 : vector<127x32xf32>
    %cst_54 = arith.constant 1.000000e+00 : f32
    %134 = vector.broadcast %cst_54 : f32 to vector<127x32xf32>
    %135 = arith.addf %134, %133 : vector<127x32xf32>
    %cst_55 = arith.constant 5.000000e-01 : f32
    %136 = vector.broadcast %cst_55 : f32 to vector<127x32xf32>
    %137 = arith.mulf %136, %135 : vector<127x32xf32>
    %138 = arith.mulf %125, %137 : vector<127x32xf32>
    %c0_56 = arith.constant 0 : index
    %c0_57 = arith.constant 0 : index
    %139 = vector.load %arg6[%c0_56, %c0_57] : memref<128x32xf32, #tpu.memory_space<vmem>>, vector<127x32xf32>
    tpu.vector_store %arg6[%c0_56, %c0_57], %138 {strides = array<i32>} : memref<128x32xf32, #tpu.memory_space<vmem>>, vector<127x32xf32>,
    %c0_58 = arith.constant 0 : index
    %c0_59 = arith.constant 0 : index
    %140 = tpu.strided_load %arg6[%c0_58, %c0_59] {strides = array<i32: 2, 1>} : memref<128x32xf32, #tpu.memory_space<vmem>>, vector<63x32xf32>
    %c1_60 = arith.constant 1 : index
    %c0_61 = arith.constant 0 : index
    %141 = tpu.strided_load %arg6[%c1_60, %c0_61] {strides = array<i32: 2, 1>} : memref<128x32xf32, #tpu.memory_space<vmem>>, vector<63x32xf32>
    %c2 = arith.constant 2 : index
    %c0_62 = arith.constant 0 : index
    %142 = tpu.strided_load %arg6[%c2, %c0_62] {strides = array<i32: 2, 1>} : memref<128x32xf32, #tpu.memory_space<vmem>>, vector<63x32xf32>
    %143 = tpu.concatenate %140, %141, %142 in 1 : vector<63x32xf32>, vector<63x32xf32>, vector<63x32xf32> -> vector<63x96xf32>
    %c288 = arith.constant 288 : index
    %c0_63 = arith.constant 0 : index
    %144 = vector.load %arg2[%c288, %c0_63] : memref<1152x128xf32, #tpu.memory_space<vmem>>, vector<96x128xf32>
    %145 = vector.extract_strided_slice %144 {offsets = [0, 0], sizes = [96, 32], strides = [1, 1]} : vector<96x128xf32> to vector<96x32xf32>
    %cst_64 = arith.constant dense<0.000000e+00> : vector<63x32xf32>
    %146 = tpu.matmul %143, %145, %cst_64 {dimension_numbers = #tpu.dot_dimension_numbers<[1], [0], [0], [1], [0, 0, 1, 1], [], []>} : vector<63x96xf32>, vector<96x32xf32>, vector<63x32xf32> -> vector<63x32xf32>
    %147 = arith.mulf %146, %146 : vector<63x32xf32>
    %148 = arith.mulf %146, %147 : vector<63x32xf32>
    %cst_65 = arith.constant 4.471500e-02 : f32
    %149 = vector.broadcast %cst_65 : f32 to vector<63x32xf32>
    %150 = arith.mulf %149, %148 : vector<63x32xf32>
    %151 = arith.addf %146, %150 : vector<63x32xf32>
    %cst_66 = arith.constant 0.797884583 : f32
    %152 = vector.broadcast %cst_66 : f32 to vector<63x32xf32>
    %153 = arith.mulf %152, %151 : vector<63x32xf32>
    %154 = math.tanh %153 : vector<63x32xf32>
    %cst_67 = arith.constant 1.000000e+00 : f32
    %155 = vector.broadcast %cst_67 : f32 to vector<63x32xf32>
    %156 = arith.addf %155, %154 : vector<63x32xf32>
    %cst_68 = arith.constant 5.000000e-01 : f32
    %157 = vector.broadcast %cst_68 : f32 to vector<63x32xf32>
    %158 = arith.mulf %157, %156 : vector<63x32xf32>
    %159 = arith.mulf %146, %158 : vector<63x32xf32>
    %c0_69 = arith.constant 0 : index
    %c0_70 = arith.constant 0 : index
    %160 = vector.load %arg7[%c0_69, %c0_70] : memref<64x32xf32, #tpu.memory_space<vmem>>, vector<63x32xf32>
    tpu.vector_store %arg7[%c0_69, %c0_70], %159 {strides = array<i32>} : memref<64x32xf32, #tpu.memory_space<vmem>>, vector<63x32xf32>,
    %c0_71 = arith.constant 0 : index
    %c0_72 = arith.constant 0 : index
    %161 = tpu.strided_load %arg7[%c0_71, %c0_72] {strides = array<i32: 2, 1>} : memref<64x32xf32, #tpu.memory_space<vmem>>, vector<31x32xf32>
    %c1_73 = arith.constant 1 : index
    %c0_74 = arith.constant 0 : index
    %162 = tpu.strided_load %arg7[%c1_73, %c0_74] {strides = array<i32: 2, 1>} : memref<64x32xf32, #tpu.memory_space<vmem>>, vector<31x32xf32>
    %c2_75 = arith.constant 2 : index
    %c0_76 = arith.constant 0 : index
    %163 = tpu.strided_load %arg7[%c2_75, %c0_76] {strides = array<i32: 2, 1>} : memref<64x32xf32, #tpu.memory_space<vmem>>, vector<31x32xf32>
    %164 = tpu.concatenate %161, %162, %163 in 1 : vector<31x32xf32>, vector<31x32xf32>, vector<31x32xf32> -> vector<31x96xf32>
    %c384 = arith.constant 384 : index
    %c0_77 = arith.constant 0 : index
    %165 = vector.load %arg2[%c384, %c0_77] : memref<1152x128xf32, #tpu.memory_space<vmem>>, vector<96x128xf32>
    %166 = vector.extract_strided_slice %165 {offsets = [0, 0], sizes = [96, 32], strides = [1, 1]} : vector<96x128xf32> to vector<96x32xf32>
    %cst_78 = arith.constant dense<0.000000e+00> : vector<31x32xf32>
    %167 = tpu.matmul %164, %166, %cst_78 {dimension_numbers = #tpu.dot_dimension_numbers<[1], [0], [0], [1], [0, 0, 1, 1], [], []>} : vector<31x96xf32>, vector<96x32xf32>, vector<31x32xf32> -> vector<31x32xf32>
    %168 = arith.mulf %167, %167 : vector<31x32xf32>
    %169 = arith.mulf %167, %168 : vector<31x32xf32>
    %cst_79 = arith.constant 4.471500e-02 : f32
    %170 = vector.broadcast %cst_79 : f32 to vector<31x32xf32>
    %171 = arith.mulf %170, %169 : vector<31x32xf32>
    %172 = arith.addf %167, %171 : vector<31x32xf32>
    %cst_80 = arith.constant 0.797884583 : f32
    %173 = vector.broadcast %cst_80 : f32 to vector<31x32xf32>
    %174 = arith.mulf %173, %172 : vector<31x32xf32>
    %175 = math.tanh %174 : vector<31x32xf32>
    %cst_81 = arith.constant 1.000000e+00 : f32
    %176 = vector.broadcast %cst_81 : f32 to vector<31x32xf32>
    %177 = arith.addf %176, %175 : vector<31x32xf32>
    %cst_82 = arith.constant 5.000000e-01 : f32
    %178 = vector.broadcast %cst_82 : f32 to vector<31x32xf32>
    %179 = arith.mulf %178, %177 : vector<31x32xf32>
    %180 = arith.mulf %167, %179 : vector<31x32xf32>
    %c0_83 = arith.constant 0 : index
    %c0_84 = arith.constant 0 : index
    %181 = vector.load %arg6[%c0_83, %c0_84] : memref<128x32xf32, #tpu.memory_space<vmem>>, vector<31x32xf32>
    tpu.vector_store %arg6[%c0_83, %c0_84], %180 {strides = array<i32>} : memref<128x32xf32, #tpu.memory_space<vmem>>, vector<31x32xf32>,
    %c0_85 = arith.constant 0 : index
    %c0_86 = arith.constant 0 : index
    %182 = tpu.strided_load %arg6[%c0_85, %c0_86] {strides = array<i32: 2, 1>} : memref<128x32xf32, #tpu.memory_space<vmem>>, vector<15x32xf32>
    %c1_87 = arith.constant 1 : index
    %c0_88 = arith.constant 0 : index
    %183 = tpu.strided_load %arg6[%c1_87, %c0_88] {strides = array<i32: 2, 1>} : memref<128x32xf32, #tpu.memory_space<vmem>>, vector<15x32xf32>
    %184 = tpu.concatenate %182, %183 in 1 : vector<15x32xf32>, vector<15x32xf32> -> vector<15x64xf32>
    %c480 = arith.constant 480 : index
    %c0_89 = arith.constant 0 : index
    %185 = vector.load %arg2[%c480, %c0_89] : memref<1152x128xf32, #tpu.memory_space<vmem>>, vector<64x128xf32>
    %186 = vector.extract_strided_slice %185 {offsets = [0, 0], sizes = [64, 32], strides = [1, 1]} : vector<64x128xf32> to vector<64x32xf32>
    %cst_90 = arith.constant dense<0.000000e+00> : vector<15x32xf32>
    %187 = tpu.matmul %184, %186, %cst_90 {dimension_numbers = #tpu.dot_dimension_numbers<[1], [0], [0], [1], [0, 0, 1, 1], [], []>} : vector<15x64xf32>, vector<64x32xf32>, vector<15x32xf32> -> vector<15x32xf32>
    %188 = arith.mulf %187, %187 : vector<15x32xf32>
    %189 = arith.mulf %187, %188 : vector<15x32xf32>
    %cst_91 = arith.constant 4.471500e-02 : f32
    %190 = vector.broadcast %cst_91 : f32 to vector<15x32xf32>
    %191 = arith.mulf %190, %189 : vector<15x32xf32>
    %192 = arith.addf %187, %191 : vector<15x32xf32>
    %cst_92 = arith.constant 0.797884583 : f32
    %193 = vector.broadcast %cst_92 : f32 to vector<15x32xf32>
    %194 = arith.mulf %193, %192 : vector<15x32xf32>
    %195 = math.tanh %194 : vector<15x32xf32>
    %cst_93 = arith.constant 1.000000e+00 : f32
    %196 = vector.broadcast %cst_93 : f32 to vector<15x32xf32>
    %197 = arith.addf %196, %195 : vector<15x32xf32>
    %cst_94 = arith.constant 5.000000e-01 : f32
    %198 = vector.broadcast %cst_94 : f32 to vector<15x32xf32>
    %199 = arith.mulf %198, %197 : vector<15x32xf32>
    %200 = arith.mulf %187, %199 : vector<15x32xf32>
    %c0_95 = arith.constant 0 : index
    %c0_96 = arith.constant 0 : index
    %201 = vector.load %arg7[%c0_95, %c0_96] : memref<64x32xf32, #tpu.memory_space<vmem>>, vector<15x32xf32>
    tpu.vector_store %arg7[%c0_95, %c0_96], %200 {strides = array<i32>} : memref<64x32xf32, #tpu.memory_space<vmem>>, vector<15x32xf32>,
    %c0_97 = arith.constant 0 : index
    %c0_98 = arith.constant 0 : index
    %202 = tpu.strided_load %arg7[%c0_97, %c0_98] {strides = array<i32: 2, 1>} : memref<64x32xf32, #tpu.memory_space<vmem>>, vector<7x32xf32>
    %c1_99 = arith.constant 1 : index
    %c0_100 = arith.constant 0 : index
    %203 = tpu.strided_load %arg7[%c1_99, %c0_100] {strides = array<i32: 2, 1>} : memref<64x32xf32, #tpu.memory_space<vmem>>, vector<7x32xf32>
    %204 = tpu.concatenate %202, %203 in 1 : vector<7x32xf32>, vector<7x32xf32> -> vector<7x64xf32>
    %c544 = arith.constant 544 : index
    %c0_101 = arith.constant 0 : index
    %205 = vector.load %arg2[%c544, %c0_101] : memref<1152x128xf32, #tpu.memory_space<vmem>>, vector<64x128xf32>
    %206 = vector.extract_strided_slice %205 {offsets = [0, 0], sizes = [64, 32], strides = [1, 1]} : vector<64x128xf32> to vector<64x32xf32>
    %cst_102 = arith.constant dense<0.000000e+00> : vector<7x32xf32>
    %207 = tpu.matmul %204, %206, %cst_102 {dimension_numbers = #tpu.dot_dimension_numbers<[1], [0], [0], [1], [0, 0, 1, 1], [], []>} : vector<7x64xf32>, vector<64x32xf32>, vector<7x32xf32> -> vector<7x32xf32>
    %208 = arith.mulf %207, %207 : vector<7x32xf32>
    %209 = arith.mulf %207, %208 : vector<7x32xf32>
    %cst_103 = arith.constant 4.471500e-02 : f32
    %210 = vector.broadcast %cst_103 : f32 to vector<7x32xf32>
    %211 = arith.mulf %210, %209 : vector<7x32xf32>
    %212 = arith.addf %207, %211 : vector<7x32xf32>
    %cst_104 = arith.constant 0.797884583 : f32
    %213 = vector.broadcast %cst_104 : f32 to vector<7x32xf32>
    %214 = arith.mulf %213, %212 : vector<7x32xf32>
    %215 = math.tanh %214 : vector<7x32xf32>
    %cst_105 = arith.constant 1.000000e+00 : f32
    %216 = vector.broadcast %cst_105 : f32 to vector<7x32xf32>
    %217 = arith.addf %216, %215 : vector<7x32xf32>
    %cst_106 = arith.constant 5.000000e-01 : f32
    %218 = vector.broadcast %cst_106 : f32 to vector<7x32xf32>
    %219 = arith.mulf %218, %217 : vector<7x32xf32>
    %220 = arith.mulf %207, %219 : vector<7x32xf32>
    %c1122 = arith.constant 1122 : index
    %c0_107 = arith.constant 0 : index
    %221 = vector.load %arg2[%c1122, %c0_107] : memref<1152x128xf32, #tpu.memory_space<vmem>>, vector<1x128xf32>
    %222 = vector.extract_strided_slice %221 {offsets = [0, 0], sizes = [1, 32], strides = [1, 1]} : vector<1x128xf32> to vector<1x32xf32>
    %c1123 = arith.constant 1123 : index
    %c0_108 = arith.constant 0 : index
    %223 = vector.load %arg2[%c1123, %c0_108] : memref<1152x128xf32, #tpu.memory_space<vmem>>, vector<1x128xf32>
    %224 = vector.extract_strided_slice %223 {offsets = [0, 0], sizes = [1, 32], strides = [1, 1]} : vector<1x128xf32> to vector<1x32xf32>
    %cst_109 = arith.constant dense<0.000000e+00> : vector<7xf32>
    %225 = vector.multi_reduction <add>, %220, %cst_109 [1] : vector<7x32xf32> to vector<7xf32>
    %226 = vector.shape_cast %225 : vector<7xf32> to vector<7x1xf32>
    %cst_110 = arith.constant 3.200000e+01 : f32
    %227 = vector.broadcast %cst_110 : f32 to vector<7x1xf32>
    %228 = arith.divf %226, %227 : vector<7x1xf32>
    %229 = vector.broadcast %228 : vector<7x1xf32> to vector<7x32xf32>
    %230 = arith.subf %220, %229 : vector<7x32xf32>
    %231 = arith.mulf %230, %230 : vector<7x32xf32>
    %cst_111 = arith.constant dense<0.000000e+00> : vector<7xf32>
    %232 = vector.multi_reduction <add>, %231, %cst_111 [1] : vector<7x32xf32> to vector<7xf32>
    %233 = vector.shape_cast %232 : vector<7xf32> to vector<7x1xf32>
    %cst_112 = arith.constant 3.200000e+01 : f32
    %234 = vector.broadcast %cst_112 : f32 to vector<7x1xf32>
    %235 = arith.divf %233, %234 : vector<7x1xf32>
    %236 = vector.broadcast %228 : vector<7x1xf32> to vector<7x32xf32>
    %237 = arith.subf %220, %236 : vector<7x32xf32>
    %cst_113 = arith.constant 9.99999974E-6 : f32
    %238 = vector.broadcast %cst_113 : f32 to vector<7x1xf32>
    %239 = arith.addf %235, %238 : vector<7x1xf32>
    %240 = math.rsqrt %239 : vector<7x1xf32>
    %241 = vector.broadcast %240 : vector<7x1xf32> to vector<7x32xf32>
    %242 = arith.mulf %237, %241 : vector<7x32xf32>
    %243 = vector.broadcast %222 : vector<1x32xf32> to vector<7x32xf32>
    %244 = arith.mulf %242, %243 : vector<7x32xf32>
    %245 = vector.broadcast %224 : vector<1x32xf32> to vector<7x32xf32>
    %246 = arith.addf %244, %245 : vector<7x32xf32>
    %c608 = arith.constant 608 : index
    %c0_114 = arith.constant 0 : index
    %247 = vector.load %arg2[%c608, %c0_114] : memref<1152x128xf32, #tpu.memory_space<vmem>>, vector<32x128xf32>
    %248 = vector.extract_strided_slice %247 {offsets = [0, 0], sizes = [32, 32], strides = [1, 1]} : vector<32x128xf32> to vector<32x32xf32>
    %cst_115 = arith.constant dense<0.000000e+00> : vector<7x32xf32>
    %249 = tpu.matmul %246, %248, %cst_115 {dimension_numbers = #tpu.dot_dimension_numbers<[1], [0], [0], [1], [0, 0, 1, 1], [], []>} : vector<7x32xf32>, vector<32x32xf32>, vector<7x32xf32> -> vector<7x32xf32>
    %c1124 = arith.constant 1124 : index
    %c0_116 = arith.constant 0 : index
    %250 = vector.load %arg2[%c1124, %c0_116] : memref<1152x128xf32, #tpu.memory_space<vmem>>, vector<1x128xf32>
    %251 = vector.extract_strided_slice %250 {offsets = [0, 0], sizes = [1, 32], strides = [1, 1]} : vector<1x128xf32> to vector<1x32xf32>
    %252 = vector.broadcast %251 : vector<1x32xf32> to vector<7x32xf32>
    %253 = arith.addf %249, %252 : vector<7x32xf32>
    %cst_117 = arith.constant 0.000000e+00 : f32
    %254 = vector.broadcast %cst_117 : f32 to vector<2x32xf32>
    %c0_118 = arith.constant 0 : index
    %c0_119 = arith.constant 0 : index
    %255 = vector.load %arg6[%c0_118, %c0_119] : memref<128x32xf32, #tpu.memory_space<vmem>>, vector<2x32xf32>
    tpu.vector_store %arg6[%c0_118, %c0_119], %254 {strides = array<i32>} : memref<128x32xf32, #tpu.memory_space<vmem>>, vector<2x32xf32>,
    %c2_120 = arith.constant 2 : index
    %c0_121 = arith.constant 0 : index
    %256 = vector.load %arg6[%c2_120, %c0_121] : memref<128x32xf32, #tpu.memory_space<vmem>>, vector<7x32xf32>
    tpu.vector_store %arg6[%c2_120, %c0_121], %253 {strides = array<i32>} : memref<128x32xf32, #tpu.memory_space<vmem>>, vector<7x32xf32>,
    %cst_122 = arith.constant 0.000000e+00 : f32
    %257 = vector.broadcast %cst_122 : f32 to vector<2x32xf32>
    %c9 = arith.constant 9 : index
    %c0_123 = arith.constant 0 : index
    %258 = vector.load %arg6[%c9, %c0_123] : memref<128x32xf32, #tpu.memory_space<vmem>>, vector<2x32xf32>
    tpu.vector_store %arg6[%c9, %c0_123], %257 {strides = array<i32>} : memref<128x32xf32, #tpu.memory_space<vmem>>, vector<2x32xf32>,
    %c0_124 = arith.constant 0 : index
    %c0_125 = arith.constant 0 : index
    %259 = vector.load %arg6[%c0_124, %c0_125] : memref<128x32xf32, #tpu.memory_space<vmem>>, vector<8x32xf32>
    %c1_126 = arith.constant 1 : index
    %c0_127 = arith.constant 0 : index
    %260 = vector.load %arg6[%c1_126, %c0_127] : memref<128x32xf32, #tpu.memory_space<vmem>>, vector<8x32xf32>
    %c2_128 = arith.constant 2 : index
    %c0_129 = arith.constant 0 : index
    %261 = vector.load %arg6[%c2_128, %c0_129] : memref<128x32xf32, #tpu.memory_space<vmem>>, vector<8x32xf32>
    %c3 = arith.constant 3 : index
    %c0_130 = arith.constant 0 : index
    %262 = vector.load %arg6[%c3, %c0_130] : memref<128x32xf32, #tpu.memory_space<vmem>>, vector<8x32xf32>
    %263 = tpu.concatenate %259, %260, %261, %262 in 1 : vector<8x32xf32>, vector<8x32xf32>, vector<8x32xf32>, vector<8x32xf32> -> vector<8x128xf32>
    %c640 = arith.constant 640 : index
    %c0_131 = arith.constant 0 : index
    %264 = vector.load %arg2[%c640, %c0_131] : memref<1152x128xf32, #tpu.memory_space<vmem>>, vector<128x128xf32>
    %265 = vector.extract_strided_slice %264 {offsets = [0, 0], sizes = [128, 32], strides = [1, 1]} : vector<128x128xf32> to vector<128x32xf32>
    %cst_132 = arith.constant dense<0.000000e+00> : vector<8x32xf32>
    %266 = tpu.matmul %263, %265, %cst_132 {dimension_numbers = #tpu.dot_dimension_numbers<[1], [0], [0], [1], [0, 0, 1, 1], [], []>} : vector<8x128xf32>, vector<128x32xf32>, vector<8x32xf32> -> vector<8x32xf32>
    %c1125 = arith.constant 1125 : index
    %c0_133 = arith.constant 0 : index
    %267 = vector.load %arg2[%c1125, %c0_133] : memref<1152x128xf32, #tpu.memory_space<vmem>>, vector<1x128xf32>
    %268 = vector.extract_strided_slice %267 {offsets = [0, 0], sizes = [1, 32], strides = [1, 1]} : vector<1x128xf32> to vector<1x32xf32>
    %269 = vector.broadcast %268 : vector<1x32xf32> to vector<8x32xf32>
    %270 = arith.addf %266, %269 : vector<8x32xf32>
    %271 = arith.mulf %270, %270 : vector<8x32xf32>
    %272 = arith.mulf %270, %271 : vector<8x32xf32>
    %cst_134 = arith.constant 4.471500e-02 : f32
    %273 = vector.broadcast %cst_134 : f32 to vector<8x32xf32>
    %274 = arith.mulf %273, %272 : vector<8x32xf32>
    %275 = arith.addf %270, %274 : vector<8x32xf32>
    %cst_135 = arith.constant 0.797884583 : f32
    %276 = vector.broadcast %cst_135 : f32 to vector<8x32xf32>
    %277 = arith.mulf %276, %275 : vector<8x32xf32>
    %278 = math.tanh %277 : vector<8x32xf32>
    %cst_136 = arith.constant 1.000000e+00 : f32
    %279 = vector.broadcast %cst_136 : f32 to vector<8x32xf32>
    %280 = arith.addf %279, %278 : vector<8x32xf32>
    %cst_137 = arith.constant 5.000000e-01 : f32
    %281 = vector.broadcast %cst_137 : f32 to vector<8x32xf32>
    %282 = arith.mulf %281, %280 : vector<8x32xf32>
    %283 = arith.mulf %270, %282 : vector<8x32xf32>
    %284 = vector.extract_strided_slice %283 {offsets = [0, 0], sizes = [7, 32], strides = [1, 1]} : vector<8x32xf32> to vector<7x32xf32>
    %285 = arith.addf %253, %284 : vector<7x32xf32>
    %c1126 = arith.constant 1126 : index
    %c0_138 = arith.constant 0 : index
    %286 = vector.load %arg2[%c1126, %c0_138] : memref<1152x128xf32, #tpu.memory_space<vmem>>, vector<1x128xf32>
    %287 = vector.extract_strided_slice %286 {offsets = [0, 0], sizes = [1, 32], strides = [1, 1]} : vector<1x128xf32> to vector<1x32xf32>
    %c1127 = arith.constant 1127 : index
    %c0_139 = arith.constant 0 : index
    %288 = vector.load %arg2[%c1127, %c0_139] : memref<1152x128xf32, #tpu.memory_space<vmem>>, vector<1x128xf32>
    %289 = vector.extract_strided_slice %288 {offsets = [0, 0], sizes = [1, 32], strides = [1, 1]} : vector<1x128xf32> to vector<1x32xf32>
    %cst_140 = arith.constant dense<0.000000e+00> : vector<7xf32>
    %290 = vector.multi_reduction <add>, %285, %cst_140 [1] : vector<7x32xf32> to vector<7xf32>
    %291 = vector.shape_cast %290 : vector<7xf32> to vector<7x1xf32>
    %cst_141 = arith.constant 3.200000e+01 : f32
    %292 = vector.broadcast %cst_141 : f32 to vector<7x1xf32>
    %293 = arith.divf %291, %292 : vector<7x1xf32>
    %294 = vector.broadcast %293 : vector<7x1xf32> to vector<7x32xf32>
    %295 = arith.subf %285, %294 : vector<7x32xf32>
    %296 = arith.mulf %295, %295 : vector<7x32xf32>
    %cst_142 = arith.constant dense<0.000000e+00> : vector<7xf32>
    %297 = vector.multi_reduction <add>, %296, %cst_142 [1] : vector<7x32xf32> to vector<7xf32>
    %298 = vector.shape_cast %297 : vector<7xf32> to vector<7x1xf32>
    %cst_143 = arith.constant 3.200000e+01 : f32
    %299 = vector.broadcast %cst_143 : f32 to vector<7x1xf32>
    %300 = arith.divf %298, %299 : vector<7x1xf32>
    %301 = vector.broadcast %293 : vector<7x1xf32> to vector<7x32xf32>
    %302 = arith.subf %285, %301 : vector<7x32xf32>
    %cst_144 = arith.constant 9.99999974E-6 : f32
    %303 = vector.broadcast %cst_144 : f32 to vector<7x1xf32>
    %304 = arith.addf %300, %303 : vector<7x1xf32>
    %305 = math.rsqrt %304 : vector<7x1xf32>
    %306 = vector.broadcast %305 : vector<7x1xf32> to vector<7x32xf32>
    %307 = arith.mulf %302, %306 : vector<7x32xf32>
    %308 = vector.broadcast %287 : vector<1x32xf32> to vector<7x32xf32>
    %309 = arith.mulf %307, %308 : vector<7x32xf32>
    %310 = vector.broadcast %289 : vector<1x32xf32> to vector<7x32xf32>
    %311 = arith.addf %309, %310 : vector<7x32xf32>
    %c768 = arith.constant 768 : index
    %c0_145 = arith.constant 0 : index
    %312 = vector.load %arg2[%c768, %c0_145] : memref<1152x128xf32, #tpu.memory_space<vmem>>, vector<32x128xf32>
    %313 = vector.extract_strided_slice %312 {offsets = [0, 0], sizes = [32, 96], strides = [1, 1]} : vector<32x128xf32> to vector<32x96xf32>
    %cst_146 = arith.constant dense<0.000000e+00> : vector<7x96xf32>
    %314 = tpu.matmul %311, %313, %cst_146 {dimension_numbers = #tpu.dot_dimension_numbers<[1], [0], [0], [1], [0, 0, 1, 1], [], []>} : vector<7x32xf32>, vector<32x96xf32>, vector<7x96xf32> -> vector<7x96xf32>
    %c1128 = arith.constant 1128 : index
    %c0_147 = arith.constant 0 : index
    %315 = vector.load %arg2[%c1128, %c0_147] : memref<1152x128xf32, #tpu.memory_space<vmem>>, vector<1x128xf32>
    %316 = vector.extract_strided_slice %315 {offsets = [0, 0], sizes = [1, 96], strides = [1, 1]} : vector<1x128xf32> to vector<1x96xf32>
    %317 = vector.broadcast %316 : vector<1x96xf32> to vector<7x96xf32>
    %318 = arith.addf %314, %317 : vector<7x96xf32>
    %319 = vector.extract_strided_slice %318 {offsets = [0, 0], sizes = [7, 32], strides = [1, 1]} : vector<7x96xf32> to vector<7x32xf32>
    %cst_148 = arith.constant 2.500000e-01 : f32
    %320 = vector.broadcast %cst_148 : f32 to vector<7x32xf32>
    %321 = arith.mulf %319, %320 : vector<7x32xf32>
    %322 = vector.extract_strided_slice %318 {offsets = [0, 32], sizes = [7, 32], strides = [1, 1]} : vector<7x96xf32> to vector<7x32xf32>
    %323 = vector.extract_strided_slice %318 {offsets = [0, 64], sizes = [7, 32], strides = [1, 1]} : vector<7x96xf32> to vector<7x32xf32>
    %324 = vector.extract_strided_slice %321 {offsets = [0, 0], sizes = [7, 16], strides = [1, 1]} : vector<7x32xf32> to vector<7x16xf32>
    %325 = vector.extract_strided_slice %322 {offsets = [0, 0], sizes = [7, 16], strides = [1, 1]} : vector<7x32xf32> to vector<7x16xf32>
    %326 = vector.extract_strided_slice %323 {offsets = [0, 0], sizes = [7, 16], strides = [1, 1]} : vector<7x32xf32> to vector<7x16xf32>
    %327 = tpu.transpose %325, [1, 0] : vector<7x16xf32> -> vector<16x7xf32>
    %cst_149 = arith.constant dense<0.000000e+00> : vector<7x7xf32>
    %328 = tpu.matmul %324, %327, %cst_149 {dimension_numbers = #tpu.dot_dimension_numbers<[1], [0], [0], [1], [0, 0, 1, 1], [], []>} : vector<7x16xf32>, vector<16x7xf32>, vector<7x7xf32> -> vector<7x7xf32>
    %cst_150 = arith.constant dense<0xFF800000> : vector<7xf32>
    %329 = vector.multi_reduction <maximumf>, %328, %cst_150 [1] : vector<7x7xf32> to vector<7xf32>
    %330 = vector.shape_cast %329 : vector<7xf32> to vector<7x1xf32>
    %331 = vector.broadcast %330 : vector<7x1xf32> to vector<7x7xf32>
    %332 = arith.subf %328, %331 : vector<7x7xf32>
    %333 = math.exp %332 : vector<7x7xf32>
    %cst_151 = arith.constant dense<0.000000e+00> : vector<7xf32>
    %334 = vector.multi_reduction <add>, %333, %cst_151 [1] : vector<7x7xf32> to vector<7xf32>
    %335 = vector.shape_cast %334 : vector<7xf32> to vector<7x1xf32>
    %336 = tpu.reciprocal %335 {approx = true} : vector<7x1xf32> -> vector<7x1xf32>
    %337 = vector.broadcast %336 : vector<7x1xf32> to vector<7x7xf32>
    %338 = arith.mulf %333, %337 : vector<7x7xf32>
    %cst_152 = arith.constant dense<0.000000e+00> : vector<7x16xf32>
    %339 = tpu.matmul %338, %326, %cst_152 {dimension_numbers = #tpu.dot_dimension_numbers<[1], [0], [0], [1], [0, 0, 1, 1], [], []>} : vector<7x7xf32>, vector<7x16xf32>, vector<7x16xf32> -> vector<7x16xf32>
    %340 = vector.extract_strided_slice %321 {offsets = [0, 16], sizes = [7, 16], strides = [1, 1]} : vector<7x32xf32> to vector<7x16xf32>
    %341 = vector.extract_strided_slice %322 {offsets = [0, 16], sizes = [7, 16], strides = [1, 1]} : vector<7x32xf32> to vector<7x16xf32>
    %342 = vector.extract_strided_slice %323 {offsets = [0, 16], sizes = [7, 16], strides = [1, 1]} : vector<7x32xf32> to vector<7x16xf32>
    %343 = tpu.transpose %341, [1, 0] : vector<7x16xf32> -> vector<16x7xf32>
    %cst_153 = arith.constant dense<0.000000e+00> : vector<7x7xf32>
    %344 = tpu.matmul %340, %343, %cst_153 {dimension_numbers = #tpu.dot_dimension_numbers<[1], [0], [0], [1], [0, 0, 1, 1], [], []>} : vector<7x16xf32>, vector<16x7xf32>, vector<7x7xf32> -> vector<7x7xf32>
    %cst_154 = arith.constant dense<0xFF800000> : vector<7xf32>
    %345 = vector.multi_reduction <maximumf>, %344, %cst_154 [1] : vector<7x7xf32> to vector<7xf32>
    %346 = vector.shape_cast %345 : vector<7xf32> to vector<7x1xf32>
    %347 = vector.broadcast %346 : vector<7x1xf32> to vector<7x7xf32>
    %348 = arith.subf %344, %347 : vector<7x7xf32>
    %349 = math.exp %348 : vector<7x7xf32>
    %cst_155 = arith.constant dense<0.000000e+00> : vector<7xf32>
    %350 = vector.multi_reduction <add>, %349, %cst_155 [1] : vector<7x7xf32> to vector<7xf32>
    %351 = vector.shape_cast %350 : vector<7xf32> to vector<7x1xf32>
    %352 = tpu.reciprocal %351 {approx = true} : vector<7x1xf32> -> vector<7x1xf32>
    %353 = vector.broadcast %352 : vector<7x1xf32> to vector<7x7xf32>
    %354 = arith.mulf %349, %353 : vector<7x7xf32>
    %cst_156 = arith.constant dense<0.000000e+00> : vector<7x16xf32>
    %355 = tpu.matmul %354, %342, %cst_156 {dimension_numbers = #tpu.dot_dimension_numbers<[1], [0], [0], [1], [0, 0, 1, 1], [], []>} : vector<7x7xf32>, vector<7x16xf32>, vector<7x16xf32> -> vector<7x16xf32>
    %356 = tpu.concatenate %339, %355 in 1 : vector<7x16xf32>, vector<7x16xf32> -> vector<7x32xf32>
    %c800 = arith.constant 800 : index
    %c0_157 = arith.constant 0 : index
    %357 = vector.load %arg2[%c800, %c0_157] : memref<1152x128xf32, #tpu.memory_space<vmem>>, vector<32x128xf32>
    %358 = vector.extract_strided_slice %357 {offsets = [0, 0], sizes = [32, 32], strides = [1, 1]} : vector<32x128xf32> to vector<32x32xf32>
    %cst_158 = arith.constant dense<0.000000e+00> : vector<7x32xf32>
    %359 = tpu.matmul %356, %358, %cst_158 {dimension_numbers = #tpu.dot_dimension_numbers<[1], [0], [0], [1], [0, 0, 1, 1], [], []>} : vector<7x32xf32>, vector<32x32xf32>, vector<7x32xf32> -> vector<7x32xf32>
    %c1129 = arith.constant 1129 : index
    %c0_159 = arith.constant 0 : index
    %360 = vector.load %arg2[%c1129, %c0_159] : memref<1152x128xf32, #tpu.memory_space<vmem>>, vector<1x128xf32>
    %361 = vector.extract_strided_slice %360 {offsets = [0, 0], sizes = [1, 32], strides = [1, 1]} : vector<1x128xf32> to vector<1x32xf32>
    %362 = vector.broadcast %361 : vector<1x32xf32> to vector<7x32xf32>
    %363 = arith.addf %359, %362 : vector<7x32xf32>
    %364 = arith.addf %311, %363 : vector<7x32xf32>
    %c1130 = arith.constant 1130 : index
    %c0_160 = arith.constant 0 : index
    %365 = vector.load %arg2[%c1130, %c0_160] : memref<1152x128xf32, #tpu.memory_space<vmem>>, vector<1x128xf32>
    %366 = vector.extract_strided_slice %365 {offsets = [0, 0], sizes = [1, 32], strides = [1, 1]} : vector<1x128xf32> to vector<1x32xf32>
    %c1131 = arith.constant 1131 : index
    %c0_161 = arith.constant 0 : index
    %367 = vector.load %arg2[%c1131, %c0_161] : memref<1152x128xf32, #tpu.memory_space<vmem>>, vector<1x128xf32>
    %368 = vector.extract_strided_slice %367 {offsets = [0, 0], sizes = [1, 32], strides = [1, 1]} : vector<1x128xf32> to vector<1x32xf32>
    %cst_162 = arith.constant dense<0.000000e+00> : vector<7xf32>
    %369 = vector.multi_reduction <add>, %364, %cst_162 [1] : vector<7x32xf32> to vector<7xf32>
    %370 = vector.shape_cast %369 : vector<7xf32> to vector<7x1xf32>
    %cst_163 = arith.constant 3.200000e+01 : f32
    %371 = vector.broadcast %cst_163 : f32 to vector<7x1xf32>
    %372 = arith.divf %370, %371 : vector<7x1xf32>
    %373 = vector.broadcast %372 : vector<7x1xf32> to vector<7x32xf32>
    %374 = arith.subf %364, %373 : vector<7x32xf32>
    %375 = arith.mulf %374, %374 : vector<7x32xf32>
    %cst_164 = arith.constant dense<0.000000e+00> : vector<7xf32>
    %376 = vector.multi_reduction <add>, %375, %cst_164 [1] : vector<7x32xf32> to vector<7xf32>
    %377 = vector.shape_cast %376 : vector<7xf32> to vector<7x1xf32>
    %cst_165 = arith.constant 3.200000e+01 : f32
    %378 = vector.broadcast %cst_165 : f32 to vector<7x1xf32>
    %379 = arith.divf %377, %378 : vector<7x1xf32>
    %380 = vector.broadcast %372 : vector<7x1xf32> to vector<7x32xf32>
    %381 = arith.subf %364, %380 : vector<7x32xf32>
    %cst_166 = arith.constant 9.99999974E-6 : f32
    %382 = vector.broadcast %cst_166 : f32 to vector<7x1xf32>
    %383 = arith.addf %379, %382 : vector<7x1xf32>
    %384 = math.rsqrt %383 : vector<7x1xf32>
    %385 = vector.broadcast %384 : vector<7x1xf32> to vector<7x32xf32>
    %386 = arith.mulf %381, %385 : vector<7x32xf32>
    %387 = vector.broadcast %366 : vector<1x32xf32> to vector<7x32xf32>
    %388 = arith.mulf %386, %387 : vector<7x32xf32>
    %389 = vector.broadcast %368 : vector<1x32xf32> to vector<7x32xf32>
    %390 = arith.addf %388, %389 : vector<7x32xf32>
    %c832 = arith.constant 832 : index
    %c0_167 = arith.constant 0 : index
    %391 = vector.load %arg2[%c832, %c0_167] : memref<1152x128xf32, #tpu.memory_space<vmem>>, vector<32x128xf32>
    %392 = vector.extract_strided_slice %391 {offsets = [0, 0], sizes = [32, 64], strides = [1, 1]} : vector<32x128xf32> to vector<32x64xf32>
    %cst_168 = arith.constant dense<0.000000e+00> : vector<7x64xf32>
    %393 = tpu.matmul %390, %392, %cst_168 {dimension_numbers = #tpu.dot_dimension_numbers<[1], [0], [0], [1], [0, 0, 1, 1], [], []>} : vector<7x32xf32>, vector<32x64xf32>, vector<7x64xf32> -> vector<7x64xf32>
    %c1132 = arith.constant 1132 : index
    %c0_169 = arith.constant 0 : index
    %394 = vector.load %arg2[%c1132, %c0_169] : memref<1152x128xf32, #tpu.memory_space<vmem>>, vector<1x128xf32>
    %395 = vector.extract_strided_slice %394 {offsets = [0, 0], sizes = [1, 64], strides = [1, 1]} : vector<1x128xf32> to vector<1x64xf32>
    %396 = vector.broadcast %395 : vector<1x64xf32> to vector<7x64xf32>
    %397 = arith.addf %393, %396 : vector<7x64xf32>
    %398 = arith.mulf %397, %397 : vector<7x64xf32>
    %399 = arith.mulf %397, %398 : vector<7x64xf32>
    %cst_170 = arith.constant 4.471500e-02 : f32
    %400 = vector.broadcast %cst_170 : f32 to vector<7x64xf32>
    %401 = arith.mulf %400, %399 : vector<7x64xf32>
    %402 = arith.addf %397, %401 : vector<7x64xf32>
    %cst_171 = arith.constant 0.797884583 : f32
    %403 = vector.broadcast %cst_171 : f32 to vector<7x64xf32>
    %404 = arith.mulf %403, %402 : vector<7x64xf32>
    %405 = math.tanh %404 : vector<7x64xf32>
    %cst_172 = arith.constant 1.000000e+00 : f32
    %406 = vector.broadcast %cst_172 : f32 to vector<7x64xf32>
    %407 = arith.addf %406, %405 : vector<7x64xf32>
    %cst_173 = arith.constant 5.000000e-01 : f32
    %408 = vector.broadcast %cst_173 : f32 to vector<7x64xf32>
    %409 = arith.mulf %408, %407 : vector<7x64xf32>
    %410 = arith.mulf %397, %409 : vector<7x64xf32>
    %c864 = arith.constant 864 : index
    %c0_174 = arith.constant 0 : index
    %411 = vector.load %arg2[%c864, %c0_174] : memref<1152x128xf32, #tpu.memory_space<vmem>>, vector<64x128xf32>
    %412 = vector.extract_strided_slice %411 {offsets = [0, 0], sizes = [64, 32], strides = [1, 1]} : vector<64x128xf32> to vector<64x32xf32>
    %cst_175 = arith.constant dense<0.000000e+00> : vector<7x32xf32>
    %413 = tpu.matmul %410, %412, %cst_175 {dimension_numbers = #tpu.dot_dimension_numbers<[1], [0], [0], [1], [0, 0, 1, 1], [], []>} : vector<7x64xf32>, vector<64x32xf32>, vector<7x32xf32> -> vector<7x32xf32>
    %c1133 = arith.constant 1133 : index
    %c0_176 = arith.constant 0 : index
    %414 = vector.load %arg2[%c1133, %c0_176] : memref<1152x128xf32, #tpu.memory_space<vmem>>, vector<1x128xf32>
    %415 = vector.extract_strided_slice %414 {offsets = [0, 0], sizes = [1, 32], strides = [1, 1]} : vector<1x128xf32> to vector<1x32xf32>
    %416 = vector.broadcast %415 : vector<1x32xf32> to vector<7x32xf32>
    %417 = arith.addf %413, %416 : vector<7x32xf32>
    %418 = arith.addf %390, %417 : vector<7x32xf32>
    %c1134 = arith.constant 1134 : index
    %c0_177 = arith.constant 0 : index
    %419 = vector.load %arg2[%c1134, %c0_177] : memref<1152x128xf32, #tpu.memory_space<vmem>>, vector<1x128xf32>
    %420 = vector.extract_strided_slice %419 {offsets = [0, 0], sizes = [1, 32], strides = [1, 1]} : vector<1x128xf32> to vector<1x32xf32>
    %c1135 = arith.constant 1135 : index
    %c0_178 = arith.constant 0 : index
    %421 = vector.load %arg2[%c1135, %c0_178] : memref<1152x128xf32, #tpu.memory_space<vmem>>, vector<1x128xf32>
    %422 = vector.extract_strided_slice %421 {offsets = [0, 0], sizes = [1, 32], strides = [1, 1]} : vector<1x128xf32> to vector<1x32xf32>
    %cst_179 = arith.constant dense<0.000000e+00> : vector<7xf32>
    %423 = vector.multi_reduction <add>, %418, %cst_179 [1] : vector<7x32xf32> to vector<7xf32>
    %424 = vector.shape_cast %423 : vector<7xf32> to vector<7x1xf32>
    %cst_180 = arith.constant 3.200000e+01 : f32
    %425 = vector.broadcast %cst_180 : f32 to vector<7x1xf32>
    %426 = arith.divf %424, %425 : vector<7x1xf32>
    %427 = vector.broadcast %426 : vector<7x1xf32> to vector<7x32xf32>
    %428 = arith.subf %418, %427 : vector<7x32xf32>
    %429 = arith.mulf %428, %428 : vector<7x32xf32>
    %cst_181 = arith.constant dense<0.000000e+00> : vector<7xf32>
    %430 = vector.multi_reduction <add>, %429, %cst_181 [1] : vector<7x32xf32> to vector<7xf32>
    %431 = vector.shape_cast %430 : vector<7xf32> to vector<7x1xf32>
    %cst_182 = arith.constant 3.200000e+01 : f32
    %432 = vector.broadcast %cst_182 : f32 to vector<7x1xf32>
    %433 = arith.divf %431, %432 : vector<7x1xf32>
    %434 = vector.broadcast %426 : vector<7x1xf32> to vector<7x32xf32>
    %435 = arith.subf %418, %434 : vector<7x32xf32>
    %cst_183 = arith.constant 9.99999974E-6 : f32
    %436 = vector.broadcast %cst_183 : f32 to vector<7x1xf32>
    %437 = arith.addf %433, %436 : vector<7x1xf32>
    %438 = math.rsqrt %437 : vector<7x1xf32>
    %439 = vector.broadcast %438 : vector<7x1xf32> to vector<7x32xf32>
    %440 = arith.mulf %435, %439 : vector<7x32xf32>
    %441 = vector.broadcast %420 : vector<1x32xf32> to vector<7x32xf32>
    %442 = arith.mulf %440, %441 : vector<7x32xf32>
    %443 = vector.broadcast %422 : vector<1x32xf32> to vector<7x32xf32>
    %444 = arith.addf %442, %443 : vector<7x32xf32>
    %c928 = arith.constant 928 : index
    %c0_184 = arith.constant 0 : index
    %445 = vector.load %arg2[%c928, %c0_184] : memref<1152x128xf32, #tpu.memory_space<vmem>>, vector<32x128xf32>
    %446 = vector.extract_strided_slice %445 {offsets = [0, 0], sizes = [32, 96], strides = [1, 1]} : vector<32x128xf32> to vector<32x96xf32>
    %cst_185 = arith.constant dense<0.000000e+00> : vector<7x96xf32>
    %447 = tpu.matmul %444, %446, %cst_185 {dimension_numbers = #tpu.dot_dimension_numbers<[1], [0], [0], [1], [0, 0, 1, 1], [], []>} : vector<7x32xf32>, vector<32x96xf32>, vector<7x96xf32> -> vector<7x96xf32>
    %c1136 = arith.constant 1136 : index
    %c0_186 = arith.constant 0 : index
    %448 = vector.load %arg2[%c1136, %c0_186] : memref<1152x128xf32, #tpu.memory_space<vmem>>, vector<1x128xf32>
    %449 = vector.extract_strided_slice %448 {offsets = [0, 0], sizes = [1, 96], strides = [1, 1]} : vector<1x128xf32> to vector<1x96xf32>
    %450 = vector.broadcast %449 : vector<1x96xf32> to vector<7x96xf32>
    %451 = arith.addf %447, %450 : vector<7x96xf32>
    %452 = vector.extract_strided_slice %451 {offsets = [0, 0], sizes = [7, 32], strides = [1, 1]} : vector<7x96xf32> to vector<7x32xf32>
    %cst_187 = arith.constant 2.500000e-01 : f32
    %453 = vector.broadcast %cst_187 : f32 to vector<7x32xf32>
    %454 = arith.mulf %452, %453 : vector<7x32xf32>
    %455 = vector.extract_strided_slice %451 {offsets = [0, 32], sizes = [7, 32], strides = [1, 1]} : vector<7x96xf32> to vector<7x32xf32>
    %456 = vector.extract_strided_slice %451 {offsets = [0, 64], sizes = [7, 32], strides = [1, 1]} : vector<7x96xf32> to vector<7x32xf32>
    %457 = vector.extract_strided_slice %454 {offsets = [0, 0], sizes = [7, 16], strides = [1, 1]} : vector<7x32xf32> to vector<7x16xf32>
    %458 = vector.extract_strided_slice %455 {offsets = [0, 0], sizes = [7, 16], strides = [1, 1]} : vector<7x32xf32> to vector<7x16xf32>
    %459 = vector.extract_strided_slice %456 {offsets = [0, 0], sizes = [7, 16], strides = [1, 1]} : vector<7x32xf32> to vector<7x16xf32>
    %460 = tpu.transpose %458, [1, 0] : vector<7x16xf32> -> vector<16x7xf32>
    %cst_188 = arith.constant dense<0.000000e+00> : vector<7x7xf32>
    %461 = tpu.matmul %457, %460, %cst_188 {dimension_numbers = #tpu.dot_dimension_numbers<[1], [0], [0], [1], [0, 0, 1, 1], [], []>} : vector<7x16xf32>, vector<16x7xf32>, vector<7x7xf32> -> vector<7x7xf32>
    %cst_189 = arith.constant dense<0xFF800000> : vector<7xf32>
    %462 = vector.multi_reduction <maximumf>, %461, %cst_189 [1] : vector<7x7xf32> to vector<7xf32>
    %463 = vector.shape_cast %462 : vector<7xf32> to vector<7x1xf32>
    %464 = vector.broadcast %463 : vector<7x1xf32> to vector<7x7xf32>
    %465 = arith.subf %461, %464 : vector<7x7xf32>
    %466 = math.exp %465 : vector<7x7xf32>
    %cst_190 = arith.constant dense<0.000000e+00> : vector<7xf32>
    %467 = vector.multi_reduction <add>, %466, %cst_190 [1] : vector<7x7xf32> to vector<7xf32>
    %468 = vector.shape_cast %467 : vector<7xf32> to vector<7x1xf32>
    %469 = tpu.reciprocal %468 {approx = true} : vector<7x1xf32> -> vector<7x1xf32>
    %470 = vector.broadcast %469 : vector<7x1xf32> to vector<7x7xf32>
    %471 = arith.mulf %466, %470 : vector<7x7xf32>
    %cst_191 = arith.constant dense<0.000000e+00> : vector<7x16xf32>
    %472 = tpu.matmul %471, %459, %cst_191 {dimension_numbers = #tpu.dot_dimension_numbers<[1], [0], [0], [1], [0, 0, 1, 1], [], []>} : vector<7x7xf32>, vector<7x16xf32>, vector<7x16xf32> -> vector<7x16xf32>
    %473 = vector.extract_strided_slice %454 {offsets = [0, 16], sizes = [7, 16], strides = [1, 1]} : vector<7x32xf32> to vector<7x16xf32>
    %474 = vector.extract_strided_slice %455 {offsets = [0, 16], sizes = [7, 16], strides = [1, 1]} : vector<7x32xf32> to vector<7x16xf32>
    %475 = vector.extract_strided_slice %456 {offsets = [0, 16], sizes = [7, 16], strides = [1, 1]} : vector<7x32xf32> to vector<7x16xf32>
    %476 = tpu.transpose %474, [1, 0] : vector<7x16xf32> -> vector<16x7xf32>
    %cst_192 = arith.constant dense<0.000000e+00> : vector<7x7xf32>
    %477 = tpu.matmul %473, %476, %cst_192 {dimension_numbers = #tpu.dot_dimension_numbers<[1], [0], [0], [1], [0, 0, 1, 1], [], []>} : vector<7x16xf32>, vector<16x7xf32>, vector<7x7xf32> -> vector<7x7xf32>
    %cst_193 = arith.constant dense<0xFF800000> : vector<7xf32>
    %478 = vector.multi_reduction <maximumf>, %477, %cst_193 [1] : vector<7x7xf32> to vector<7xf32>
    %479 = vector.shape_cast %478 : vector<7xf32> to vector<7x1xf32>
    %480 = vector.broadcast %479 : vector<7x1xf32> to vector<7x7xf32>
    %481 = arith.subf %477, %480 : vector<7x7xf32>
    %482 = math.exp %481 : vector<7x7xf32>
    %cst_194 = arith.constant dense<0.000000e+00> : vector<7xf32>
    %483 = vector.multi_reduction <add>, %482, %cst_194 [1] : vector<7x7xf32> to vector<7xf32>
    %484 = vector.shape_cast %483 : vector<7xf32> to vector<7x1xf32>
    %485 = tpu.reciprocal %484 {approx = true} : vector<7x1xf32> -> vector<7x1xf32>
    %486 = vector.broadcast %485 : vector<7x1xf32> to vector<7x7xf32>
    %487 = arith.mulf %482, %486 : vector<7x7xf32>
    %cst_195 = arith.constant dense<0.000000e+00> : vector<7x16xf32>
    %488 = tpu.matmul %487, %475, %cst_195 {dimension_numbers = #tpu.dot_dimension_numbers<[1], [0], [0], [1], [0, 0, 1, 1], [], []>} : vector<7x7xf32>, vector<7x16xf32>, vector<7x16xf32> -> vector<7x16xf32>
    %489 = tpu.concatenate %472, %488 in 1 : vector<7x16xf32>, vector<7x16xf32> -> vector<7x32xf32>
    %c960 = arith.constant 960 : index
    %c0_196 = arith.constant 0 : index
    %490 = vector.load %arg2[%c960, %c0_196] : memref<1152x128xf32, #tpu.memory_space<vmem>>, vector<32x128xf32>
    %491 = vector.extract_strided_slice %490 {offsets = [0, 0], sizes = [32, 32], strides = [1, 1]} : vector<32x128xf32> to vector<32x32xf32>
    %cst_197 = arith.constant dense<0.000000e+00> : vector<7x32xf32>
    %492 = tpu.matmul %489, %491, %cst_197 {dimension_numbers = #tpu.dot_dimension_numbers<[1], [0], [0], [1], [0, 0, 1, 1], [], []>} : vector<7x32xf32>, vector<32x32xf32>, vector<7x32xf32> -> vector<7x32xf32>
    %c1137 = arith.constant 1137 : index
    %c0_198 = arith.constant 0 : index
    %493 = vector.load %arg2[%c1137, %c0_198] : memref<1152x128xf32, #tpu.memory_space<vmem>>, vector<1x128xf32>
    %494 = vector.extract_strided_slice %493 {offsets = [0, 0], sizes = [1, 32], strides = [1, 1]} : vector<1x128xf32> to vector<1x32xf32>
    %495 = vector.broadcast %494 : vector<1x32xf32> to vector<7x32xf32>
    %496 = arith.addf %492, %495 : vector<7x32xf32>
    %497 = arith.addf %444, %496 : vector<7x32xf32>
    %c1138 = arith.constant 1138 : index
    %c0_199 = arith.constant 0 : index
    %498 = vector.load %arg2[%c1138, %c0_199] : memref<1152x128xf32, #tpu.memory_space<vmem>>, vector<1x128xf32>
    %499 = vector.extract_strided_slice %498 {offsets = [0, 0], sizes = [1, 32], strides = [1, 1]} : vector<1x128xf32> to vector<1x32xf32>
    %c1139 = arith.constant 1139 : index
    %c0_200 = arith.constant 0 : index
    %500 = vector.load %arg2[%c1139, %c0_200] : memref<1152x128xf32, #tpu.memory_space<vmem>>, vector<1x128xf32>
    %501 = vector.extract_strided_slice %500 {offsets = [0, 0], sizes = [1, 32], strides = [1, 1]} : vector<1x128xf32> to vector<1x32xf32>
    %cst_201 = arith.constant dense<0.000000e+00> : vector<7xf32>
    %502 = vector.multi_reduction <add>, %497, %cst_201 [1] : vector<7x32xf32> to vector<7xf32>
    %503 = vector.shape_cast %502 : vector<7xf32> to vector<7x1xf32>
    %cst_202 = arith.constant 3.200000e+01 : f32
    %504 = vector.broadcast %cst_202 : f32 to vector<7x1xf32>
    %505 = arith.divf %503, %504 : vector<7x1xf32>
    %506 = vector.broadcast %505 : vector<7x1xf32> to vector<7x32xf32>
    %507 = arith.subf %497, %506 : vector<7x32xf32>
    %508 = arith.mulf %507, %507 : vector<7x32xf32>
    %cst_203 = arith.constant dense<0.000000e+00> : vector<7xf32>
    %509 = vector.multi_reduction <add>, %508, %cst_203 [1] : vector<7x32xf32> to vector<7xf32>
    %510 = vector.shape_cast %509 : vector<7xf32> to vector<7x1xf32>
    %cst_204 = arith.constant 3.200000e+01 : f32
    %511 = vector.broadcast %cst_204 : f32 to vector<7x1xf32>
    %512 = arith.divf %510, %511 : vector<7x1xf32>
    %513 = vector.broadcast %505 : vector<7x1xf32> to vector<7x32xf32>
    %514 = arith.subf %497, %513 : vector<7x32xf32>
    %cst_205 = arith.constant 9.99999974E-6 : f32
    %515 = vector.broadcast %cst_205 : f32 to vector<7x1xf32>
    %516 = arith.addf %512, %515 : vector<7x1xf32>
    %517 = math.rsqrt %516 : vector<7x1xf32>
    %518 = vector.broadcast %517 : vector<7x1xf32> to vector<7x32xf32>
    %519 = arith.mulf %514, %518 : vector<7x32xf32>
    %520 = vector.broadcast %499 : vector<1x32xf32> to vector<7x32xf32>
    %521 = arith.mulf %519, %520 : vector<7x32xf32>
    %522 = vector.broadcast %501 : vector<1x32xf32> to vector<7x32xf32>
    %523 = arith.addf %521, %522 : vector<7x32xf32>
    %c992 = arith.constant 992 : index
    %c0_206 = arith.constant 0 : index
    %524 = vector.load %arg2[%c992, %c0_206] : memref<1152x128xf32, #tpu.memory_space<vmem>>, vector<32x128xf32>
    %525 = vector.extract_strided_slice %524 {offsets = [0, 0], sizes = [32, 64], strides = [1, 1]} : vector<32x128xf32> to vector<32x64xf32>
    %cst_207 = arith.constant dense<0.000000e+00> : vector<7x64xf32>
    %526 = tpu.matmul %523, %525, %cst_207 {dimension_numbers = #tpu.dot_dimension_numbers<[1], [0], [0], [1], [0, 0, 1, 1], [], []>} : vector<7x32xf32>, vector<32x64xf32>, vector<7x64xf32> -> vector<7x64xf32>
    %c1140 = arith.constant 1140 : index
    %c0_208 = arith.constant 0 : index
    %527 = vector.load %arg2[%c1140, %c0_208] : memref<1152x128xf32, #tpu.memory_space<vmem>>, vector<1x128xf32>
    %528 = vector.extract_strided_slice %527 {offsets = [0, 0], sizes = [1, 64], strides = [1, 1]} : vector<1x128xf32> to vector<1x64xf32>
    %529 = vector.broadcast %528 : vector<1x64xf32> to vector<7x64xf32>
    %530 = arith.addf %526, %529 : vector<7x64xf32>
    %531 = arith.mulf %530, %530 : vector<7x64xf32>
    %532 = arith.mulf %530, %531 : vector<7x64xf32>
    %cst_209 = arith.constant 4.471500e-02 : f32
    %533 = vector.broadcast %cst_209 : f32 to vector<7x64xf32>
    %534 = arith.mulf %533, %532 : vector<7x64xf32>
    %535 = arith.addf %530, %534 : vector<7x64xf32>
    %cst_210 = arith.constant 0.797884583 : f32
    %536 = vector.broadcast %cst_210 : f32 to vector<7x64xf32>
    %537 = arith.mulf %536, %535 : vector<7x64xf32>
    %538 = math.tanh %537 : vector<7x64xf32>
    %cst_211 = arith.constant 1.000000e+00 : f32
    %539 = vector.broadcast %cst_211 : f32 to vector<7x64xf32>
    %540 = arith.addf %539, %538 : vector<7x64xf32>
    %cst_212 = arith.constant 5.000000e-01 : f32
    %541 = vector.broadcast %cst_212 : f32 to vector<7x64xf32>
    %542 = arith.mulf %541, %540 : vector<7x64xf32>
    %543 = arith.mulf %530, %542 : vector<7x64xf32>
    %c1024 = arith.constant 1024 : index
    %c0_213 = arith.constant 0 : index
    %544 = vector.load %arg2[%c1024, %c0_213] : memref<1152x128xf32, #tpu.memory_space<vmem>>, vector<64x128xf32>
    %545 = vector.extract_strided_slice %544 {offsets = [0, 0], sizes = [64, 32], strides = [1, 1]} : vector<64x128xf32> to vector<64x32xf32>
    %cst_214 = arith.constant dense<0.000000e+00> : vector<7x32xf32>
    %546 = tpu.matmul %543, %545, %cst_214 {dimension_numbers = #tpu.dot_dimension_numbers<[1], [0], [0], [1], [0, 0, 1, 1], [], []>} : vector<7x64xf32>, vector<64x32xf32>, vector<7x32xf32> -> vector<7x32xf32>
    %c1141 = arith.constant 1141 : index
    %c0_215 = arith.constant 0 : index
    %547 = vector.load %arg2[%c1141, %c0_215] : memref<1152x128xf32, #tpu.memory_space<vmem>>, vector<1x128xf32>
    %548 = vector.extract_strided_slice %547 {offsets = [0, 0], sizes = [1, 32], strides = [1, 1]} : vector<1x128xf32> to vector<1x32xf32>
    %549 = vector.broadcast %548 : vector<1x32xf32> to vector<7x32xf32>
    %550 = arith.addf %546, %549 : vector<7x32xf32>
    %551 = arith.addf %523, %550 : vector<7x32xf32>
    %c1142 = arith.constant 1142 : index
    %c0_216 = arith.constant 0 : index
    %552 = vector.load %arg2[%c1142, %c0_216] : memref<1152x128xf32, #tpu.memory_space<vmem>>, vector<1x128xf32>
    %553 = vector.extract_strided_slice %552 {offsets = [0, 0], sizes = [1, 32], strides = [1, 1]} : vector<1x128xf32> to vector<1x32xf32>
    %c1143 = arith.constant 1143 : index
    %c0_217 = arith.constant 0 : index
    %554 = vector.load %arg2[%c1143, %c0_217] : memref<1152x128xf32, #tpu.memory_space<vmem>>, vector<1x128xf32>
    %555 = vector.extract_strided_slice %554 {offsets = [0, 0], sizes = [1, 32], strides = [1, 1]} : vector<1x128xf32> to vector<1x32xf32>
    %cst_218 = arith.constant dense<0.000000e+00> : vector<7xf32>
    %556 = vector.multi_reduction <add>, %551, %cst_218 [1] : vector<7x32xf32> to vector<7xf32>
    %557 = vector.shape_cast %556 : vector<7xf32> to vector<7x1xf32>
    %cst_219 = arith.constant 3.200000e+01 : f32
    %558 = vector.broadcast %cst_219 : f32 to vector<7x1xf32>
    %559 = arith.divf %557, %558 : vector<7x1xf32>
    %560 = vector.broadcast %559 : vector<7x1xf32> to vector<7x32xf32>
    %561 = arith.subf %551, %560 : vector<7x32xf32>
    %562 = arith.mulf %561, %561 : vector<7x32xf32>
    %cst_220 = arith.constant dense<0.000000e+00> : vector<7xf32>
    %563 = vector.multi_reduction <add>, %562, %cst_220 [1] : vector<7x32xf32> to vector<7xf32>
    %564 = vector.shape_cast %563 : vector<7xf32> to vector<7x1xf32>
    %cst_221 = arith.constant 3.200000e+01 : f32
    %565 = vector.broadcast %cst_221 : f32 to vector<7x1xf32>
    %566 = arith.divf %564, %565 : vector<7x1xf32>
    %567 = vector.broadcast %559 : vector<7x1xf32> to vector<7x32xf32>
    %568 = arith.subf %551, %567 : vector<7x32xf32>
    %cst_222 = arith.constant 9.99999974E-6 : f32
    %569 = vector.broadcast %cst_222 : f32 to vector<7x1xf32>
    %570 = arith.addf %566, %569 : vector<7x1xf32>
    %571 = math.rsqrt %570 : vector<7x1xf32>
    %572 = vector.broadcast %571 : vector<7x1xf32> to vector<7x32xf32>
    %573 = arith.mulf %568, %572 : vector<7x32xf32>
    %574 = vector.broadcast %553 : vector<1x32xf32> to vector<7x32xf32>
    %575 = arith.mulf %573, %574 : vector<7x32xf32>
    %576 = vector.broadcast %555 : vector<1x32xf32> to vector<7x32xf32>
    %577 = arith.addf %575, %576 : vector<7x32xf32>
    %c1088 = arith.constant 1088 : index
    %c0_223 = arith.constant 0 : index
    %578 = vector.load %arg2[%c1088, %c0_223] : memref<1152x128xf32, #tpu.memory_space<vmem>>, vector<32x128xf32>
    %579 = vector.extract_strided_slice %578 {offsets = [0, 0], sizes = [32, 32], strides = [1, 1]} : vector<32x128xf32> to vector<32x32xf32>
    %cst_224 = arith.constant dense<0.000000e+00> : vector<7x32xf32>
    %580 = tpu.matmul %577, %579, %cst_224 {dimension_numbers = #tpu.dot_dimension_numbers<[1], [0], [0], [1], [0, 0, 1, 1], [], []>} : vector<7x32xf32>, vector<32x32xf32>, vector<7x32xf32> -> vector<7x32xf32>
    %c1144 = arith.constant 1144 : index
    %c0_225 = arith.constant 0 : index
    %581 = vector.load %arg2[%c1144, %c0_225] : memref<1152x128xf32, #tpu.memory_space<vmem>>, vector<1x128xf32>
    %582 = vector.extract_strided_slice %581 {offsets = [0, 0], sizes = [1, 32], strides = [1, 1]} : vector<1x128xf32> to vector<1x32xf32>
    %583 = vector.broadcast %582 : vector<1x32xf32> to vector<7x32xf32>
    %584 = arith.addf %580, %583 : vector<7x32xf32>
    %585 = tpu.transpose %584, [1, 0] : vector<7x32xf32> -> vector<32x7xf32>
    %cst_226 = arith.constant dense<0xFF800000> : vector<7xf32>
    %586 = vector.multi_reduction <maximumf>, %585, %cst_226 [0] : vector<32x7xf32> to vector<7xf32>
    %587 = vector.shape_cast %586 : vector<7xf32> to vector<1x7xf32>
    %588 = tpu.iota {dimensions = array<i32: 0>} : vector<32x7xi32>
    %589 = arith.sitofp %588 : vector<32x7xi32> to vector<32x7xf32>
    %590 = vector.broadcast %587 : vector<1x7xf32> to vector<32x7xf32>
    %591 = arith.cmpf oge, %585, %590 : vector<32x7xf32>
    %cst_227 = arith.constant 3.200000e+01 : f32
    %592 = vector.broadcast %cst_227 : f32 to vector<32x7xf32>
    %593 = arith.select %591, %589, %592 : vector<32x7xi1>, vector<32x7xf32>
    %cst_228 = arith.constant dense<0x7F800000> : vector<7xf32>
    %594 = vector.multi_reduction <minimumf>, %593, %cst_228 [0] : vector<32x7xf32> to vector<7xf32>
    %595 = vector.shape_cast %594 : vector<7xf32> to vector<1x7xf32>
    %596 = arith.fptosi %595 : vector<1x7xf32> to vector<1x7xi32>
    %c0_229 = arith.constant 0 : index
    %c0_230 = arith.constant 0 : index
    %c0_231 = arith.constant 0 : index
    %597 = vector.load %arg3[%c0_229, %c0_230, %c0_231] : memref<1x1x7xi32, #tpu.memory_space<vmem>>, vector<1x1x7xi32>
    %598 = vector.shape_cast %597 : vector<1x1x7xi32> to vector<1x7xi32>
    %599 = vector.shape_cast %596 : vector<1x7xi32> to vector<1x1x7xi32>
    tpu.vector_store %arg3[%c0_229, %c0_230, %c0_231], %599 {strides = array<i32>} : memref<1x1x7xi32, #tpu.memory_space<vmem>>, vector<1x1x7xi32>,
    return
  }
  func.func @transform_0(%arg0: i32) -> (i32, i32, i32) {
    %c0_i32 = arith.constant 0 : i32
    %c0_i32_0 = arith.constant 0 : i32
    %c0_i32_1 = arith.constant 0 : i32
    return %arg0, %c0_i32, %c0_i32_0 : i32, i32, i32
  }
  func.func @transform_1(%arg0: i32) -> (i32, i32) {
    %c0_i32 = arith.constant 0 : i32
    %c0_i32_0 = arith.constant 0 : i32
    %c0_i32_1 = arith.constant 0 : i32
    return %c0_i32, %c0_i32_0 : i32, i32
  }
  func.func @transform_2(%arg0: i32) -> (i32, i32, i32) {
    %c0_i32 = arith.constant 0 : i32
    %c0_i32_0 = arith.constant 0 : i32
    %c0_i32_1 = arith.constant 0 : i32
    return %arg0, %c0_i32, %c0_i32_0 : i32, i32, i32
  }
}

</mosaic_0001>

<llo_original>
// kernel: wav2vec2_forward.1
$region0: #{wav2vec2_forward.1}
  #allocation0 [shape = 'u32[]', space=smem, size = 0x4, offset = 0x4, fixed_abs, tag = 'smem constant byte address 0x4 - core index']
  #allocation1 [shape = 'u32[144,128]{1,0:T(1,128)}', space=vmem, size = 0x12000, scoped, tag = 'internal scratch']
  #allocation2 [shape = 'f32[136,128]{1,0:T(8,128)}', space=vmem, size = 0x11000, scoped, tag = 'scratch operand']
  #allocation3 [shape = 'f32[128,64]{1,0:T(8,128)}', space=vmem, size = 0x10000, scoped, tag = 'scratch operand']
  #allocation4 [shape = 'f32[128,32]{1,0:T(8,128)}', space=vmem, size = 0x10000, scoped, tag = 'scratch operand']
  #allocation5 [shape = 'f32[64,32]{1,0:T(8,128)}', space=vmem, size = 0x8000, scoped, tag = 'scratch operand']
  %s0 = inlined_call_operand.vmem [shape: f32[4,129,20], index: 0, kind: input, shape index: {}]
  %s1 = inlined_call_operand.vmem [shape: f32[1152,128], index: 1, kind: input, shape index: {}]
  %s2 = inlined_call_operand.hbm [shape: s32[4,1,7], index: 2, kind: output, shape index: {}]
  %s3 = sld [smem:[#allocation0]]
  $region41: #{wav2vec2_forward.1} parent=0
    _
  %s5 = ssub.s32 1, %s3
  %s6 = scalar_select 0, %s5, %s3
  $region1: #{wav2vec2_forward.1} parent=0
    #allocation6 [shape = 'u8[1024]{0}', space=vmem, size = 0x400, scoped, tag = 'output window, operand 0']
    #allocation7 [shape = 's32[2]{0}', space=sflag, size = 0x8, scoped, tag = 'scoped memory for wav2vec2_forward.1']
    %7 = vsyncpa [#allocation7], 0
    %s8 = scalar_lea.sflag [#allocation7], 1
    %9 = vsyncpa %s8, 0
    loop: start=0, step=1, limit=6
    $region2: #{wav2vec2_forward.1} parent=1 // loop_pre_header
      _
    $region3: #{wav2vec2_forward.1} parent=1 // loop_header
      %s11 = sphi 0, %s15
      %p12 = scmp.ge.s32.totalorder %s11, 6
      %s21 = sphi 0, %s23
      %s24 = sphi 0, %s21
      %s25 = sphi 0, %s24
      %s41 = sphi 0, %s25
      %s45 = sphi 0, %s45
      %s47 = sphi 0, %s45
      %s48 = sphi 0, %s47
      %s62 = sphi 0, %s48
      %s68 = sphi 0, %s70
      %s71 = sphi 0, %s68
      %s72 = sphi 0, %s71
      %s88 = sphi 0, %s72
    $region4: #{wav2vec2_forward.1} parent=1 // loop_header_branch
      %14 = sbr.rel (%p12) target = $region8
    $region5: #{wav2vec2_forward.1} parent=1 // loop_body
      %s16 = ssub.s32 %s11, 1
      %s17 = ssub.s32 %s11, 2
      %s18 = sadd.s32 %s11, 1
      %s19 = ssub.s32 %s11, %s18
      %p20 = scmp.eq.s32.totalorder %s19, 0
      %s22 = sadd.s32 %s21, 1
      %s23 = scalar_select %p20, %s21, %s22
      %p26 = pneg %p20
      %p27 = scmp.eq.s32.totalorder %s11, 3
      %p28 = por %p26, %p27
      %p29 = scmp.ne.s32.totalorder %s21, %s24
      %p30 = scmp.eq.s32.totalorder %s11, 0
      %p31 = por %p29, %p30
      %p32 = scmp.ne.s32.totalorder %s21, %s24
      %p33 = scmp.eq.s32.totalorder %s16, 3
      %p34 = por %p32, %p33
      %p35 = scmp.ne.s32.totalorder %s24, %s25
      %p36 = scmp.eq.s32.totalorder %s16, 0
      %p37 = por %p35, %p36
      %p38 = scmp.ne.s32.totalorder %s24, %s25
      %p39 = scmp.eq.s32.totalorder %s17, 3
      %p40 = por %p38, %p39
      %p42 = scmp.ne.s32.totalorder %s25, %s41
      %p43 = scmp.eq.s32.totalorder %s17, 0
      %p44 = por %p42, %p43
      %s46 = sadd.s32 %s45, 1
      %p49 = scmp.eq.s32.totalorder %s11, 3
      %p50 = scmp.ne.s32.totalorder %s45, %s47
      %p51 = scmp.eq.s32.totalorder %s11, 0
      %p52 = por %p50, %p51
      %p53 = scmp.ne.s32.totalorder %s45, %s47
      %p54 = scmp.eq.s32.totalorder %s16, 3
      %p55 = por %p53, %p54
      %p56 = scmp.ne.s32.totalorder %s47, %s48
      %p57 = scmp.eq.s32.totalorder %s16, 0
      %p58 = por %p56, %p57
      %p59 = scmp.ne.s32.totalorder %s47, %s48
      %p60 = scmp.eq.s32.totalorder %s17, 3
      %p61 = por %p59, %p60
      %p63 = scmp.ne.s32.totalorder %s48, %s62
      %p64 = scmp.eq.s32.totalorder %s17, 0
      %p65 = por %p63, %p64
      %s66 = ssub.s32 %s11, %s18
      %p67 = scmp.eq.s32.totalorder %s66, 0
      %s69 = sadd.s32 %s68, 1
      %s70 = scalar_select %p67, %s68, %s69
      %p73 = pneg %p67
      %p74 = scmp.eq.s32.totalorder %s11, 3
      %p75 = por %p73, %p74
      %p76 = scmp.ne.s32.totalorder %s68, %s71
      %p77 = scmp.eq.s32.totalorder %s11, 0
      %p78 = por %p76, %p77
      %p79 = scmp.ne.s32.totalorder %s68, %s71
      %p80 = scmp.eq.s32.totalorder %s16, 3
      %p81 = por %p79, %p80
      %p82 = scmp.ne.s32.totalorder %s71, %s72
      %p83 = scmp.eq.s32.totalorder %s16, 0
      %p84 = por %p82, %p83
      %p85 = scmp.ne.s32.totalorder %s71, %s72
      %p86 = scmp.eq.s32.totalorder %s17, 3
      %p87 = por %p85, %p86
      %p89 = scmp.ne.s32.totalorder %s72, %s88
      %p90 = scmp.eq.s32.totalorder %s17, 0
      %p91 = por %p89, %p90
      %p92 = scmp.le.s32.totalorder 1, %s11
      %p93 = scmp.lt.s32.totalorder %s11, 5
      %p94 = pnand %p92, %p93
      %p95 = pneg %p94
      // Predicated region
      $region9: #{wav2vec2_forward.1} parent=5 // pred_check
        _
      $region10: #{wav2vec2_forward.1} parent=5 // pred_check_branch
        %97 = sbr.rel (%p94) target = $region12
      $region11: #{wav2vec2_forward.1} parent=5 // pred_region
        %s98 = ssub.s32 %s11, 1
        // Predicated region
        $region13: #{wav2vec2_forward.1} parent=11 // pred_check
          %p99 = pneg %p58
        $region14: #{wav2vec2_forward.1} parent=11 // pred_check_branch
          %101 = sbr.rel (%p99) target = $region16
        $region15: #{wav2vec2_forward.1} parent=11 // pred_region
          _
        $region16: #{wav2vec2_forward.1} parent=11 // pred_fallthru
          _
      $region12: #{wav2vec2_forward.1} parent=5 // pred_fallthru
        _
      %p102 = scmp.lt.s32.totalorder %s11, 4
      // Predicated region
      $region17: #{wav2vec2_forward.1} parent=5 // pred_check
        %p103 = pneg %p102
      $region18: #{wav2vec2_forward.1} parent=5 // pred_check_branch
        %105 = sbr.rel (%p103) target = $region20
      $region19: #{wav2vec2_forward.1} parent=5 // pred_region
        // Predicated region
        $region21: #{wav2vec2_forward.1} parent=19 // pred_check
          %p106 = pneg %p31
        $region22: #{wav2vec2_forward.1} parent=19 // pred_check_branch
          %108 = sbr.rel (%p106) target = $region24
        $region23: #{wav2vec2_forward.1} parent=19 // pred_region
          %p109 = scmp.lt.s32.totalorder %s11, 3
          %s110 = scalar_select %p109, %s11, 3
          %s111 = smul.addr %s110, 17
          %s112 = smul.addr %s111, 8
          %s113 = scalar_lea.vmem %s0, %s112
        $region24: #{wav2vec2_forward.1} parent=19 // pred_fallthru
          _
      $region20: #{wav2vec2_forward.1} parent=5 // pred_fallthru
        _
      %p114 = scmp.le.s32.totalorder 1, %s11
      %p115 = scmp.lt.s32.totalorder %s11, 5
      %p116 = pnand %p114, %p115
      %p117 = pneg %p116
      // Predicated region
      $region25: #{wav2vec2_forward.1} parent=5 // pred_check
        _
      $region26: #{wav2vec2_forward.1} parent=5 // pred_check_branch
        %119 = sbr.rel (%p116) target = $region28
      $region27: #{wav2vec2_forward.1} parent=5 // pred_region
        %s120 = ssub.s32 %s11, 1
        %p121 = scmp.lt.s32.totalorder %s16, 3
        %s122 = scalar_select %p121, %s16, 3
        %s123 = smul.addr %s122, 17
        %s124 = smul.addr %s123, 8
        %s125 = scalar_lea.vmem %s0, %s124
        %p126 = pneg %p37
        %p127 = pneg %p34
        %p128 = pneg %p58
        %p129 = pneg %p55
        %p130 = pneg %p84
        %p131 = pneg %p81
        %s132 = sand.u32 %s71, 1
        %s133 = scalar_lea.sflag [#allocation7], %s132
        %s134 = sand.u32 %s71, 1
        %s135 = scalar_lea.vmem [#allocation6], %s134
        %p136 = scmp.lt.s32.totalorder %s16, 3
        %s137 = scalar_select %p136, %s16, 3
        %s138 = smul.addr %s137, 17
        %s139 = smul.addr %s138, 8
        %s140 = scalar_lea.vmem %s0, %s139
        %v141 = vld [vmem:[%s140] sm:$0xff]
        %v142 = vld [vmem:[%s140 + $0x8] sm:$0xff]
        %v143 = vld [vmem:[%s140 + $0x10] sm:$0xff]
        %v144 = vld [vmem:[%s140 + $0x18] sm:$0xff]
        %v145 = vld [vmem:[%s140 + $0x20] sm:$0xff]
        %v146 = vld [vmem:[%s140 + $0x28] sm:$0xff]
        %v147 = vld [vmem:[%s140 + $0x30] sm:$0xff]
        %v148 = vld [vmem:[%s140 + $0x38] sm:$0xff]
        %v149 = vld [vmem:[%s140 + $0x40] sm:$0xff]
        %v150 = vld [vmem:[%s140 + $0x48] sm:$0xff]
        %v151 = vld [vmem:[%s140 + $0x50] sm:$0xff]
        %v152 = vld [vmem:[%s140 + $0x58] sm:$0xff]
        %v153 = vld [vmem:[%s140 + $0x60] sm:$0xff]
        %v154 = vld [vmem:[%s140 + $0x68] sm:$0xff]
        %v155 = vld [vmem:[%s140 + $0x70] sm:$0xff]
        %v156 = vld [vmem:[%s140 + $0x78] sm:$0xff]
        %vm157 = vcmask 162816
        %v158 = vsel %vm157, %v141, 0.0
        %v159 = vsel %vm157, %v142, 0.0
        %v160 = vadd.f32 %v158, %v159
        %v161 = vsel %vm157, %v143, 0.0
        %v162 = vadd.f32 %v160, %v161
        %v163 = vsel %vm157, %v144, 0.0
        %v164 = vadd.f32 %v162, %v163
        %v165 = vsel %vm157, %v145, 0.0
        %v166 = vadd.f32 %v164, %v165
        %v167 = vsel %vm157, %v146, 0.0
        %v168 = vadd.f32 %v166, %v167
        %v169 = vsel %vm157, %v147, 0.0
        %v170 = vadd.f32 %v168, %v169
        %v171 = vsel %vm157, %v148, 0.0
        %v172 = vadd.f32 %v170, %v171
        %v173 = vsel %vm157, %v149, 0.0
        %v174 = vadd.f32 %v172, %v173
        %v175 = vsel %vm157, %v150, 0.0
        %v176 = vadd.f32 %v174, %v175
        %v177 = vsel %vm157, %v151, 0.0
        %v178 = vadd.f32 %v176, %v177
        %v179 = vsel %vm157, %v152, 0.0
        %v180 = vadd.f32 %v178, %v179
        %v181 = vsel %vm157, %v153, 0.0
        %v182 = vadd.f32 %v180, %v181
        %v183 = vsel %vm157, %v154, 0.0
        %v184 = vadd.f32 %v182, %v183
        %v185 = vsel %vm157, %v155, 0.0
        %v186 = vadd.f32 %v184, %v185
        %v187 = vsel %vm157, %v156, 0.0
        %v188 = vadd.f32 %v186, %v187
        %189 = vadd.xlane.f32.xlu0 %v188
        %v190 = vpop.xlane.xlu0 %189
        %v191 = vrot.slane %v190, 4
        %v192 = vadd.f32 %v190, %v191
        %v193 = vrot.slane %v192, 2
        %v194 = vadd.f32 %v192, %v193
        %v195 = vrot.slane %v194, 1
        %v196 = vadd.f32 %v194, %v195
        %s197 = vtos %v196
        %v198 = vrcp.pop 2560.0
        %s199 = vtos %v198
        %s200 = smul.f32 %s197, %s199
        %v201 = vstv %s200
        %v202 = vsub.f32 %v141, %v201
        %v203 = vsub.f32 %v142, %v201
        %v204 = vsub.f32 %v143, %v201
        %v205 = vsub.f32 %v144, %v201
        %v206 = vsub.f32 %v145, %v201
        %v207 = vsub.f32 %v146, %v201
        %v208 = vsub.f32 %v147, %v201
        %v209 = vsub.f32 %v148, %v201
        %v210 = vsub.f32 %v149, %v201
        %v211 = vsub.f32 %v150, %v201
        %v212 = vsub.f32 %v151, %v201
        %v213 = vsub.f32 %v152, %v201
        %v214 = vsub.f32 %v153, %v201
        %v215 = vsub.f32 %v154, %v201
        %v216 = vsub.f32 %v155, %v201
        %v217 = vsub.f32 %v156, %v201
        %v218 = vmul.f32 %v202, %v202
        %v219 = vmul.f32 %v203, %v203
        %v220 = vmul.f32 %v204, %v204
        %v221 = vmul.f32 %v205, %v205
        %v222 = vmul.f32 %v206, %v206
        %v223 = vmul.f32 %v207, %v207
        %v224 = vmul.f32 %v208, %v208
        %v225 = vmul.f32 %v209, %v209
        %v226 = vmul.f32 %v210, %v210
        %v227 = vmul.f32 %v211, %v211
        %v228 = vmul.f32 %v212, %v212
        %v229 = vmul.f32 %v213, %v213
        %v230 = vmul.f32 %v214, %v214
        %v231 = vmul.f32 %v215, %v215
        %v232 = vmul.f32 %v216, %v216
        %v233 = vmul.f32 %v217, %v217
        %v234 = vsel %vm157, %v218, 0.0
        %v235 = vsel %vm157, %v219, 0.0
        %v236 = vadd.f32 %v234, %v235
        %v237 = vsel %vm157, %v220, 0.0
        %v238 = vadd.f32 %v236, %v237
        %v239 = vsel %vm157, %v221, 0.0
        %v240 = vadd.f32 %v238, %v239
        %v241 = vsel %vm157, %v222, 0.0
        %v242 = vadd.f32 %v240, %v241
        %v243 = vsel %vm157, %v223, 0.0
        %v244 = vadd.f32 %v242, %v243
        %v245 = vsel %vm157, %v224, 0.0
        %v246 = vadd.f32 %v244, %v245
        %v247 = vsel %vm157, %v225, 0.0
        %v248 = vadd.f32 %v246, %v247
        %v249 = vsel %vm157, %v226, 0.0
        %v250 = vadd.f32 %v248, %v249
        %v251 = vsel %vm157, %v227, 0.0
        %v252 = vadd.f32 %v250, %v251
        %v253 = vsel %vm157, %v228, 0.0
        %v254 = vadd.f32 %v252, %v253
        %v255 = vsel %vm157, %v229, 0.0
        %v256 = vadd.f32 %v254, %v255
        %v257 = vsel %vm157, %v230, 0.0
        %v258 = vadd.f32 %v256, %v257
        %v259 = vsel %vm157, %v231, 0.0
        %v260 = vadd.f32 %v258, %v259
        %v261 = vsel %vm157, %v232, 0.0
        %v262 = vadd.f32 %v260, %v261
        %v263 = vsel %vm157, %v233, 0.0
        %v264 = vadd.f32 %v262, %v263
        %265 = vadd.xlane.f32.xlu0 %v264
        %v266 = vpop.xlane.xlu0 %265
        %v267 = vrot.slane %v266, 4
        %v268 = vadd.f32 %v266, %v267
        %v269 = vrot.slane %v268, 2
        %v270 = vadd.f32 %v268, %v269
        %v271 = vrot.slane %v270, 1
        %v272 = vadd.f32 %v270, %v271
        %s273 = vtos %v272
        %v274 = vrcp.pop 2560.0
        %s275 = vtos %v274
        %s276 = smul.f32 %s273, %s275
        %s277 = sadd.f32 %s276, 1e-07
        %v278 = vstv %s277
        %v279 = vrsqrt.pop %v278
        %s280 = vtos %v279
        %v281 = vld [vmem:[%s140 + $0x1] sm:$0xff]
        %v282 = vld [vmem:[%s140 + $0x9] sm:$0xff]
        %v283 = vld [vmem:[%s140 + $0x11] sm:$0xff]
        %v284 = vld [vmem:[%s140 + $0x19] sm:$0xff]
        %v285 = vld [vmem:[%s140 + $0x21] sm:$0xff]
        %v286 = vld [vmem:[%s140 + $0x29] sm:$0xff]
        %v287 = vld [vmem:[%s140 + $0x31] sm:$0xff]
        %v288 = vld [vmem:[%s140 + $0x39] sm:$0xff]
        %v289 = vld [vmem:[%s140 + $0x41] sm:$0xff]
        %v290 = vld [vmem:[%s140 + $0x49] sm:$0xff]
        %v291 = vld [vmem:[%s140 + $0x51] sm:$0xff]
        %v292 = vld [vmem:[%s140 + $0x59] sm:$0xff]
        %v293 = vld [vmem:[%s140 + $0x61] sm:$0xff]
        %v294 = vld [vmem:[%s140 + $0x69] sm:$0xff]
        %v295 = vld [vmem:[%s140 + $0x71] sm:$0xff]
        %v296 = vld [vmem:[%s140 + $0x79] sm:$0xff]
        %313 = vrot.lane.b32.xlu0 %v281, 20
        %v314 = vpop.permute.xlu0 %313
        %315 = vrot.lane.b32.xlu0 %v282, 20
        %v316 = vpop.permute.xlu0 %315
        %317 = vrot.lane.b32.xlu0 %v283, 20
        %v318 = vpop.permute.xlu0 %317
        %319 = vrot.lane.b32.xlu0 %v284, 20
        %v320 = vpop.permute.xlu0 %319
        %321 = vrot.lane.b32.xlu0 %v285, 20
        %v322 = vpop.permute.xlu0 %321
        %323 = vrot.lane.b32.xlu0 %v286, 20
        %v324 = vpop.permute.xlu0 %323
        %325 = vrot.lane.b32.xlu0 %v287, 20
        %v326 = vpop.permute.xlu0 %325
        %327 = vrot.lane.b32.xlu0 %v288, 20
        %v328 = vpop.permute.xlu0 %327
        %329 = vrot.lane.b32.xlu0 %v289, 20
        %v330 = vpop.permute.xlu0 %329
        %331 = vrot.lane.b32.xlu0 %v290, 20
        %v332 = vpop.permute.xlu0 %331
        %333 = vrot.lane.b32.xlu0 %v291, 20
        %v334 = vpop.permute.xlu0 %333
        %335 = vrot.lane.b32.xlu0 %v292, 20
        %v336 = vpop.permute.xlu0 %335
        %337 = vrot.lane.b32.xlu0 %v293, 20
        %v338 = vpop.permute.xlu0 %337
        %339 = vrot.lane.b32.xlu0 %v294, 20
        %v340 = vpop.permute.xlu0 %339
        %341 = vrot.lane.b32.xlu0 %v295, 20
        %v342 = vpop.permute.xlu0 %341
        %343 = vrot.lane.b32.xlu0 %v296, 20
        %v344 = vpop.permute.xlu0 %343
        %v361 = vsel %vm157, %v141, %v314
        %v362 = vsel %vm157, %v142, %v316
        %v363 = vsel %vm157, %v143, %v318
        %v364 = vsel %vm157, %v144, %v320
        %v365 = vsel %vm157, %v145, %v322
        %v366 = vsel %vm157, %v146, %v324
        %v367 = vsel %vm157, %v147, %v326
        %v368 = vsel %vm157, %v148, %v328
        %v369 = vsel %vm157, %v149, %v330
        %v370 = vsel %vm157, %v150, %v332
        %v371 = vsel %vm157, %v151, %v334
        %v372 = vsel %vm157, %v152, %v336
        %v373 = vsel %vm157, %v153, %v338
        %v374 = vsel %vm157, %v154, %v340
        %v375 = vsel %vm157, %v155, %v342
        %v376 = vsel %vm157, %v156, %v344
        %v377 = vsub.f32 %v361, %v201
        %v378 = vsub.f32 %v362, %v201
        %v379 = vsub.f32 %v363, %v201
        %v380 = vsub.f32 %v364, %v201
        %v381 = vsub.f32 %v365, %v201
        %v382 = vsub.f32 %v366, %v201
        %v383 = vsub.f32 %v367, %v201
        %v384 = vsub.f32 %v368, %v201
        %v385 = vsub.f32 %v369, %v201
        %v386 = vsub.f32 %v370, %v201
        %v387 = vsub.f32 %v371, %v201
        %v388 = vsub.f32 %v372, %v201
        %v389 = vsub.f32 %v373, %v201
        %v390 = vsub.f32 %v374, %v201
        %v391 = vsub.f32 %v375, %v201
        %v392 = vsub.f32 %v376, %v201
        %v393 = vstv %s280
        %v394 = vmul.f32 %v377, %v393
        %v395 = vmul.f32 %v378, %v393
        %v396 = vmul.f32 %v379, %v393
        %v397 = vmul.f32 %v380, %v393
        %v398 = vmul.f32 %v381, %v393
        %v399 = vmul.f32 %v382, %v393
        %v400 = vmul.f32 %v383, %v393
        %v401 = vmul.f32 %v384, %v393
        %v402 = vmul.f32 %v385, %v393
        %v403 = vmul.f32 %v386, %v393
        %v404 = vmul.f32 %v387, %v393
        %v405 = vmul.f32 %v388, %v393
        %v406 = vmul.f32 %v389, %v393
        %v407 = vmul.f32 %v390, %v393
        %v408 = vmul.f32 %v391, %v393
        %v409 = vmul.f32 %v392, %v393
        %v410 = vld [vmem:[%s1] sm:$0xff]
        %v411 = vld [vmem:[%s1 + $0x8] sm:$0xff]
        %v412 = vld [vmem:[%s1 + $0x10] sm:$0xff]
        %v413 = vld [vmem:[%s1 + $0x18] sm:$0x1]
        %vm414 = vcmask 203776
        %v416 = vsel %vm414, %v394, 0
        %v419 = vsel %vm414, %v395, 0
        %v422 = vsel %vm414, %v396, 0
        %v425 = vsel %vm414, %v397, 0
        %v428 = vsel %vm414, %v398, 0
        %v431 = vsel %vm414, %v399, 0
        %v434 = vsel %vm414, %v400, 0
        %v437 = vsel %vm414, %v401, 0
        %v440 = vsel %vm414, %v402, 0
        %v443 = vsel %vm414, %v403, 0
        %v446 = vsel %vm414, %v404, 0
        %v449 = vsel %vm414, %v405, 0
        %v452 = vsel %vm414, %v406, 0
        %v455 = vsel %vm414, %v407, 0
        %v458 = vsel %vm414, %v408, 0
        %v461 = vsel %vm414, %v409, 0
        %vm463 = vcmask 1040384
        %v465 = vsel %vm463, %v413, 0
        %467 = vmatprep.subr.mxu0 0.0
        %468 = vmatpush1.msra.mxu0 %v410
        %469 = vmatprep.subr.mxu0 0.0
        %470 = vmatpush1.msra.mxu0 %v411
        %471 = vmatprep.subr.mxu0 0.0
        %472 = vmatpush1.msra.mxu0 %v412
        %473 = vmatprep.subr.mxu0 0.0
        %474 = vmatpush1.msra.mxu0 %v465
        %475 = vmatprep.subr.mxu0 0.0
        %476 = vmatpush1.msra.mxu0 0.0
        %477 = vmatprep.subr.mxu0 0.0
        %478 = vmatpush1.msra.mxu0 0.0
        %479 = vmatprep.subr.mxu0 0.0
        %480 = vmatpush1.msra.mxu0 0.0
        %481 = vmatprep.subr.mxu0 0.0
        %482 = vmatpush1.msra.mxu0 0.0
        %483 = vmatprep.subr.mxu0 0.0
        %484 = vmatpush1.msra.mxu0 0.0
        %485 = vmatprep.subr.mxu0 0.0
        %486 = vmatpush1.msra.mxu0 0.0
        %487 = vmatprep.subr.mxu0 0.0
        %488 = vmatpush1.msra.mxu0 0.0
        %489 = vmatprep.subr.mxu0 0.0
        %490 = vmatpush1.msra.mxu0 0.0
        %491 = vmatprep.subr.mxu0 0.0
        %492 = vmatpush1.msra.mxu0 0.0
        %493 = vmatprep.subr.mxu0 0.0
        %494 = vmatpush1.msra.mxu0 0.0
        %495 = vmatprep.subr.mxu0 0.0
        %496 = vmatpush1.msra.mxu0 0.0
        %497 = vmatprep.subr.mxu0 0.0
        %498 = vmatpush1.msra.mxu0 0.0
        %499 = vmatprep.subr.mxu0 0.0
        %500 = vmatpush1.msra.mxu0 0.0
        %501 = vmatprep.subr.mxu0 0.0
        %502 = vmatpush1.msra.mxu0 0.0
        %503 = vmatprep.subr.mxu0 0.0
        %504 = vmatpush1.msra.mxu0 0.0
        %505 = vmatprep.subr.mxu0 0.0
        %506 = vmatpush1.msra.mxu0 0.0
        %507 = vmatprep.subr.mxu0 0.0
        %508 = vmatpush1.msra.mxu0 0.0
        %509 = vmatprep.subr.mxu0 0.0
        %510 = vmatpush1.msra.mxu0 0.0
        %511 = vmatprep.subr.mxu0 0.0
        %512 = vmatpush1.msra.mxu0 0.0
        %513 = vmatprep.subr.mxu0 0.0
        %514 = vmatpush1.msra.mxu0 0.0
        %515 = vmatprep.subr.mxu0 0.0
        %516 = vmatpush1.msra.mxu0 0.0
        %517 = vmatprep.subr.mxu0 0.0
        %518 = vmatpush1.msra.mxu0 0.0
        %519 = vmatprep.subr.mxu0 0.0
        %520 = vmatpush1.msra.mxu0 0.0
        %521 = vmatprep.subr.mxu0 0.0
        %522 = vmatpush1.msra.mxu0 0.0
        %523 = vmatprep.subr.mxu0 0.0
        %524 = vmatpush1.msra.mxu0 0.0
        %525 = vmatprep.subr.mxu0 0.0
        %526 = vmatpush1.msra.mxu0 0.0
        %527 = vmatprep.subr.mxu0 0.0
        %528 = vmatpush1.msra.mxu0 0.0
        %529 = vmatprep.subr.mxu0 0.0
        %530 = vmatpush1.msra.mxu0 0.0
        %531 = vmatprep.mubr.f32.mxu0 0.0
        %532 = vmatmul.mubr.f32.gmra.mrb[0].mxu0 %v416
        %v533 = vpop.f32.mrb[0].mxu0
        %v534 = vadd.f32 0.0, %v533
        %v535 = vpop.f32.mrb[0].mxu0
        %536 = vmatprep.mubr.f32.mxu0 0.0
        %537 = vmatmul.mubr.f32.gmra.mrb[0].mxu0 %v419
        %v538 = vpop.f32.mrb[0].mxu0
        %v539 = vadd.f32 0.0, %v538
        %v540 = vpop.f32.mrb[0].mxu0
        %541 = vmatprep.mubr.f32.mxu0 0.0
        %542 = vmatmul.mubr.f32.gmra.mrb[0].mxu0 %v422
        %v543 = vpop.f32.mrb[0].mxu0
        %v544 = vadd.f32 0.0, %v543
        %v545 = vpop.f32.mrb[0].mxu0
        %546 = vmatprep.mubr.f32.mxu0 0.0
        %547 = vmatmul.mubr.f32.gmra.mrb[0].mxu0 %v425
        %v548 = vpop.f32.mrb[0].mxu0
        %v549 = vadd.f32 0.0, %v548
        %v550 = vpop.f32.mrb[0].mxu0
        %551 = vmatprep.mubr.f32.mxu0 0.0
        %552 = vmatmul.mubr.f32.gmra.mrb[0].mxu0 %v428
        %v553 = vpop.f32.mrb[0].mxu0
        %v554 = vadd.f32 0.0, %v553
        %v555 = vpop.f32.mrb[0].mxu0
        %556 = vmatprep.mubr.f32.mxu0 0.0
        %557 = vmatmul.mubr.f32.gmra.mrb[0].mxu0 %v431
        %v558 = vpop.f32.mrb[0].mxu0
        %v559 = vadd.f32 0.0, %v558
        %v560 = vpop.f32.mrb[0].mxu0
        %561 = vmatprep.mubr.f32.mxu0 0.0
        %562 = vmatmul.mubr.f32.gmra.mrb[0].mxu0 %v434
        %v563 = vpop.f32.mrb[0].mxu0
        %v564 = vadd.f32 0.0, %v563
        %v565 = vpop.f32.mrb[0].mxu0
        %566 = vmatprep.mubr.f32.mxu0 0.0
        %567 = vmatmul.mubr.f32.gmra.mrb[0].mxu0 %v437
        %v568 = vpop.f32.mrb[0].mxu0
        %v569 = vadd.f32 0.0, %v568
        %v570 = vpop.f32.mrb[0].mxu0
        %571 = vmatprep.mubr.f32.mxu0 0.0
        %572 = vmatmul.mubr.f32.gmra.mrb[0].mxu0 %v440
        %v573 = vpop.f32.mrb[0].mxu0
        %v574 = vadd.f32 0.0, %v573
        %v575 = vpop.f32.mrb[0].mxu0
        %576 = vmatprep.mubr.f32.mxu0 0.0
        %577 = vmatmul.mubr.f32.gmra.mrb[0].mxu0 %v443
        %v578 = vpop.f32.mrb[0].mxu0
        %v579 = vadd.f32 0.0, %v578
        %v580 = vpop.f32.mrb[0].mxu0
        %581 = vmatprep.mubr.f32.mxu0 0.0
        %582 = vmatmul.mubr.f32.gmra.mrb[0].mxu0 %v446
        %v583 = vpop.f32.mrb[0].mxu0
        %v584 = vadd.f32 0.0, %v583
        %v585 = vpop.f32.mrb[0].mxu0
        %586 = vmatprep.mubr.f32.mxu0 0.0
        %587 = vmatmul.mubr.f32.gmra.mrb[0].mxu0 %v449
        %v588 = vpop.f32.mrb[0].mxu0
        %v589 = vadd.f32 0.0, %v588
        %v590 = vpop.f32.mrb[0].mxu0
        %591 = vmatprep.mubr.f32.mxu0 0.0
        %592 = vmatmul.mubr.f32.gmra.mrb[0].mxu0 %v452
        %v593 = vpop.f32.mrb[0].mxu0
        %v594 = vadd.f32 0.0, %v593
        %v595 = vpop.f32.mrb[0].mxu0
        %596 = vmatprep.mubr.f32.mxu0 0.0
        %597 = vmatmul.mubr.f32.gmra.mrb[0].mxu0 %v455
        %v598 = vpop.f32.mrb[0].mxu0
        %v599 = vadd.f32 0.0, %v598
        %v600 = vpop.f32.mrb[0].mxu0
        %601 = vmatprep.mubr.f32.mxu0 0.0
        %602 = vmatmul.mubr.f32.gmra.mrb[0].mxu0 %v458
        %v603 = vpop.f32.mrb[0].mxu0
        %v604 = vadd.f32 0.0, %v603
        %v605 = vpop.f32.mrb[0].mxu0
        %606 = vmatprep.mubr.f32.mxu0 0.0
        %607 = vmatmul.mubr.f32.gmra.mrb[0].mxu0 %v461
        %v608 = vpop.f32.mrb[0].mxu0
        %v609 = vadd.f32 0.0, %v608
        %v610 = vpop.f32.mrb[0].mxu0
        %611 = vdwg.mxu0
        %vm612 = vcmask 261120
        %v613 = vsel %vm612, %v534, 0.0
        %v614 = vsel %vm612, %v539, 0.0
        %v615 = vadd.f32 %v613, %v614
        %v616 = vsel %vm612, %v544, 0.0
        %v617 = vadd.f32 %v615, %v616
        %v618 = vsel %vm612, %v549, 0.0
        %v619 = vadd.f32 %v617, %v618
        %v620 = vsel %vm612, %v554, 0.0
        %v621 = vadd.f32 %v619, %v620
        %v622 = vsel %vm612, %v559, 0.0
        %v623 = vadd.f32 %v621, %v622
        %v624 = vsel %vm612, %v564, 0.0
        %v625 = vadd.f32 %v623, %v624
        %v626 = vsel %vm612, %v569, 0.0
        %v627 = vadd.f32 %v625, %v626
        %v628 = vsel %vm612, %v574, 0.0
        %v629 = vadd.f32 %v627, %v628
        %v630 = vsel %vm612, %v579, 0.0
        %v631 = vadd.f32 %v629, %v630
        %v632 = vsel %vm612, %v584, 0.0
        %v633 = vadd.f32 %v631, %v632
        %v634 = vsel %vm612, %v589, 0.0
        %v635 = vadd.f32 %v633, %v634
        %v636 = vsel %vm612, %v594, 0.0
        %v637 = vadd.f32 %v635, %v636
        %v638 = vsel %vm612, %v599, 0.0
        %v639 = vadd.f32 %v637, %v638
        %v640 = vsel %vm612, %v604, 0.0
        %v641 = vadd.f32 %v639, %v640
        %v642 = vsel %vm612, %v609, 0.0
        %v643 = vadd.f32 %v641, %v642
        %v644 = vrot.slane %v643, 4
        %v645 = vadd.f32 %v643, %v644
        %v646 = vrot.slane %v645, 2
        %v647 = vadd.f32 %v645, %v646
        %v648 = vrot.slane %v647, 1
        %v649 = vadd.f32 %v647, %v648
        %v650 = vadd.f32 %v649, 0.0
        %vm651 = vcmask 523520
        %v652 = vsel %vm651, %v534, 0.0
        %v653 = vsel %vm651, %v539, 0.0
        %v654 = vadd.f32 %v652, %v653
        %v655 = vsel %vm651, %v544, 0.0
        %v656 = vadd.f32 %v654, %v655
        %v657 = vsel %vm651, %v549, 0.0
        %v658 = vadd.f32 %v656, %v657
        %v659 = vsel %vm651, %v554, 0.0
        %v660 = vadd.f32 %v658, %v659
        %v661 = vsel %vm651, %v559, 0.0
        %v662 = vadd.f32 %v660, %v661
        %v663 = vsel %vm651, %v564, 0.0
        %v664 = vadd.f32 %v662, %v663
        %v665 = vsel %vm651, %v569, 0.0
        %v666 = vadd.f32 %v664, %v665
        %v667 = vsel %vm651, %v574, 0.0
        %v668 = vadd.f32 %v666, %v667
        %v669 = vsel %vm651, %v579, 0.0
        %v670 = vadd.f32 %v668, %v669
        %v671 = vsel %vm651, %v584, 0.0
        %v672 = vadd.f32 %v670, %v671
        %v673 = vsel %vm651, %v589, 0.0
        %v674 = vadd.f32 %v672, %v673
        %v675 = vsel %vm651, %v594, 0.0
        %v676 = vadd.f32 %v674, %v675
        %v677 = vsel %vm651, %v599, 0.0
        %v678 = vadd.f32 %v676, %v677
        %v679 = vsel %vm651, %v604, 0.0
        %v680 = vadd.f32 %v678, %v679
        %v681 = vsel %vm651, %v609, 0.0
        %v682 = vadd.f32 %v680, %v681
        %v683 = vrot.slane %v682, 4
        %v684 = vadd.f32 %v682, %v683
        %v685 = vrot.slane %v684, 2
        %v686 = vadd.f32 %v684, %v685
        %v687 = vrot.slane %v686, 1
        %v688 = vadd.f32 %v686, %v687
        %690 = vrot.lane.b32.xlu0 %v688, 96
        %v691 = vpop.permute.xlu0 %690
        %v693 = vadd.f32 %v650, %v691
        %vm694 = vcmask 785920
        %v695 = vsel %vm694, %v534, 0.0
        %v696 = vsel %vm694, %v539, 0.0
        %v697 = vadd.f32 %v695, %v696
        %v698 = vsel %vm694, %v544, 0.0
        %v699 = vadd.f32 %v697, %v698
        %v700 = vsel %vm694, %v549, 0.0
        %v701 = vadd.f32 %v699, %v700
        %v702 = vsel %vm694, %v554, 0.0
        %v703 = vadd.f32 %v701, %v702
        %v704 = vsel %vm694, %v559, 0.0
        %v705 = vadd.f32 %v703, %v704
        %v706 = vsel %vm694, %v564, 0.0
        %v707 = vadd.f32 %v705, %v706
        %v708 = vsel %vm694, %v569, 0.0
        %v709 = vadd.f32 %v707, %v708
        %v710 = vsel %vm694, %v574, 0.0
        %v711 = vadd.f32 %v709, %v710
        %v712 = vsel %vm694, %v579, 0.0
        %v713 = vadd.f32 %v711, %v712
        %v714 = vsel %vm694, %v584, 0.0
        %v715 = vadd.f32 %v713, %v714
        %v716 = vsel %vm694, %v589, 0.0
        %v717 = vadd.f32 %v715, %v716
        %v718 = vsel %vm694, %v594, 0.0
        %v719 = vadd.f32 %v717, %v718
        %v720 = vsel %vm694, %v599, 0.0
        %v721 = vadd.f32 %v719, %v720
        %v722 = vsel %vm694, %v604, 0.0
        %v723 = vadd.f32 %v721, %v722
        %v724 = vsel %vm694, %v609, 0.0
        %v725 = vadd.f32 %v723, %v724
        %v726 = vrot.slane %v725, 4
        %v727 = vadd.f32 %v725, %v726
        %v728 = vrot.slane %v727, 2
        %v729 = vadd.f32 %v727, %v728
        %v730 = vrot.slane %v729, 1
        %v731 = vadd.f32 %v729, %v730
        %733 = vrot.lane.b32.xlu0 %v731, 64
        %v734 = vpop.permute.xlu0 %733
        %v736 = vadd.f32 %v693, %v734
        %vm737 = vcmask 1048320
        %v738 = vsel %vm737, %v534, 0.0
        %v739 = vsel %vm737, %v539, 0.0
        %v740 = vadd.f32 %v738, %v739
        %v741 = vsel %vm737, %v544, 0.0
        %v742 = vadd.f32 %v740, %v741
        %v743 = vsel %vm737, %v549, 0.0
        %v744 = vadd.f32 %v742, %v743
        %v745 = vsel %vm737, %v554, 0.0
        %v746 = vadd.f32 %v744, %v745
        %v747 = vsel %vm737, %v559, 0.0
        %v748 = vadd.f32 %v746, %v747
        %v749 = vsel %vm737, %v564, 0.0
        %v750 = vadd.f32 %v748, %v749
        %v751 = vsel %vm737, %v569, 0.0
        %v752 = vadd.f32 %v750, %v751
        %v753 = vsel %vm737, %v574, 0.0
        %v754 = vadd.f32 %v752, %v753
        %v755 = vsel %vm737, %v579, 0.0
        %v756 = vadd.f32 %v754, %v755
        %v757 = vsel %vm737, %v584, 0.0
        %v758 = vadd.f32 %v756, %v757
        %v759 = vsel %vm737, %v589, 0.0
        %v760 = vadd.f32 %v758, %v759
        %v761 = vsel %vm737, %v594, 0.0
        %v762 = vadd.f32 %v760, %v761
        %v763 = vsel %vm737, %v599, 0.0
        %v764 = vadd.f32 %v762, %v763
        %v765 = vsel %vm737, %v604, 0.0
        %v766 = vadd.f32 %v764, %v765
        %vm767 = vcmask 1047296
        %v768 = vsel %vm767, %v609, 0.0
        %v769 = vadd.f32 %v766, %v768
        %v770 = vrot.slane %v769, 4
        %v771 = vadd.f32 %v769, %v770
        %v772 = vrot.slane %v771, 2
        %v773 = vadd.f32 %v771, %v772
        %v774 = vrot.slane %v773, 1
        %v775 = vadd.f32 %v773, %v774
        %777 = vrot.lane.b32.xlu0 %v775, 32
        %v778 = vpop.permute.xlu0 %777
        %v780 = vadd.f32 %v736, %v778
        %v781 = vmul.f32 %v534, %v534
        %v782 = vmul.f32 %v539, %v539
        %v783 = vmul.f32 %v544, %v544
        %v784 = vmul.f32 %v549, %v549
        %v785 = vmul.f32 %v554, %v554
        %v786 = vmul.f32 %v559, %v559
        %v787 = vmul.f32 %v564, %v564
        %v788 = vmul.f32 %v569, %v569
        %v789 = vmul.f32 %v574, %v574
        %v790 = vmul.f32 %v579, %v579
        %v791 = vmul.f32 %v584, %v584
        %v792 = vmul.f32 %v589, %v589
        %v793 = vmul.f32 %v594, %v594
        %v794 = vmul.f32 %v599, %v599
        %v795 = vmul.f32 %v604, %v604
        %v796 = vmul.f32 %v609, %v609
        %v797 = vsel %vm612, %v781, 0.0
        %v798 = vsel %vm612, %v782, 0.0
        %v799 = vadd.f32 %v797, %v798
        %v800 = vsel %vm612, %v783, 0.0
        %v801 = vadd.f32 %v799, %v800
        %v802 = vsel %vm612, %v784, 0.0
        %v803 = vadd.f32 %v801, %v802
        %v804 = vsel %vm612, %v785, 0.0
        %v805 = vadd.f32 %v803, %v804
        %v806 = vsel %vm612, %v786, 0.0
        %v807 = vadd.f32 %v805, %v806
        %v808 = vsel %vm612, %v787, 0.0
        %v809 = vadd.f32 %v807, %v808
        %v810 = vsel %vm612, %v788, 0.0
        %v811 = vadd.f32 %v809, %v810
        %v812 = vsel %vm612, %v789, 0.0
        %v813 = vadd.f32 %v811, %v812
        %v814 = vsel %vm612, %v790, 0.0
        %v815 = vadd.f32 %v813, %v814
        %v816 = vsel %vm612, %v791, 0.0
        %v817 = vadd.f32 %v815, %v816
        %v818 = vsel %vm612, %v792, 0.0
        %v819 = vadd.f32 %v817, %v818
        %v820 = vsel %vm612, %v793, 0.0
        %v821 = vadd.f32 %v819, %v820
        %v822 = vsel %vm612, %v794, 0.0
        %v823 = vadd.f32 %v821, %v822
        %v824 = vsel %vm612, %v795, 0.0
        %v825 = vadd.f32 %v823, %v824
        %v826 = vsel %vm612, %v796, 0.0
        %v827 = vadd.f32 %v825, %v826
        %v828 = vrot.slane %v827, 4
        %v829 = vadd.f32 %v827, %v828
        %v830 = vrot.slane %v829, 2
        %v831 = vadd.f32 %v829, %v830
        %v832 = vrot.slane %v831, 1
        %v833 = vadd.f32 %v831, %v832
        %v834 = vadd.f32 %v833, 0.0
        %v835 = vsel %vm651, %v781, 0.0
        %v836 = vsel %vm651, %v782, 0.0
        %v837 = vadd.f32 %v835, %v836
        %v838 = vsel %vm651, %v783, 0.0
        %v839 = vadd.f32 %v837, %v838
        %v840 = vsel %vm651, %v784, 0.0
        %v841 = vadd.f32 %v839, %v840
        %v842 = vsel %vm651, %v785, 0.0
        %v843 = vadd.f32 %v841, %v842
        %v844 = vsel %vm651, %v786, 0.0
        %v845 = vadd.f32 %v843, %v844
        %v846 = vsel %vm651, %v787, 0.0
        %v847 = vadd.f32 %v845, %v846
        %v848 = vsel %vm651, %v788, 0.0
        %v849 = vadd.f32 %v847, %v848
        %v850 = vsel %vm651, %v789, 0.0
        %v851 = vadd.f32 %v849, %v850
        %v852 = vsel %vm651, %v790, 0.0
        %v853 = vadd.f32 %v851, %v852
        %v854 = vsel %vm651, %v791, 0.0
        %v855 = vadd.f32 %v853, %v854
        %v856 = vsel %vm651, %v792, 0.0
        %v857 = vadd.f32 %v855, %v856
        %v858 = vsel %vm651, %v793, 0.0
        %v859 = vadd.f32 %v857, %v858
        %v860 = vsel %vm651, %v794, 0.0
        %v861 = vadd.f32 %v859, %v860
        %v862 = vsel %vm651, %v795, 0.0
        %v863 = vadd.f32 %v861, %v862
        %v864 = vsel %vm651, %v796, 0.0
        %v865 = vadd.f32 %v863, %v864
        %v866 = vrot.slane %v865, 4
        %v867 = vadd.f32 %v865, %v866
        %v868 = vrot.slane %v867, 2
        %v869 = vadd.f32 %v867, %v868
        %v870 = vrot.slane %v869, 1
        %v871 = vadd.f32 %v869, %v870
        %873 = vrot.lane.b32.xlu0 %v871, 96
        %v874 = vpop.permute.xlu0 %873
        %v876 = vadd.f32 %v834, %v874
        %v877 = vsel %vm694, %v781, 0.0
        %v878 = vsel %vm694, %v782, 0.0
        %v879 = vadd.f32 %v877, %v878
        %v880 = vsel %vm694, %v783, 0.0
        %v881 = vadd.f32 %v879, %v880
        %v882 = vsel %vm694, %v784, 0.0
        %v883 = vadd.f32 %v881, %v882
        %v884 = vsel %vm694, %v785, 0.0
        %v885 = vadd.f32 %v883, %v884
        %v886 = vsel %vm694, %v786, 0.0
        %v887 = vadd.f32 %v885, %v886
        %v888 = vsel %vm694, %v787, 0.0
        %v889 = vadd.f32 %v887, %v888
        %v890 = vsel %vm694, %v788, 0.0
        %v891 = vadd.f32 %v889, %v890
        %v892 = vsel %vm694, %v789, 0.0
        %v893 = vadd.f32 %v891, %v892
        %v894 = vsel %vm694, %v790, 0.0
        %v895 = vadd.f32 %v893, %v894
        %v896 = vsel %vm694, %v791, 0.0
        %v897 = vadd.f32 %v895, %v896
        %v898 = vsel %vm694, %v792, 0.0
        %v899 = vadd.f32 %v897, %v898
        %v900 = vsel %vm694, %v793, 0.0
        %v901 = vadd.f32 %v899, %v900
        %v902 = vsel %vm694, %v794, 0.0
        %v903 = vadd.f32 %v901, %v902
        %v904 = vsel %vm694, %v795, 0.0
        %v905 = vadd.f32 %v903, %v904
        %v906 = vsel %vm694, %v796, 0.0
        %v907 = vadd.f32 %v905, %v906
        %v908 = vrot.slane %v907, 4
        %v909 = vadd.f32 %v907, %v908
        %v910 = vrot.slane %v909, 2
        %v911 = vadd.f32 %v909, %v910
        %v912 = vrot.slane %v911, 1
        %v913 = vadd.f32 %v911, %v912
        %915 = vrot.lane.b32.xlu0 %v913, 64
        %v916 = vpop.permute.xlu0 %915
        %v918 = vadd.f32 %v876, %v916
        %v919 = vsel %vm737, %v781, 0.0
        %v920 = vsel %vm737, %v782, 0.0
        %v921 = vadd.f32 %v919, %v920
        %v922 = vsel %vm737, %v783, 0.0
        %v923 = vadd.f32 %v921, %v922
        %v924 = vsel %vm737, %v784, 0.0
        %v925 = vadd.f32 %v923, %v924
        %v926 = vsel %vm737, %v785, 0.0
        %v927 = vadd.f32 %v925, %v926
        %v928 = vsel %vm737, %v786, 0.0
        %v929 = vadd.f32 %v927, %v928
        %v930 = vsel %vm737, %v787, 0.0
        %v931 = vadd.f32 %v929, %v930
        %v932 = vsel %vm737, %v788, 0.0
        %v933 = vadd.f32 %v931, %v932
        %v934 = vsel %vm737, %v789, 0.0
        %v935 = vadd.f32 %v933, %v934
        %v936 = vsel %vm737, %v790, 0.0
        %v937 = vadd.f32 %v935, %v936
        %v938 = vsel %vm737, %v791, 0.0
        %v939 = vadd.f32 %v937, %v938
        %v940 = vsel %vm737, %v792, 0.0
        %v941 = vadd.f32 %v939, %v940
        %v942 = vsel %vm737, %v793, 0.0
        %v943 = vadd.f32 %v941, %v942
        %v944 = vsel %vm737, %v794, 0.0
        %v945 = vadd.f32 %v943, %v944
        %v946 = vsel %vm737, %v795, 0.0
        %v947 = vadd.f32 %v945, %v946
        %v948 = vsel %vm767, %v796, 0.0
        %v949 = vadd.f32 %v947, %v948
        %v950 = vrot.slane %v949, 4
        %v951 = vadd.f32 %v949, %v950
        %v952 = vrot.slane %v951, 2
        %v953 = vadd.f32 %v951, %v952
        %v954 = vrot.slane %v953, 1
        %v955 = vadd.f32 %v953, %v954
        %957 = vrot.lane.b32.xlu0 %v955, 32
        %v958 = vpop.permute.xlu0 %957
        %v960 = vadd.f32 %v918, %v958
        %v961 = vmul.f32 %v780, 0.0019569471
        %v962 = vmul.f32 %v960, 0.0019569471
        %v963 = vmul.f32 %v961, %v961
        %v964 = vsub.f32 %v962, %v963
        %966 = vrot.lane.b32.xlu0 %v961, 32
        %v967 = vpop.permute.xlu0 %966
        %969 = vrot.lane.b32.xlu0 %v961, 64
        %v970 = vpop.permute.xlu0 %969
        %972 = vrot.lane.b32.xlu0 %v961, 96
        %v973 = vpop.permute.xlu0 %972
        %v975 = vsel %vm612, %v961, %v967
        %vm976 = vcmask 523264
        %v977 = vsel %vm976, %v975, %v970
        %vm978 = vcmask 785408
        %v979 = vsel %vm978, %v977, %v973
        %v980 = vadd.f32 %v964, 1e-05
        %v981 = vrsqrt.pop %v980
        %983 = vrot.lane.b32.xlu0 %v981, 32
        %v984 = vpop.permute.xlu0 %983
        %986 = vrot.lane.b32.xlu0 %v981, 64
        %v987 = vpop.permute.xlu0 %986
        %989 = vrot.lane.b32.xlu0 %v981, 96
        %v990 = vpop.permute.xlu0 %989
        %v992 = vsel %vm612, %v981, %v984
        %v993 = vsel %vm976, %v992, %v987
        %v994 = vsel %vm978, %v993, %v990
        %v995 = vlaneseq
        %v996 = vshrl.u32 %v995, 7
        %v997 = vsub.s32 0, %v996
        %v998 = vrot.slane %v979, %v997
        %v999 = vsub.f32 %v534, %v998
        %v1000 = vsub.f32 %v539, %v998
        %v1001 = vsub.f32 %v544, %v998
        %v1002 = vsub.f32 %v549, %v998
        %v1003 = vsub.f32 %v554, %v998
        %v1004 = vsub.f32 %v559, %v998
        %v1005 = vsub.f32 %v564, %v998
        %v1006 = vsub.f32 %v569, %v998
        %v1007 = vsub.f32 %v574, %v998
        %v1008 = vsub.f32 %v579, %v998
        %v1009 = vsub.f32 %v584, %v998
        %v1010 = vsub.f32 %v589, %v998
        %v1011 = vsub.f32 %v594, %v998
        %v1012 = vsub.f32 %v599, %v998
        %v1013 = vsub.f32 %v604, %v998
        %v1014 = vsub.f32 %v609, %v998
        %v1015 = vlaneseq
        %v1016 = vshrl.u32 %v1015, 7
        %v1017 = vsub.s32 0, %v1016
        %v1018 = vrot.slane %v994, %v1017
        %v1019 = vmul.f32 %v999, %v1018
        %v1020 = vmul.f32 %v1000, %v1018
        %v1021 = vmul.f32 %v1001, %v1018
        %v1022 = vmul.f32 %v1002, %v1018
        %v1023 = vmul.f32 %v1003, %v1018
        %v1024 = vmul.f32 %v1004, %v1018
        %v1025 = vmul.f32 %v1005, %v1018
        %v1026 = vmul.f32 %v1006, %v1018
        %v1027 = vmul.f32 %v1007, %v1018
        %v1028 = vmul.f32 %v1008, %v1018
        %v1029 = vmul.f32 %v1009, %v1018
        %v1030 = vmul.f32 %v1010, %v1018
        %v1031 = vmul.f32 %v1011, %v1018
        %v1032 = vmul.f32 %v1012, %v1018
        %v1033 = vmul.f32 %v1013, %v1018
        %v1034 = vmul.f32 %v1014, %v1018
        %v1035 = vld [vmem:[%s1 + $0x460] sm:$0x1]
        %v1036 = vlaneseq
        %v1037 = vshrl.u32 %v1036, 7
        %v1038 = vsub.s32 0, %v1037
        %v1039 = vrot.slane %v1035, %v1038
        %v1040 = vmul.f32 %v1019, %v1039
        %v1041 = vmul.f32 %v1020, %v1039
        %v1042 = vmul.f32 %v1021, %v1039
        %v1043 = vmul.f32 %v1022, %v1039
        %v1044 = vmul.f32 %v1023, %v1039
        %v1045 = vmul.f32 %v1024, %v1039
        %v1046 = vmul.f32 %v1025, %v1039
        %v1047 = vmul.f32 %v1026, %v1039
        %v1048 = vmul.f32 %v1027, %v1039
        %v1049 = vmul.f32 %v1028, %v1039
        %v1050 = vmul.f32 %v1029, %v1039
        %v1051 = vmul.f32 %v1030, %v1039
        %v1052 = vmul.f32 %v1031, %v1039
        %v1053 = vmul.f32 %v1032, %v1039
        %v1054 = vmul.f32 %v1033, %v1039
        %v1055 = vmul.f32 %v1034, %v1039
        %v1056 = vld [vmem:[%s1 + $0x461] sm:$0x1]
        %v1057 = vlaneseq
        %v1058 = vshrl.u32 %v1057, 7
        %v1059 = vsub.s32 0, %v1058
        %v1060 = vrot.slane %v1056, %v1059
        %v1061 = vadd.f32 %v1040, %v1060
        %v1062 = vadd.f32 %v1041, %v1060
        %v1063 = vadd.f32 %v1042, %v1060
        %v1064 = vadd.f32 %v1043, %v1060
        %v1065 = vadd.f32 %v1044, %v1060
        %v1066 = vadd.f32 %v1045, %v1060
        %v1067 = vadd.f32 %v1046, %v1060
        %v1068 = vadd.f32 %v1047, %v1060
        %v1069 = vadd.f32 %v1048, %v1060
        %v1070 = vadd.f32 %v1049, %v1060
        %v1071 = vadd.f32 %v1050, %v1060
        %v1072 = vadd.f32 %v1051, %v1060
        %v1073 = vadd.f32 %v1052, %v1060
        %v1074 = vadd.f32 %v1053, %v1060
        %v1075 = vadd.f32 %v1054, %v1060
        %v1076 = vadd.f32 %v1055, %v1060
        %v1077 = vmul.f32 %v1061, %v1061
        %v1078 = vmul.f32 %v1062, %v1062
        %v1079 = vmul.f32 %v1063, %v1063
        %v1080 = vmul.f32 %v1064, %v1064
        %v1081 = vmul.f32 %v1065, %v1065
        %v1082 = vmul.f32 %v1066, %v1066
        %v1083 = vmul.f32 %v1067, %v1067
        %v1084 = vmul.f32 %v1068, %v1068
        %v1085 = vmul.f32 %v1069, %v1069
        %v1086 = vmul.f32 %v1070, %v1070
        %v1087 = vmul.f32 %v1071, %v1071
        %v1088 = vmul.f32 %v1072, %v1072
        %v1089 = vmul.f32 %v1073, %v1073
        %v1090 = vmul.f32 %v1074, %v1074
        %v1091 = vmul.f32 %v1075, %v1075
        %v1092 = vmul.f32 %v1076, %v1076
        %v1093 = vmul.f32 %v1061, %v1077
        %v1094 = vmul.f32 %v1062, %v1078
        %v1095 = vmul.f32 %v1063, %v1079
        %v1096 = vmul.f32 %v1064, %v1080
        %v1097 = vmul.f32 %v1065, %v1081
        %v1098 = vmul.f32 %v1066, %v1082
        %v1099 = vmul.f32 %v1067, %v1083
        %v1100 = vmul.f32 %v1068, %v1084
        %v1101 = vmul.f32 %v1069, %v1085
        %v1102 = vmul.f32 %v1070, %v1086
        %v1103 = vmul.f32 %v1071, %v1087
        %v1104 = vmul.f32 %v1072, %v1088
        %v1105 = vmul.f32 %v1073, %v1089
        %v1106 = vmul.f32 %v1074, %v1090
        %v1107 = vmul.f32 %v1075, %v1091
        %v1108 = vmul.f32 %v1076, %v1092
        %v1109 = vmul.f32 %v1093, 0.044715
        %v1110 = vmul.f32 %v1094, 0.044715
        %v1111 = vmul.f32 %v1095, 0.044715
        %v1112 = vmul.f32 %v1096, 0.044715
        %v1113 = vmul.f32 %v1097, 0.044715
        %v1114 = vmul.f32 %v1098, 0.044715
        %v1115 = vmul.f32 %v1099, 0.044715
        %v1116 = vmul.f32 %v1100, 0.044715
        %v1117 = vmul.f32 %v1101, 0.044715
        %v1118 = vmul.f32 %v1102, 0.044715
        %v1119 = vmul.f32 %v1103, 0.044715
        %v1120 = vmul.f32 %v1104, 0.044715
        %v1121 = vmul.f32 %v1105, 0.044715
        %v1122 = vmul.f32 %v1106, 0.044715
        %v1123 = vmul.f32 %v1107, 0.044715
        %v1124 = vmul.f32 %v1108, 0.044715
        %v1125 = vadd.f32 %v1061, %v1109
        %v1126 = vadd.f32 %v1062, %v1110
        %v1127 = vadd.f32 %v1063, %v1111
        %v1128 = vadd.f32 %v1064, %v1112
        %v1129 = vadd.f32 %v1065, %v1113
        %v1130 = vadd.f32 %v1066, %v1114
        %v1131 = vadd.f32 %v1067, %v1115
        %v1132 = vadd.f32 %v1068, %v1116
        %v1133 = vadd.f32 %v1069, %v1117
        %v1134 = vadd.f32 %v1070, %v1118
        %v1135 = vadd.f32 %v1071, %v1119
        %v1136 = vadd.f32 %v1072, %v1120
        %v1137 = vadd.f32 %v1073, %v1121
        %v1138 = vadd.f32 %v1074, %v1122
        %v1139 = vadd.f32 %v1075, %v1123
        %v1140 = vadd.f32 %v1076, %v1124
        %v1141 = vmul.f32 %v1125, 0.7978846
        %v1142 = vmul.f32 %v1126, 0.7978846
        %v1143 = vmul.f32 %v1127, 0.7978846
        %v1144 = vmul.f32 %v1128, 0.7978846
        %v1145 = vmul.f32 %v1129, 0.7978846
        %v1146 = vmul.f32 %v1130, 0.7978846
        %v1147 = vmul.f32 %v1131, 0.7978846
        %v1148 = vmul.f32 %v1132, 0.7978846
        %v1149 = vmul.f32 %v1133, 0.7978846
        %v1150 = vmul.f32 %v1134, 0.7978846
        %v1151 = vmul.f32 %v1135, 0.7978846
        %v1152 = vmul.f32 %v1136, 0.7978846
        %v1153 = vmul.f32 %v1137, 0.7978846
        %v1154 = vmul.f32 %v1138, 0.7978846
        %v1155 = vmul.f32 %v1139, 0.7978846
        %v1156 = vmul.f32 %v1140, 0.7978846
        %v1157 = vtanh.pop %v1141
        %v1158 = vtanh.pop %v1142
        %v1159 = vtanh.pop %v1143
        %v1160 = vtanh.pop %v1144
        %v1161 = vtanh.pop %v1145
        %v1162 = vtanh.pop %v1146
        %v1163 = vtanh.pop %v1147
        %v1164 = vtanh.pop %v1148
        %v1165 = vtanh.pop %v1149
        %v1166 = vtanh.pop %v1150
        %v1167 = vtanh.pop %v1151
        %v1168 = vtanh.pop %v1152
        %v1169 = vtanh.pop %v1153
        %v1170 = vtanh.pop %v1154
        %v1171 = vtanh.pop %v1155
        %v1172 = vtanh.pop %v1156
        %v1173 = vadd.f32 %v1157, 1.0
        %v1174 = vadd.f32 %v1158, 1.0
        %v1175 = vadd.f32 %v1159, 1.0
        %v1176 = vadd.f32 %v1160, 1.0
        %v1177 = vadd.f32 %v1161, 1.0
        %v1178 = vadd.f32 %v1162, 1.0
        %v1179 = vadd.f32 %v1163, 1.0
        %v1180 = vadd.f32 %v1164, 1.0
        %v1181 = vadd.f32 %v1165, 1.0
        %v1182 = vadd.f32 %v1166, 1.0
        %v1183 = vadd.f32 %v1167, 1.0
        %v1184 = vadd.f32 %v1168, 1.0
        %v1185 = vadd.f32 %v1169, 1.0
        %v1186 = vadd.f32 %v1170, 1.0
        %v1187 = vadd.f32 %v1171, 1.0
        %v1188 = vadd.f32 %v1172, 1.0
        %v1189 = vmul.f32 %v1173, 0.5
        %v1190 = vmul.f32 %v1174, 0.5
        %v1191 = vmul.f32 %v1175, 0.5
        %v1192 = vmul.f32 %v1176, 0.5
        %v1193 = vmul.f32 %v1177, 0.5
        %v1194 = vmul.f32 %v1178, 0.5
        %v1195 = vmul.f32 %v1179, 0.5
        %v1196 = vmul.f32 %v1180, 0.5
        %v1197 = vmul.f32 %v1181, 0.5
        %v1198 = vmul.f32 %v1182, 0.5
        %v1199 = vmul.f32 %v1183, 0.5
        %v1200 = vmul.f32 %v1184, 0.5
        %v1201 = vmul.f32 %v1185, 0.5
        %v1202 = vmul.f32 %v1186, 0.5
        %v1203 = vmul.f32 %v1187, 0.5
        %v1204 = vmul.f32 %v1188, 0.5
        %v1205 = vmul.f32 %v1061, %v1189
        %v1206 = vmul.f32 %v1062, %v1190
        %v1207 = vmul.f32 %v1063, %v1191
        %v1208 = vmul.f32 %v1064, %v1192
        %v1209 = vmul.f32 %v1065, %v1193
        %v1210 = vmul.f32 %v1066, %v1194
        %v1211 = vmul.f32 %v1067, %v1195
        %v1212 = vmul.f32 %v1068, %v1196
        %v1213 = vmul.f32 %v1069, %v1197
        %v1214 = vmul.f32 %v1070, %v1198
        %v1215 = vmul.f32 %v1071, %v1199
        %v1216 = vmul.f32 %v1072, %v1200
        %v1217 = vmul.f32 %v1073, %v1201
        %v1218 = vmul.f32 %v1074, %v1202
        %v1219 = vmul.f32 %v1075, %v1203
        %v1220 = vmul.f32 %v1076, %v1204
        %1221 = vst [vmem:[#allocation2] sm:$0xff] %v1205
        %1222 = vst [vmem:[#allocation2 + $0x8] sm:$0xff] %v1206
        %1223 = vst [vmem:[#allocation2 + $0x10] sm:$0xff] %v1207
        %1224 = vst [vmem:[#allocation2 + $0x18] sm:$0xff] %v1208
        %1225 = vst [vmem:[#allocation2 + $0x20] sm:$0xff] %v1209
        %1226 = vst [vmem:[#allocation2 + $0x28] sm:$0xff] %v1210
        %1227 = vst [vmem:[#allocation2 + $0x30] sm:$0xff] %v1211
        %1228 = vst [vmem:[#allocation2 + $0x38] sm:$0xff] %v1212
        %1229 = vst [vmem:[#allocation2 + $0x40] sm:$0xff] %v1213
        %1230 = vst [vmem:[#allocation2 + $0x48] sm:$0xff] %v1214
        %1231 = vst [vmem:[#allocation2 + $0x50] sm:$0xff] %v1215
        %1232 = vst [vmem:[#allocation2 + $0x58] sm:$0xff] %v1216
        %1233 = vst [vmem:[#allocation2 + $0x60] sm:$0xff] %v1217
        %1234 = vst [vmem:[#allocation2 + $0x68] sm:$0xff] %v1218
        %1235 = vst [vmem:[#allocation2 + $0x70] sm:$0xff] %v1219
        %1236 = vst [vmem:[#allocation2 + $0x78] sm:$0xff] %v1220
        %1237 = vst [vmem:[#allocation2 + $0x80] sm:$0xff] 0.0
        %v1238 = vld [vmem:[#allocation2] sm:$0xff]
        %v1239 = vld [vmem:[#allocation2 + $0x8] sm:$0xff]
        %v1240 = vld [vmem:[#allocation2 + $0x10] sm:$0xff]
        %v1241 = vld [vmem:[#allocation2 + $0x18] sm:$0xff]
        %v1242 = vld [vmem:[#allocation2 + $0x20] sm:$0xff]
        %v1243 = vld [vmem:[#allocation2 + $0x28] sm:$0xff]
        %v1244 = vld [vmem:[#allocation2 + $0x30] sm:$0xff]
        %v1245 = vld [vmem:[#allocation2 + $0x38] sm:$0xff]
        %v1246 = vld [vmem:[#allocation2 + $0x40] sm:$0xff]
        %v1247 = vld [vmem:[#allocation2 + $0x48] sm:$0xff]
        %v1248 = vld [vmem:[#allocation2 + $0x50] sm:$0xff]
        %v1249 = vld [vmem:[#allocation2 + $0x58] sm:$0xff]
        %v1250 = vld [vmem:[#allocation2 + $0x60] sm:$0xff]
        %v1251 = vld [vmem:[#allocation2 + $0x68] sm:$0xff]
        %v1252 = vld [vmem:[#allocation2 + $0x70] sm:$0xff]
        %v1253 = vld [vmem:[#allocation2 + $0x78] sm:$0xff]
        %v1254 = vld [vmem:[#allocation2 + $0x1] sm:$0xff]
        %v1255 = vld [vmem:[#allocation2 + $0x9] sm:$0xff]
        %v1256 = vld [vmem:[#allocation2 + $0x11] sm:$0xff]
        %v1257 = vld [vmem:[#allocation2 + $0x19] sm:$0xff]
        %v1258 = vld [vmem:[#allocation2 + $0x21] sm:$0xff]
        %v1259 = vld [vmem:[#allocation2 + $0x29] sm:$0xff]
        %v1260 = vld [vmem:[#allocation2 + $0x31] sm:$0xff]
        %v1261 = vld [vmem:[#allocation2 + $0x39] sm:$0xff]
        %v1262 = vld [vmem:[#allocation2 + $0x41] sm:$0xff]
        %v1263 = vld [vmem:[#allocation2 + $0x49] sm:$0xff]
        %v1264 = vld [vmem:[#allocation2 + $0x51] sm:$0xff]
        %v1265 = vld [vmem:[#allocation2 + $0x59] sm:$0xff]
        %v1266 = vld [vmem:[#allocation2 + $0x61] sm:$0xff]
        %v1267 = vld [vmem:[#allocation2 + $0x69] sm:$0xff]
        %v1268 = vld [vmem:[#allocation2 + $0x71] sm:$0xff]
        %v1269 = vld [vmem:[#allocation2 + $0x79] sm:$0xff]
        %v1270 = vld [vmem:[%s1 + $0x20] sm:$0xff]
        %v1271 = vld [vmem:[%s1 + $0x28] sm:$0xff]
        %v1272 = vld [vmem:[%s1 + $0x30] sm:$0xff]
        %v1273 = vld [vmem:[%s1 + $0x38] sm:$0xff]
        %v1274 = vld [vmem:[%s1 + $0x40] sm:$0xff]
        %v1275 = vld [vmem:[%s1 + $0x48] sm:$0xff]
        %v1276 = vld [vmem:[%s1 + $0x50] sm:$0xff]
        %v1277 = vld [vmem:[%s1 + $0x58] sm:$0xff]
        %v1278 = vld [vmem:[%s1 + $0x60] sm:$0xff]
        %v1279 = vld [vmem:[%s1 + $0x68] sm:$0xff]
        %v1280 = vld [vmem:[%s1 + $0x70] sm:$0xff]
        %v1281 = vld [vmem:[%s1 + $0x78] sm:$0xff]
        %v1282 = vld [vmem:[%s1 + $0x80] sm:$0xff]
        %v1283 = vld [vmem:[%s1 + $0x88] sm:$0xff]
        %v1284 = vld [vmem:[%s1 + $0x90] sm:$0xff]
        %v1285 = vld [vmem:[%s1 + $0x98] sm:$0xff]
        %v1286 = vld [vmem:[%s1 + $0xa0] sm:$0xff]
        %v1287 = vld [vmem:[%s1 + $0xa8] sm:$0xff]
        %v1288 = vld [vmem:[%s1 + $0xb0] sm:$0xff]
        %v1289 = vld [vmem:[%s1 + $0xb8] sm:$0xff]
        %v1291 = vsel %vm612, %v1254, 0
        %v1294 = vsel %vm612, %v1255, 0
        %v1297 = vsel %vm612, %v1256, 0
        %v1300 = vsel %vm612, %v1257, 0
        %v1303 = vsel %vm612, %v1258, 0
        %v1306 = vsel %vm612, %v1259, 0
        %v1309 = vsel %vm612, %v1260, 0
        %v1312 = vsel %vm612, %v1261, 0
        %v1315 = vsel %vm612, %v1262, 0
        %v1318 = vsel %vm612, %v1263, 0
        %v1321 = vsel %vm612, %v1264, 0
        %v1324 = vsel %vm612, %v1265, 0
        %v1327 = vsel %vm612, %v1266, 0
        %v1330 = vsel %vm612, %v1267, 0
        %v1333 = vsel %vm612, %v1268, 0
        %v1336 = vsel %vm612, %v1269, 0
        %1338 = vmatprep.subr.mxu0 0.0
        %1339 = vmatpush1.msra.mxu0 %v1270
        %1340 = vmatprep.subr.mxu0 0.0
        %1341 = vmatpush1.msra.mxu0 %v1271
        %1342 = vmatprep.subr.mxu0 0.0
        %1343 = vmatpush1.msra.mxu0 %v1272
        %1344 = vmatprep.subr.mxu0 0.0
        %1345 = vmatpush1.msra.mxu0 %v1273
        %1346 = vmatprep.subr.mxu0 0.0
        %1347 = vmatpush1.msra.mxu0 %v1274
        %1348 = vmatprep.subr.mxu0 0.0
        %1349 = vmatpush1.msra.mxu0 %v1275
        %1350 = vmatprep.subr.mxu0 0.0
        %1351 = vmatpush1.msra.mxu0 %v1276
        %1352 = vmatprep.subr.mxu0 0.0
        %1353 = vmatpush1.msra.mxu0 %v1277
        %1354 = vmatprep.subr.mxu0 0.0
        %1355 = vmatpush1.msra.mxu0 %v1278
        %1356 = vmatprep.subr.mxu0 0.0
        %1357 = vmatpush1.msra.mxu0 %v1279
        %1358 = vmatprep.subr.mxu0 0.0
        %1359 = vmatpush1.msra.mxu0 %v1280
        %1360 = vmatprep.subr.mxu0 0.0
        %1361 = vmatpush1.msra.mxu0 %v1281
        %1362 = vmatprep.subr.mxu0 0.0
        %1363 = vmatpush1.msra.mxu0 %v1282
        %1364 = vmatprep.subr.mxu0 0.0
        %1365 = vmatpush1.msra.mxu0 %v1283
        %1366 = vmatprep.subr.mxu0 0.0
        %1367 = vmatpush1.msra.mxu0 %v1284
        %1368 = vmatprep.subr.mxu0 0.0
        %1369 = vmatpush1.msra.mxu0 %v1285
        %1370 = vmatprep.subr.mxu0 0.0
        %1371 = vmatpush1.msra.mxu0 %v1286
        %1372 = vmatprep.subr.mxu0 0.0
        %1373 = vmatpush1.msra.mxu0 %v1287
        %1374 = vmatprep.subr.mxu0 0.0
        %1375 = vmatpush1.msra.mxu0 %v1288
        %1376 = vmatprep.subr.mxu0 0.0
        %1377 = vmatpush1.msra.mxu0 %v1289
        %1378 = vmatprep.subr.mxu0 0.0
        %1379 = vmatpush1.msra.mxu0 0.0
        %1380 = vmatprep.subr.mxu0 0.0
        %1381 = vmatpush1.msra.mxu0 0.0
        %1382 = vmatprep.subr.mxu0 0.0
        %1383 = vmatpush1.msra.mxu0 0.0
        %1384 = vmatprep.subr.mxu0 0.0
        %1385 = vmatpush1.msra.mxu0 0.0
        %1386 = vmatprep.subr.mxu0 0.0
        %1387 = vmatpush1.msra.mxu0 0.0
        %1388 = vmatprep.subr.mxu0 0.0
        %1389 = vmatpush1.msra.mxu0 0.0
        %1390 = vmatprep.subr.mxu0 0.0
        %1391 = vmatpush1.msra.mxu0 0.0
        %1392 = vmatprep.subr.mxu0 0.0
        %1393 = vmatpush1.msra.mxu0 0.0
        %1394 = vmatprep.subr.mxu0 0.0
        %1395 = vmatpush1.msra.mxu0 0.0
        %1396 = vmatprep.subr.mxu0 0.0
        %1397 = vmatpush1.msra.mxu0 0.0
        %1398 = vmatprep.subr.mxu0 0.0
        %1399 = vmatpush1.msra.mxu0 0.0
        %1400 = vmatprep.subr.mxu0 0.0
        %1401 = vmatpush1.msra.mxu0 0.0
        %1402 = vmatprep.mubr.f32.mxu0 %v1291
        %1403 = vmatmul.mubr.f32.gmra.mrb[0].mxu0 %v1238
        %v1404 = vpop.f32.mrb[0].mxu0
        %v1405 = vadd.f32 0.0, %v1404
        %v1406 = vpop.f32.mrb[0].mxu0
        %1407 = vmatprep.mubr.f32.mxu0 %v1294
        %1408 = vmatmul.mubr.f32.gmra.mrb[0].mxu0 %v1239
        %v1409 = vpop.f32.mrb[0].mxu0
        %v1410 = vadd.f32 0.0, %v1409
        %v1411 = vpop.f32.mrb[0].mxu0
        %1412 = vmatprep.mubr.f32.mxu0 %v1297
        %1413 = vmatmul.mubr.f32.gmra.mrb[0].mxu0 %v1240
        %v1414 = vpop.f32.mrb[0].mxu0
        %v1415 = vadd.f32 0.0, %v1414
        %v1416 = vpop.f32.mrb[0].mxu0
        %1417 = vmatprep.mubr.f32.mxu0 %v1300
        %1418 = vmatmul.mubr.f32.gmra.mrb[0].mxu0 %v1241
        %v1419 = vpop.f32.mrb[0].mxu0
        %v1420 = vadd.f32 0.0, %v1419
        %v1421 = vpop.f32.mrb[0].mxu0
        %1422 = vmatprep.mubr.f32.mxu0 %v1303
        %1423 = vmatmul.mubr.f32.gmra.mrb[0].mxu0 %v1242
        %v1424 = vpop.f32.mrb[0].mxu0
        %v1425 = vadd.f32 0.0, %v1424
        %v1426 = vpop.f32.mrb[0].mxu0
        %1427 = vmatprep.mubr.f32.mxu0 %v1306
        %1428 = vmatmul.mubr.f32.gmra.mrb[0].mxu0 %v1243
        %v1429 = vpop.f32.mrb[0].mxu0
        %v1430 = vadd.f32 0.0, %v1429
        %v1431 = vpop.f32.mrb[0].mxu0
        %1432 = vmatprep.mubr.f32.mxu0 %v1309
        %1433 = vmatmul.mubr.f32.gmra.mrb[0].mxu0 %v1244
        %v1434 = vpop.f32.mrb[0].mxu0
        %v1435 = vadd.f32 0.0, %v1434
        %v1436 = vpop.f32.mrb[0].mxu0
        %1437 = vmatprep.mubr.f32.mxu0 %v1312
        %1438 = vmatmul.mubr.f32.gmra.mrb[0].mxu0 %v1245
        %v1439 = vpop.f32.mrb[0].mxu0
        %v1440 = vadd.f32 0.0, %v1439
        %v1441 = vpop.f32.mrb[0].mxu0
        %1442 = vmatprep.mubr.f32.mxu0 %v1315
        %1443 = vmatmul.mubr.f32.gmra.mrb[0].mxu0 %v1246
        %v1444 = vpop.f32.mrb[0].mxu0
        %v1445 = vadd.f32 0.0, %v1444
        %v1446 = vpop.f32.mrb[0].mxu0
        %1447 = vmatprep.mubr.f32.mxu0 %v1318
        %1448 = vmatmul.mubr.f32.gmra.mrb[0].mxu0 %v1247
        %v1449 = vpop.f32.mrb[0].mxu0
        %v1450 = vadd.f32 0.0, %v1449
        %v1451 = vpop.f32.mrb[0].mxu0
        %1452 = vmatprep.mubr.f32.mxu0 %v1321
        %1453 = vmatmul.mubr.f32.gmra.mrb[0].mxu0 %v1248
        %v1454 = vpop.f32.mrb[0].mxu0
        %v1455 = vadd.f32 0.0, %v1454
        %v1456 = vpop.f32.mrb[0].mxu0
        %1457 = vmatprep.mubr.f32.mxu0 %v1324
        %1458 = vmatmul.mubr.f32.gmra.mrb[0].mxu0 %v1249
        %v1459 = vpop.f32.mrb[0].mxu0
        %v1460 = vadd.f32 0.0, %v1459
        %v1461 = vpop.f32.mrb[0].mxu0
        %1462 = vmatprep.mubr.f32.mxu0 %v1327
        %1463 = vmatmul.mubr.f32.gmra.mrb[0].mxu0 %v1250
        %v1464 = vpop.f32.mrb[0].mxu0
        %v1465 = vadd.f32 0.0, %v1464
        %v1466 = vpop.f32.mrb[0].mxu0
        %1467 = vmatprep.mubr.f32.mxu0 %v1330
        %1468 = vmatmul.mubr.f32.gmra.mrb[0].mxu0 %v1251
        %v1469 = vpop.f32.mrb[0].mxu0
        %v1470 = vadd.f32 0.0, %v1469
        %v1471 = vpop.f32.mrb[0].mxu0
        %1472 = vmatprep.mubr.f32.mxu0 %v1333
        %1473 = vmatmul.mubr.f32.gmra.mrb[0].mxu0 %v1252
        %v1474 = vpop.f32.mrb[0].mxu0
        %v1475 = vadd.f32 0.0, %v1474
        %v1476 = vpop.f32.mrb[0].mxu0
        %1477 = vmatprep.mubr.f32.mxu0 %v1336
        %1478 = vmatmul.mubr.f32.gmra.mrb[0].mxu0 %v1253
        %v1479 = vpop.f32.mrb[0].mxu0
        %v1480 = vadd.f32 0.0, %v1479
        %v1481 = vpop.f32.mrb[0].mxu0
        %1482 = vdwg.mxu0
        %v1483 = vmul.f32 %v1405, %v1405
        %v1484 = vmul.f32 %v1410, %v1410
        %v1485 = vmul.f32 %v1415, %v1415
        %v1486 = vmul.f32 %v1420, %v1420
        %v1487 = vmul.f32 %v1425, %v1425
        %v1488 = vmul.f32 %v1430, %v1430
        %v1489 = vmul.f32 %v1435, %v1435
        %v1490 = vmul.f32 %v1440, %v1440
        %v1491 = vmul.f32 %v1445, %v1445
        %v1492 = vmul.f32 %v1450, %v1450
        %v1493 = vmul.f32 %v1455, %v1455
        %v1494 = vmul.f32 %v1460, %v1460
        %v1495 = vmul.f32 %v1465, %v1465
        %v1496 = vmul.f32 %v1470, %v1470
        %v1497 = vmul.f32 %v1475, %v1475
        %v1498 = vmul.f32 %v1480, %v1480
        %v1499 = vmul.f32 %v1405, %v1483
        %v1500 = vmul.f32 %v1410, %v1484
        %v1501 = vmul.f32 %v1415, %v1485
        %v1502 = vmul.f32 %v1420, %v1486
        %v1503 = vmul.f32 %v1425, %v1487
        %v1504 = vmul.f32 %v1430, %v1488
        %v1505 = vmul.f32 %v1435, %v1489
        %v1506 = vmul.f32 %v1440, %v1490
        %v1507 = vmul.f32 %v1445, %v1491
        %v1508 = vmul.f32 %v1450, %v1492
        %v1509 = vmul.f32 %v1455, %v1493
        %v1510 = vmul.f32 %v1460, %v1494
        %v1511 = vmul.f32 %v1465, %v1495
        %v1512 = vmul.f32 %v1470, %v1496
        %v1513 = vmul.f32 %v1475, %v1497
        %v1514 = vmul.f32 %v1480, %v1498
        %v1515 = vmul.f32 %v1499, 0.044715
        %v1516 = vmul.f32 %v1500, 0.044715
        %v1517 = vmul.f32 %v1501, 0.044715
        %v1518 = vmul.f32 %v1502, 0.044715
        %v1519 = vmul.f32 %v1503, 0.044715
        %v1520 = vmul.f32 %v1504, 0.044715
        %v1521 = vmul.f32 %v1505, 0.044715
        %v1522 = vmul.f32 %v1506, 0.044715
        %v1523 = vmul.f32 %v1507, 0.044715
        %v1524 = vmul.f32 %v1508, 0.044715
        %v1525 = vmul.f32 %v1509, 0.044715
        %v1526 = vmul.f32 %v1510, 0.044715
        %v1527 = vmul.f32 %v1511, 0.044715
        %v1528 = vmul.f32 %v1512, 0.044715
        %v1529 = vmul.f32 %v1513, 0.044715
        %v1530 = vmul.f32 %v1514, 0.044715
        %v1531 = vadd.f32 %v1405, %v1515
        %v1532 = vadd.f32 %v1410, %v1516
        %v1533 = vadd.f32 %v1415, %v1517
        %v1534 = vadd.f32 %v1420, %v1518
        %v1535 = vadd.f32 %v1425, %v1519
        %v1536 = vadd.f32 %v1430, %v1520
        %v1537 = vadd.f32 %v1435, %v1521
        %v1538 = vadd.f32 %v1440, %v1522
        %v1539 = vadd.f32 %v1445, %v1523
        %v1540 = vadd.f32 %v1450, %v1524
        %v1541 = vadd.f32 %v1455, %v1525
        %v1542 = vadd.f32 %v1460, %v1526
        %v1543 = vadd.f32 %v1465, %v1527
        %v1544 = vadd.f32 %v1470, %v1528
        %v1545 = vadd.f32 %v1475, %v1529
        %v1546 = vadd.f32 %v1480, %v1530
        %v1547 = vmul.f32 %v1531, 0.7978846
        %v1548 = vmul.f32 %v1532, 0.7978846
        %v1549 = vmul.f32 %v1533, 0.7978846
        %v1550 = vmul.f32 %v1534, 0.7978846
        %v1551 = vmul.f32 %v1535, 0.7978846
        %v1552 = vmul.f32 %v1536, 0.7978846
        %v1553 = vmul.f32 %v1537, 0.7978846
        %v1554 = vmul.f32 %v1538, 0.7978846
        %v1555 = vmul.f32 %v1539, 0.7978846
        %v1556 = vmul.f32 %v1540, 0.7978846
        %v1557 = vmul.f32 %v1541, 0.7978846
        %v1558 = vmul.f32 %v1542, 0.7978846
        %v1559 = vmul.f32 %v1543, 0.7978846
        %v1560 = vmul.f32 %v1544, 0.7978846
        %v1561 = vmul.f32 %v1545, 0.7978846
        %v1562 = vmul.f32 %v1546, 0.7978846
        %v1563 = vtanh.pop %v1547
        %v1564 = vtanh.pop %v1548
        %v1565 = vtanh.pop %v1549
        %v1566 = vtanh.pop %v1550
        %v1567 = vtanh.pop %v1551
        %v1568 = vtanh.pop %v1552
        %v1569 = vtanh.pop %v1553
        %v1570 = vtanh.pop %v1554
        %v1571 = vtanh.pop %v1555
        %v1572 = vtanh.pop %v1556
        %v1573 = vtanh.pop %v1557
        %v1574 = vtanh.pop %v1558
        %v1575 = vtanh.pop %v1559
        %v1576 = vtanh.pop %v1560
        %v1577 = vtanh.pop %v1561
        %v1578 = vtanh.pop %v1562
        %v1579 = vadd.f32 %v1563, 1.0
        %v1580 = vadd.f32 %v1564, 1.0
        %v1581 = vadd.f32 %v1565, 1.0
        %v1582 = vadd.f32 %v1566, 1.0
        %v1583 = vadd.f32 %v1567, 1.0
        %v1584 = vadd.f32 %v1568, 1.0
        %v1585 = vadd.f32 %v1569, 1.0
        %v1586 = vadd.f32 %v1570, 1.0
        %v1587 = vadd.f32 %v1571, 1.0
        %v1588 = vadd.f32 %v1572, 1.0
        %v1589 = vadd.f32 %v1573, 1.0
        %v1590 = vadd.f32 %v1574, 1.0
        %v1591 = vadd.f32 %v1575, 1.0
        %v1592 = vadd.f32 %v1576, 1.0
        %v1593 = vadd.f32 %v1577, 1.0
        %v1594 = vadd.f32 %v1578, 1.0
        %v1595 = vmul.f32 %v1579, 0.5
        %v1596 = vmul.f32 %v1580, 0.5
        %v1597 = vmul.f32 %v1581, 0.5
        %v1598 = vmul.f32 %v1582, 0.5
        %v1599 = vmul.f32 %v1583, 0.5
        %v1600 = vmul.f32 %v1584, 0.5
        %v1601 = vmul.f32 %v1585, 0.5
        %v1602 = vmul.f32 %v1586, 0.5
        %v1603 = vmul.f32 %v1587, 0.5
        %v1604 = vmul.f32 %v1588, 0.5
        %v1605 = vmul.f32 %v1589, 0.5
        %v1606 = vmul.f32 %v1590, 0.5
        %v1607 = vmul.f32 %v1591, 0.5
        %v1608 = vmul.f32 %v1592, 0.5
        %v1609 = vmul.f32 %v1593, 0.5
        %v1610 = vmul.f32 %v1594, 0.5
        %v1611 = vmul.f32 %v1405, %v1595
        %v1612 = vmul.f32 %v1410, %v1596
        %v1613 = vmul.f32 %v1415, %v1597
        %v1614 = vmul.f32 %v1420, %v1598
        %v1615 = vmul.f32 %v1425, %v1599
        %v1616 = vmul.f32 %v1430, %v1600
        %v1617 = vmul.f32 %v1435, %v1601
        %v1618 = vmul.f32 %v1440, %v1602
        %v1619 = vmul.f32 %v1445, %v1603
        %v1620 = vmul.f32 %v1450, %v1604
        %v1621 = vmul.f32 %v1455, %v1605
        %v1622 = vmul.f32 %v1460, %v1606
        %v1623 = vmul.f32 %v1465, %v1607
        %v1624 = vmul.f32 %v1470, %v1608
        %v1625 = vmul.f32 %v1475, %v1609
        %v1626 = vmul.f32 %v1480, %v1610
        %1627 = vst.msk [vmem:[#allocation3] sm:$0xff] %vm976, %v1611
        %1628 = vst.msk [vmem:[#allocation3 + $0x8] sm:$0xff] %vm976, %v1612
        %1629 = vst.msk [vmem:[#allocation3 + $0x10] sm:$0xff] %vm976, %v1613
        %1630 = vst.msk [vmem:[#allocation3 + $0x18] sm:$0xff] %vm976, %v1614
        %1631 = vst.msk [vmem:[#allocation3 + $0x20] sm:$0xff] %vm976, %v1615
        %1632 = vst.msk [vmem:[#allocation3 + $0x28] sm:$0xff] %vm976, %v1616
        %1633 = vst.msk [vmem:[#allocation3 + $0x30] sm:$0xff] %vm976, %v1617
        %1634 = vst.msk [vmem:[#allocation3 + $0x38] sm:$0xff] %vm976, %v1618
        %1635 = vst.msk [vmem:[#allocation3 + $0x40] sm:$0xff] %vm976, %v1619
        %1636 = vst.msk [vmem:[#allocation3 + $0x48] sm:$0xff] %vm976, %v1620
        %1637 = vst.msk [vmem:[#allocation3 + $0x50] sm:$0xff] %vm976, %v1621
        %1638 = vst.msk [vmem:[#allocation3 + $0x58] sm:$0xff] %vm976, %v1622
        %1639 = vst.msk [vmem:[#allocation3 + $0x60] sm:$0xff] %vm976, %v1623
        %1640 = vst.msk [vmem:[#allocation3 + $0x68] sm:$0xff] %vm976, %v1624
        %1641 = vst.msk [vmem:[#allocation3 + $0x70] sm:$0xff] %vm976, %v1625
        %1642 = vst.msk [vmem:[#allocation3 + $0x78] sm:$0xff] %vm976, %v1626
        %v1643 = vld [vmem:[#allocation3] sm:$0xff]
        %v1644 = vld [vmem:[#allocation3 + $0x8] sm:$0xff]
        %v1645 = vld [vmem:[#allocation3 + $0x10] sm:$0xff]
        %v1646 = vld [vmem:[#allocation3 + $0x18] sm:$0xff]
        %v1647 = vld [vmem:[#allocation3 + $0x20] sm:$0xff]
        %v1648 = vld [vmem:[#allocation3 + $0x28] sm:$0xff]
        %v1649 = vld [vmem:[#allocation3 + $0x30] sm:$0xff]
        %v1650 = vld [vmem:[#allocation3 + $0x38] sm:$0xff]
        %v1651 = vld [vmem:[#allocation3 + $0x40] sm:$0xff]
        %v1652 = vld [vmem:[#allocation3 + $0x48] sm:$0xff]
        %v1653 = vld [vmem:[#allocation3 + $0x50] sm:$0xff]
        %v1654 = vld [vmem:[#allocation3 + $0x58] sm:$0xff]
        %v1655 = vld [vmem:[#allocation3 + $0x60] sm:$0xff]
        %v1656 = vld [vmem:[#allocation3 + $0x68] sm:$0xff]
        %v1657 = vld [vmem:[#allocation3 + $0x70] sm:$0xff]
        %v1658 = vld [vmem:[#allocation3 + $0x78] sm:$0x7f]
        %v1659 = vld [vmem:[#allocation3 + $0x1] sm:$0xff]
        %v1660 = vld [vmem:[#allocation3 + $0x9] sm:$0xff]
        %v1661 = vld [vmem:[#allocation3 + $0x11] sm:$0xff]
        %v1662 = vld [vmem:[#allocation3 + $0x19] sm:$0xff]
        %v1663 = vld [vmem:[#allocation3 + $0x21] sm:$0xff]
        %v1664 = vld [vmem:[#allocation3 + $0x29] sm:$0xff]
        %v1665 = vld [vmem:[#allocation3 + $0x31] sm:$0xff]
        %v1666 = vld [vmem:[#allocation3 + $0x39] sm:$0xff]
        %v1667 = vld [vmem:[#allocation3 + $0x41] sm:$0xff]
        %v1668 = vld [vmem:[#allocation3 + $0x49] sm:$0xff]
        %v1669 = vld [vmem:[#allocation3 + $0x51] sm:$0xff]
        %v1670 = vld [vmem:[#allocation3 + $0x59] sm:$0xff]
        %v1671 = vld [vmem:[#allocation3 + $0x61] sm:$0xff]
        %v1672 = vld [vmem:[#allocation3 + $0x69] sm:$0xff]
        %v1673 = vld [vmem:[#allocation3 + $0x71] sm:$0xff]
        %v1674 = vld [vmem:[#allocation3 + $0x79] sm:$0x7f]
        %1691 = vrot.lane.b32.xlu0 %v1659, 64
        %v1692 = vpop.permute.xlu0 %1691
        %1693 = vrot.lane.b32.xlu0 %v1660, 64
        %v1694 = vpop.permute.xlu0 %1693
        %1695 = vrot.lane.b32.xlu0 %v1661, 64
        %v1696 = vpop.permute.xlu0 %1695
        %1697 = vrot.lane.b32.xlu0 %v1662, 64
        %v1698 = vpop.permute.xlu0 %1697
        %1699 = vrot.lane.b32.xlu0 %v1663, 64
        %v1700 = vpop.permute.xlu0 %1699
        %1701 = vrot.lane.b32.xlu0 %v1664, 64
        %v1702 = vpop.permute.xlu0 %1701
        %1703 = vrot.lane.b32.xlu0 %v1665, 64
        %v1704 = vpop.permute.xlu0 %1703
        %1705 = vrot.lane.b32.xlu0 %v1666, 64
        %v1706 = vpop.permute.xlu0 %1705
        %1707 = vrot.lane.b32.xlu0 %v1667, 64
        %v1708 = vpop.permute.xlu0 %1707
        %1709 = vrot.lane.b32.xlu0 %v1668, 64
        %v1710 = vpop.permute.xlu0 %1709
        %1711 = vrot.lane.b32.xlu0 %v1669, 64
        %v1712 = vpop.permute.xlu0 %1711
        %1713 = vrot.lane.b32.xlu0 %v1670, 64
        %v1714 = vpop.permute.xlu0 %1713
        %1715 = vrot.lane.b32.xlu0 %v1671, 64
        %v1716 = vpop.permute.xlu0 %1715
        %1717 = vrot.lane.b32.xlu0 %v1672, 64
        %v1718 = vpop.permute.xlu0 %1717
        %1719 = vrot.lane.b32.xlu0 %v1673, 64
        %v1720 = vpop.permute.xlu0 %1719
        %1721 = vrot.lane.b32.xlu0 %v1674, 64
        %v1722 = vpop.permute.xlu0 %1721
        %v1739 = vsel %vm976, %v1643, %v1692
        %v1740 = vsel %vm976, %v1644, %v1694
        %v1741 = vsel %vm976, %v1645, %v1696
        %v1742 = vsel %vm976, %v1646, %v1698
        %v1743 = vsel %vm976, %v1647, %v1700
        %v1744 = vsel %vm976, %v1648, %v1702
        %v1745 = vsel %vm976, %v1649, %v1704
        %v1746 = vsel %vm976, %v1650, %v1706
        %v1747 = vsel %vm976, %v1651, %v1708
        %v1748 = vsel %vm976, %v1652, %v1710
        %v1749 = vsel %vm976, %v1653, %v1712
        %v1750 = vsel %vm976, %v1654, %v1714
        %v1751 = vsel %vm976, %v1655, %v1716
        %v1752 = vsel %vm976, %v1656, %v1718
        %v1753 = vsel %vm976, %v1657, %v1720
        %v1754 = vsel %vm976, %v1658, %v1722
        %v1755 = vld [vmem:[%s1 + $0xc0] sm:$0xff]
        %v1756 = vld [vmem:[%s1 + $0xc8] sm:$0xff]
        %v1757 = vld [vmem:[%s1 + $0xd0] sm:$0xff]
        %v1758 = vld [vmem:[%s1 + $0xd8] sm:$0xff]
        %v1759 = vld [vmem:[%s1 + $0xe0] sm:$0xff]
        %v1760 = vld [vmem:[%s1 + $0xe8] sm:$0xff]
        %v1761 = vld [vmem:[%s1 + $0xf0] sm:$0xff]
        %v1762 = vld [vmem:[%s1 + $0xf8] sm:$0xff]
        %v1763 = vld [vmem:[%s1 + $0x100] sm:$0xff]
        %v1764 = vld [vmem:[%s1 + $0x108] sm:$0xff]
        %v1765 = vld [vmem:[%s1 + $0x110] sm:$0xff]
        %v1766 = vld [vmem:[%s1 + $0x118] sm:$0xff]
        %v1768 = vsel %vm978, %v1739, 0
        %v1771 = vsel %vm978, %v1740, 0
        %v1774 = vsel %vm978, %v1741, 0
        %v1777 = vsel %vm978, %v1742, 0
        %v1780 = vsel %vm978, %v1743, 0
        %v1783 = vsel %vm978, %v1744, 0
        %v1786 = vsel %vm978, %v1745, 0
        %v1789 = vsel %vm978, %v1746, 0
        %v1792 = vsel %vm978, %v1747, 0
        %v1795 = vsel %vm978, %v1748, 0
        %v1798 = vsel %vm978, %v1749, 0
        %v1801 = vsel %vm978, %v1750, 0
        %v1804 = vsel %vm978, %v1751, 0
        %v1807 = vsel %vm978, %v1752, 0
        %v1810 = vsel %vm978, %v1753, 0
        %v1813 = vsel %vm978, %v1754, 0
        %1815 = vmatprep.subr.mxu0 0.0
        %1816 = vmatpush1.msra.mxu0 %v1755
        %1817 = vmatprep.subr.mxu0 0.0
        %1818 = vmatpush1.msra.mxu0 %v1756
        %1819 = vmatprep.subr.mxu0 0.0
        %1820 = vmatpush1.msra.mxu0 %v1757
        %1821 = vmatprep.subr.mxu0 0.0
        %1822 = vmatpush1.msra.mxu0 %v1758
        %1823 = vmatprep.subr.mxu0 0.0
        %1824 = vmatpush1.msra.mxu0 %v1759
        %1825 = vmatprep.subr.mxu0 0.0
        %1826 = vmatpush1.msra.mxu0 %v1760
        %1827 = vmatprep.subr.mxu0 0.0
        %1828 = vmatpush1.msra.mxu0 %v1761
        %1829 = vmatprep.subr.mxu0 0.0
        %1830 = vmatpush1.msra.mxu0 %v1762
        %1831 = vmatprep.subr.mxu0 0.0
        %1832 = vmatpush1.msra.mxu0 %v1763
        %1833 = vmatprep.subr.mxu0 0.0
        %1834 = vmatpush1.msra.mxu0 %v1764
        %1835 = vmatprep.subr.mxu0 0.0
        %1836 = vmatpush1.msra.mxu0 %v1765
        %1837 = vmatprep.subr.mxu0 0.0
        %1838 = vmatpush1.msra.mxu0 %v1766
        %1839 = vmatprep.subr.mxu0 0.0
        %1840 = vmatpush1.msra.mxu0 0.0
        %1841 = vmatprep.subr.mxu0 0.0
        %1842 = vmatpush1.msra.mxu0 0.0
        %1843 = vmatprep.subr.mxu0 0.0
        %1844 = vmatpush1.msra.mxu0 0.0
        %1845 = vmatprep.subr.mxu0 0.0
        %1846 = vmatpush1.msra.mxu0 0.0
        %1847 = vmatprep.subr.mxu0 0.0
        %1848 = vmatpush1.msra.mxu0 0.0
        %1849 = vmatprep.subr.mxu0 0.0
        %1850 = vmatpush1.msra.mxu0 0.0
        %1851 = vmatprep.subr.mxu0 0.0
        %1852 = vmatpush1.msra.mxu0 0.0
        %1853 = vmatprep.subr.mxu0 0.0
        %1854 = vmatpush1.msra.mxu0 0.0
        %1855 = vmatprep.subr.mxu0 0.0
        %1856 = vmatpush1.msra.mxu0 0.0
        %1857 = vmatprep.subr.mxu0 0.0
        %1858 = vmatpush1.msra.mxu0 0.0
        %1859 = vmatprep.subr.mxu0 0.0
        %1860 = vmatpush1.msra.mxu0 0.0
        %1861 = vmatprep.subr.mxu0 0.0
        %1862 = vmatpush1.msra.mxu0 0.0
        %1863 = vmatprep.subr.mxu0 0.0
        %1864 = vmatpush1.msra.mxu0 0.0
        %1865 = vmatprep.subr.mxu0 0.0
        %1866 = vmatpush1.msra.mxu0 0.0
        %1867 = vmatprep.subr.mxu0 0.0
        %1868 = vmatpush1.msra.mxu0 0.0
        %1869 = vmatprep.subr.mxu0 0.0
        %1870 = vmatpush1.msra.mxu0 0.0
        %1871 = vmatprep.subr.mxu0 0.0
        %1872 = vmatpush1.msra.mxu0 0.0
        %1873 = vmatprep.subr.mxu0 0.0
        %1874 = vmatpush1.msra.mxu0 0.0
        %1875 = vmatprep.subr.mxu0 0.0
        %1876 = vmatpush1.msra.mxu0 0.0
        %1877 = vmatprep.subr.mxu0 0.0
        %1878 = vmatpush1.msra.mxu0 0.0
        %1879 = vmatprep.mubr.f32.mxu0 0.0
        %1880 = vmatmul.mubr.f32.gmra.mrb[0].mxu0 %v1768
        %v1881 = vpop.f32.mrb[0].mxu0
        %v1882 = vadd.f32 0.0, %v1881
        %v1883 = vpop.f32.mrb[0].mxu0
        %1884 = vmatprep.mubr.f32.mxu0 0.0
        %1885 = vmatmul.mubr.f32.gmra.mrb[0].mxu0 %v1771
        %v1886 = vpop.f32.mrb[0].mxu0
        %v1887 = vadd.f32 0.0, %v1886
        %v1888 = vpop.f32.mrb[0].mxu0
        %1889 = vmatprep.mubr.f32.mxu0 0.0
        %1890 = vmatmul.mubr.f32.gmra.mrb[0].mxu0 %v1774
        %v1891 = vpop.f32.mrb[0].mxu0
        %v1892 = vadd.f32 0.0, %v1891
        %v1893 = vpop.f32.mrb[0].mxu0
        %1894 = vmatprep.mubr.f32.mxu0 0.0
        %1895 = vmatmul.mubr.f32.gmra.mrb[0].mxu0 %v1777
        %v1896 = vpop.f32.mrb[0].mxu0
        %v1897 = vadd.f32 0.0, %v1896
        %v1898 = vpop.f32.mrb[0].mxu0
        %1899 = vmatprep.mubr.f32.mxu0 0.0
        %1900 = vmatmul.mubr.f32.gmra.mrb[0].mxu0 %v1780
        %v1901 = vpop.f32.mrb[0].mxu0
        %v1902 = vadd.f32 0.0, %v1901
        %v1903 = vpop.f32.mrb[0].mxu0
        %1904 = vmatprep.mubr.f32.mxu0 0.0
        %1905 = vmatmul.mubr.f32.gmra.mrb[0].mxu0 %v1783
        %v1906 = vpop.f32.mrb[0].mxu0
        %v1907 = vadd.f32 0.0, %v1906
        %v1908 = vpop.f32.mrb[0].mxu0
        %1909 = vmatprep.mubr.f32.mxu0 0.0
        %1910 = vmatmul.mubr.f32.gmra.mrb[0].mxu0 %v1786
        %v1911 = vpop.f32.mrb[0].mxu0
        %v1912 = vadd.f32 0.0, %v1911
        %v1913 = vpop.f32.mrb[0].mxu0
        %1914 = vmatprep.mubr.f32.mxu0 0.0
        %1915 = vmatmul.mubr.f32.gmra.mrb[0].mxu0 %v1789
        %v1916 = vpop.f32.mrb[0].mxu0
        %v1917 = vadd.f32 0.0, %v1916
        %v1918 = vpop.f32.mrb[0].mxu0
        %1919 = vmatprep.mubr.f32.mxu0 0.0
        %1920 = vmatmul.mubr.f32.gmra.mrb[0].mxu0 %v1792
        %v1921 = vpop.f32.mrb[0].mxu0
        %v1922 = vadd.f32 0.0, %v1921
        %v1923 = vpop.f32.mrb[0].mxu0
        %1924 = vmatprep.mubr.f32.mxu0 0.0
        %1925 = vmatmul.mubr.f32.gmra.mrb[0].mxu0 %v1795
        %v1926 = vpop.f32.mrb[0].mxu0
        %v1927 = vadd.f32 0.0, %v1926
        %v1928 = vpop.f32.mrb[0].mxu0
        %1929 = vmatprep.mubr.f32.mxu0 0.0
        %1930 = vmatmul.mubr.f32.gmra.mrb[0].mxu0 %v1798
        %v1931 = vpop.f32.mrb[0].mxu0
        %v1932 = vadd.f32 0.0, %v1931
        %v1933 = vpop.f32.mrb[0].mxu0
        %1934 = vmatprep.mubr.f32.mxu0 0.0
        %1935 = vmatmul.mubr.f32.gmra.mrb[0].mxu0 %v1801
        %v1936 = vpop.f32.mrb[0].mxu0
        %v1937 = vadd.f32 0.0, %v1936
        %v1938 = vpop.f32.mrb[0].mxu0
        %1939 = vmatprep.mubr.f32.mxu0 0.0
        %1940 = vmatmul.mubr.f32.gmra.mrb[0].mxu0 %v1804
        %v1941 = vpop.f32.mrb[0].mxu0
        %v1942 = vadd.f32 0.0, %v1941
        %v1943 = vpop.f32.mrb[0].mxu0
        %1944 = vmatprep.mubr.f32.mxu0 0.0
        %1945 = vmatmul.mubr.f32.gmra.mrb[0].mxu0 %v1807
        %v1946 = vpop.f32.mrb[0].mxu0
        %v1947 = vadd.f32 0.0, %v1946
        %v1948 = vpop.f32.mrb[0].mxu0
        %1949 = vmatprep.mubr.f32.mxu0 0.0
        %1950 = vmatmul.mubr.f32.gmra.mrb[0].mxu0 %v1810
        %v1951 = vpop.f32.mrb[0].mxu0
        %v1952 = vadd.f32 0.0, %v1951
        %v1953 = vpop.f32.mrb[0].mxu0
        %1954 = vmatprep.mubr.f32.mxu0 0.0
        %1955 = vmatmul.mubr.f32.gmra.mrb[0].mxu0 %v1813
        %v1956 = vpop.f32.mrb[0].mxu0
        %v1957 = vadd.f32 0.0, %v1956
        %v1958 = vpop.f32.mrb[0].mxu0
        %1959 = vdwg.mxu0
        %v1960 = vmul.f32 %v1882, %v1882
        %v1961 = vmul.f32 %v1887, %v1887
        %v1962 = vmul.f32 %v1892, %v1892
        %v1963 = vmul.f32 %v1897, %v1897
        %v1964 = vmul.f32 %v1902, %v1902
        %v1965 = vmul.f32 %v1907, %v1907
        %v1966 = vmul.f32 %v1912, %v1912
        %v1967 = vmul.f32 %v1917, %v1917
        %v1968 = vmul.f32 %v1922, %v1922
        %v1969 = vmul.f32 %v1927, %v1927
        %v1970 = vmul.f32 %v1932, %v1932
        %v1971 = vmul.f32 %v1937, %v1937
        %v1972 = vmul.f32 %v1942, %v1942
        %v1973 = vmul.f32 %v1947, %v1947
        %v1974 = vmul.f32 %v1952, %v1952
        %v1975 = vmul.f32 %v1957, %v1957
        %v1976 = vmul.f32 %v1882, %v1960
        %v1977 = vmul.f32 %v1887, %v1961
        %v1978 = vmul.f32 %v1892, %v1962
        %v1979 = vmul.f32 %v1897, %v1963
        %v1980 = vmul.f32 %v1902, %v1964
        %v1981 = vmul.f32 %v1907, %v1965
        %v1982 = vmul.f32 %v1912, %v1966
        %v1983 = vmul.f32 %v1917, %v1967
        %v1984 = vmul.f32 %v1922, %v1968
        %v1985 = vmul.f32 %v1927, %v1969
        %v1986 = vmul.f32 %v1932, %v1970
        %v1987 = vmul.f32 %v1937, %v1971
        %v1988 = vmul.f32 %v1942, %v1972
        %v1989 = vmul.f32 %v1947, %v1973
        %v1990 = vmul.f32 %v1952, %v1974
        %v1991 = vmul.f32 %v1957, %v1975
        %v1992 = vmul.f32 %v1976, 0.044715
        %v1993 = vmul.f32 %v1977, 0.044715
        %v1994 = vmul.f32 %v1978, 0.044715
        %v1995 = vmul.f32 %v1979, 0.044715
        %v1996 = vmul.f32 %v1980, 0.044715
        %v1997 = vmul.f32 %v1981, 0.044715
        %v1998 = vmul.f32 %v1982, 0.044715
        %v1999 = vmul.f32 %v1983, 0.044715
        %v2000 = vmul.f32 %v1984, 0.044715
        %v2001 = vmul.f32 %v1985, 0.044715
        %v2002 = vmul.f32 %v1986, 0.044715
        %v2003 = vmul.f32 %v1987, 0.044715
        %v2004 = vmul.f32 %v1988, 0.044715
        %v2005 = vmul.f32 %v1989, 0.044715
        %v2006 = vmul.f32 %v1990, 0.044715
        %v2007 = vmul.f32 %v1991, 0.044715
        %v2008 = vadd.f32 %v1882, %v1992
        %v2009 = vadd.f32 %v1887, %v1993
        %v2010 = vadd.f32 %v1892, %v1994
        %v2011 = vadd.f32 %v1897, %v1995
        %v2012 = vadd.f32 %v1902, %v1996
        %v2013 = vadd.f32 %v1907, %v1997
        %v2014 = vadd.f32 %v1912, %v1998
        %v2015 = vadd.f32 %v1917, %v1999
        %v2016 = vadd.f32 %v1922, %v2000
        %v2017 = vadd.f32 %v1927, %v2001
        %v2018 = vadd.f32 %v1932, %v2002
        %v2019 = vadd.f32 %v1937, %v2003
        %v2020 = vadd.f32 %v1942, %v2004
        %v2021 = vadd.f32 %v1947, %v2005
        %v2022 = vadd.f32 %v1952, %v2006
        %v2023 = vadd.f32 %v1957, %v2007
        %v2024 = vmul.f32 %v2008, 0.7978846
        %v2025 = vmul.f32 %v2009, 0.7978846
        %v2026 = vmul.f32 %v2010, 0.7978846
        %v2027 = vmul.f32 %v2011, 0.7978846
        %v2028 = vmul.f32 %v2012, 0.7978846
        %v2029 = vmul.f32 %v2013, 0.7978846
        %v2030 = vmul.f32 %v2014, 0.7978846
        %v2031 = vmul.f32 %v2015, 0.7978846
        %v2032 = vmul.f32 %v2016, 0.7978846
        %v2033 = vmul.f32 %v2017, 0.7978846
        %v2034 = vmul.f32 %v2018, 0.7978846
        %v2035 = vmul.f32 %v2019, 0.7978846
        %v2036 = vmul.f32 %v2020, 0.7978846
        %v2037 = vmul.f32 %v2021, 0.7978846
        %v2038 = vmul.f32 %v2022, 0.7978846
        %v2039 = vmul.f32 %v2023, 0.7978846
        %v2040 = vtanh.pop %v2024
        %v2041 = vtanh.pop %v2025
        %v2042 = vtanh.pop %v2026
        %v2043 = vtanh.pop %v2027
        %v2044 = vtanh.pop %v2028
        %v2045 = vtanh.pop %v2029
        %v2046 = vtanh.pop %v2030
        %v2047 = vtanh.pop %v2031
        %v2048 = vtanh.pop %v2032
        %v2049 = vtanh.pop %v2033
        %v2050 = vtanh.pop %v2034
        %v2051 = vtanh.pop %v2035
        %v2052 = vtanh.pop %v2036
        %v2053 = vtanh.pop %v2037
        %v2054 = vtanh.pop %v2038
        %v2055 = vtanh.pop %v2039
        %v2056 = vadd.f32 %v2040, 1.0
        %v2057 = vadd.f32 %v2041, 1.0
        %v2058 = vadd.f32 %v2042, 1.0
        %v2059 = vadd.f32 %v2043, 1.0
        %v2060 = vadd.f32 %v2044, 1.0
        %v2061 = vadd.f32 %v2045, 1.0
        %v2062 = vadd.f32 %v2046, 1.0
        %v2063 = vadd.f32 %v2047, 1.0
        %v2064 = vadd.f32 %v2048, 1.0
        %v2065 = vadd.f32 %v2049, 1.0
        %v2066 = vadd.f32 %v2050, 1.0
        %v2067 = vadd.f32 %v2051, 1.0
        %v2068 = vadd.f32 %v2052, 1.0
        %v2069 = vadd.f32 %v2053, 1.0
        %v2070 = vadd.f32 %v2054, 1.0
        %v2071 = vadd.f32 %v2055, 1.0
        %v2072 = vmul.f32 %v2056, 0.5
        %v2073 = vmul.f32 %v2057, 0.5
        %v2074 = vmul.f32 %v2058, 0.5
        %v2075 = vmul.f32 %v2059, 0.5
        %v2076 = vmul.f32 %v2060, 0.5
        %v2077 = vmul.f32 %v2061, 0.5
        %v2078 = vmul.f32 %v2062, 0.5
        %v2079 = vmul.f32 %v2063, 0.5
        %v2080 = vmul.f32 %v2064, 0.5
        %v2081 = vmul.f32 %v2065, 0.5
        %v2082 = vmul.f32 %v2066, 0.5
        %v2083 = vmul.f32 %v2067, 0.5
        %v2084 = vmul.f32 %v2068, 0.5
        %v2085 = vmul.f32 %v2069, 0.5
        %v2086 = vmul.f32 %v2070, 0.5
        %v2087 = vmul.f32 %v2071, 0.5
        %v2088 = vmul.f32 %v1882, %v2072
        %v2089 = vmul.f32 %v1887, %v2073
        %v2090 = vmul.f32 %v1892, %v2074
        %v2091 = vmul.f32 %v1897, %v2075
        %v2092 = vmul.f32 %v1902, %v2076
        %v2093 = vmul.f32 %v1907, %v2077
        %v2094 = vmul.f32 %v1912, %v2078
        %v2095 = vmul.f32 %v1917, %v2079
        %v2096 = vmul.f32 %v1922, %v2080
        %v2097 = vmul.f32 %v1927, %v2081
        %v2098 = vmul.f32 %v1932, %v2082
        %v2099 = vmul.f32 %v1937, %v2083
        %v2100 = vmul.f32 %v1942, %v2084
        %v2101 = vmul.f32 %v1947, %v2085
        %v2102 = vmul.f32 %v1952, %v2086
        %v2103 = vmul.f32 %v1957, %v2087
        %2104 = vst.msk [vmem:[#allocation4] sm:$0xff] %vm612, %v2088
        %2105 = vst.msk [vmem:[#allocation4 + $0x8] sm:$0xff] %vm612, %v2089
        %2106 = vst.msk [vmem:[#allocation4 + $0x10] sm:$0xff] %vm612, %v2090
        %2107 = vst.msk [vmem:[#allocation4 + $0x18] sm:$0xff] %vm612, %v2091
        %2108 = vst.msk [vmem:[#allocation4 + $0x20] sm:$0xff] %vm612, %v2092
        %2109 = vst.msk [vmem:[#allocation4 + $0x28] sm:$0xff] %vm612, %v2093
        %2110 = vst.msk [vmem:[#allocation4 + $0x30] sm:$0xff] %vm612, %v2094
        %2111 = vst.msk [vmem:[#allocation4 + $0x38] sm:$0xff] %vm612, %v2095
        %2112 = vst.msk [vmem:[#allocation4 + $0x40] sm:$0xff] %vm612, %v2096
        %2113 = vst.msk [vmem:[#allocation4 + $0x48] sm:$0xff] %vm612, %v2097
        %2114 = vst.msk [vmem:[#allocation4 + $0x50] sm:$0xff] %vm612, %v2098
        %2115 = vst.msk [vmem:[#allocation4 + $0x58] sm:$0xff] %vm612, %v2099
        %2116 = vst.msk [vmem:[#allocation4 + $0x60] sm:$0xff] %vm612, %v2100
        %2117 = vst.msk [vmem:[#allocation4 + $0x68] sm:$0xff] %vm612, %v2101
        %2118 = vst.msk [vmem:[#allocation4 + $0x70] sm:$0xff] %vm612, %v2102
        %vm2119 = vcmask 260096
        %2120 = vst.msk [vmem:[#allocation4 + $0x78] sm:$0x7f] %vm2119, %v2103
        %v2121 = vld [vmem:[#allocation4] ss:$2 sm:$0xff]
        %s2122 = scalar_lea.vmem [#allocation4], 16
        %v2123 = vld [vmem:[%s2122] ss:$2 sm:$0xff]
        %s2124 = scalar_lea.vmem [#allocation4], 32
        %v2125 = vld [vmem:[%s2124] ss:$2 sm:$0xff]
        %s2126 = scalar_lea.vmem [#allocation4], 48
        %v2127 = vld [vmem:[%s2126] ss:$2 sm:$0xff]
        %s2128 = scalar_lea.vmem [#allocation4], 64
        %v2129 = vld [vmem:[%s2128] ss:$2 sm:$0xff]
        %s2130 = scalar_lea.vmem [#allocation4], 80
        %v2131 = vld [vmem:[%s2130] ss:$2 sm:$0xff]
        %s2132 = scalar_lea.vmem [#allocation4], 96
        %v2133 = vld [vmem:[%s2132] ss:$2 sm:$0xff]
        %s2134 = scalar_lea.vmem [#allocation4], 112
        %v2135 = vld [vmem:[%s2134] ss:$2 sm:$0x7f]
        %s2136 = scalar_lea.vmem [#allocation4], 1
        %v2137 = vld [vmem:[%s2136] ss:$2 sm:$0xff]
        %s2138 = scalar_lea.vmem [#allocation4], 17
        %v2139 = vld [vmem:[%s2138] ss:$2 sm:$0xff]
        %s2140 = scalar_lea.vmem [#allocation4], 33
        %v2141 = vld [vmem:[%s2140] ss:$2 sm:$0xff]
        %s2142 = scalar_lea.vmem [#allocation4], 49
        %v2143 = vld [vmem:[%s2142] ss:$2 sm:$0xff]
        %s2144 = scalar_lea.vmem [#allocation4], 65
        %v2145 = vld [vmem:[%s2144] ss:$2 sm:$0xff]
        %s2146 = scalar_lea.vmem [#allocation4], 81
        %v2147 = vld [vmem:[%s2146] ss:$2 sm:$0xff]
        %s2148 = scalar_lea.vmem [#allocation4], 97
        %v2149 = vld [vmem:[%s2148] ss:$2 sm:$0xff]
        %s2150 = scalar_lea.vmem [#allocation4], 113
        %v2151 = vld [vmem:[%s2150] ss:$2 sm:$0x7f]
        %s2152 = scalar_lea.vmem [#allocation4], 2
        %v2153 = vld [vmem:[%s2152] ss:$2 sm:$0xff]
        %s2154 = scalar_lea.vmem [#allocation4], 18
        %v2155 = vld [vmem:[%s2154] ss:$2 sm:$0xff]
        %s2156 = scalar_lea.vmem [#allocation4], 34
        %v2157 = vld [vmem:[%s2156] ss:$2 sm:$0xff]
        %s2158 = scalar_lea.vmem [#allocation4], 50
        %v2159 = vld [vmem:[%s2158] ss:$2 sm:$0xff]
        %s2160 = scalar_lea.vmem [#allocation4], 66
        %v2161 = vld [vmem:[%s2160] ss:$2 sm:$0xff]
        %s2162 = scalar_lea.vmem [#allocation4], 82
        %v2163 = vld [vmem:[%s2162] ss:$2 sm:$0xff]
        %s2164 = scalar_lea.vmem [#allocation4], 98
        %v2165 = vld [vmem:[%s2164] ss:$2 sm:$0xff]
        %s2166 = scalar_lea.vmem [#allocation4], 114
        %v2167 = vld [vmem:[%s2166] ss:$2 sm:$0x7f]
        %2176 = vrot.lane.b32.xlu0 %v2137, 32
        %v2177 = vpop.permute.xlu0 %2176
        %2178 = vrot.lane.b32.xlu0 %v2139, 32
        %v2179 = vpop.permute.xlu0 %2178
        %2180 = vrot.lane.b32.xlu0 %v2141, 32
        %v2181 = vpop.permute.xlu0 %2180
        %2182 = vrot.lane.b32.xlu0 %v2143, 32
        %v2183 = vpop.permute.xlu0 %2182
        %2184 = vrot.lane.b32.xlu0 %v2145, 32
        %v2185 = vpop.permute.xlu0 %2184
        %2186 = vrot.lane.b32.xlu0 %v2147, 32
        %v2187 = vpop.permute.xlu0 %2186
        %2188 = vrot.lane.b32.xlu0 %v2149, 32
        %v2189 = vpop.permute.xlu0 %2188
        %2190 = vrot.lane.b32.xlu0 %v2151, 32
        %v2191 = vpop.permute.xlu0 %2190
        %2208 = vrot.lane.b32.xlu0 %v2153, 64
        %v2209 = vpop.permute.xlu0 %2208
        %2210 = vrot.lane.b32.xlu0 %v2155, 64
        %v2211 = vpop.permute.xlu0 %2210
        %2212 = vrot.lane.b32.xlu0 %v2157, 64
        %v2213 = vpop.permute.xlu0 %2212
        %2214 = vrot.lane.b32.xlu0 %v2159, 64
        %v2215 = vpop.permute.xlu0 %2214
        %2216 = vrot.lane.b32.xlu0 %v2161, 64
        %v2217 = vpop.permute.xlu0 %2216
        %2218 = vrot.lane.b32.xlu0 %v2163, 64
        %v2219 = vpop.permute.xlu0 %2218
        %2220 = vrot.lane.b32.xlu0 %v2165, 64
        %v2221 = vpop.permute.xlu0 %2220
        %2222 = vrot.lane.b32.xlu0 %v2167, 64
        %v2223 = vpop.permute.xlu0 %2222
        %v2232 = vsel %vm612, %v2121, %v2177
        %v2233 = vsel %vm612, %v2123, %v2179
        %v2234 = vsel %vm612, %v2125, %v2181
        %v2235 = vsel %vm612, %v2127, %v2183
        %v2236 = vsel %vm612, %v2129, %v2185
        %v2237 = vsel %vm612, %v2131, %v2187
        %v2238 = vsel %vm612, %v2133, %v2189
        %v2239 = vsel %vm612, %v2135, %v2191
        %v2240 = vsel %vm976, %v2232, %v2209
        %v2241 = vsel %vm976, %v2233, %v2211
        %v2242 = vsel %vm976, %v2234, %v2213
        %v2243 = vsel %vm976, %v2235, %v2215
        %v2244 = vsel %vm976, %v2236, %v2217
        %v2245 = vsel %vm976, %v2237, %v2219
        %v2246 = vsel %vm976, %v2238, %v2221
        %v2247 = vsel %vm976, %v2239, %v2223
        %v2248 = vld [vmem:[%s1 + $0x120] sm:$0xff]
        %v2249 = vld [vmem:[%s1 + $0x128] sm:$0xff]
        %v2250 = vld [vmem:[%s1 + $0x130] sm:$0xff]
        %v2251 = vld [vmem:[%s1 + $0x138] sm:$0xff]
        %v2252 = vld [vmem:[%s1 + $0x140] sm:$0xff]
        %v2253 = vld [vmem:[%s1 + $0x148] sm:$0xff]
        %v2254 = vld [vmem:[%s1 + $0x150] sm:$0xff]
        %v2255 = vld [vmem:[%s1 + $0x158] sm:$0xff]
        %v2256 = vld [vmem:[%s1 + $0x160] sm:$0xff]
        %v2257 = vld [vmem:[%s1 + $0x168] sm:$0xff]
        %v2258 = vld [vmem:[%s1 + $0x170] sm:$0xff]
        %v2259 = vld [vmem:[%s1 + $0x178] sm:$0xff]
        %v2261 = vsel %vm978, %v2240, 0
        %v2264 = vsel %vm978, %v2241, 0
        %v2267 = vsel %vm978, %v2242, 0
        %v2270 = vsel %vm978, %v2243, 0
        %v2273 = vsel %vm978, %v2244, 0
        %v2276 = vsel %vm978, %v2245, 0
        %v2279 = vsel %vm978, %v2246, 0
        %v2282 = vsel %vm978, %v2247, 0
        %2284 = vmatprep.subr.mxu0 0.0
        %2285 = vmatpush1.msra.mxu0 %v2248
        %2286 = vmatprep.subr.mxu0 0.0
        %2287 = vmatpush1.msra.mxu0 %v2249
        %2288 = vmatprep.subr.mxu0 0.0
        %2289 = vmatpush1.msra.mxu0 %v2250
        %2290 = vmatprep.subr.mxu0 0.0
        %2291 = vmatpush1.msra.mxu0 %v2251
        %2292 = vmatprep.subr.mxu0 0.0
        %2293 = vmatpush1.msra.mxu0 %v2252
        %2294 = vmatprep.subr.mxu0 0.0
        %2295 = vmatpush1.msra.mxu0 %v2253
        %2296 = vmatprep.subr.mxu0 0.0
        %2297 = vmatpush1.msra.mxu0 %v2254
        %2298 = vmatprep.subr.mxu0 0.0
        %2299 = vmatpush1.msra.mxu0 %v2255
        %2300 = vmatprep.subr.mxu0 0.0
        %2301 = vmatpush1.msra.mxu0 %v2256
        %2302 = vmatprep.subr.mxu0 0.0
        %2303 = vmatpush1.msra.mxu0 %v2257
        %2304 = vmatprep.subr.mxu0 0.0
        %2305 = vmatpush1.msra.mxu0 %v2258
        %2306 = vmatprep.subr.mxu0 0.0
        %2307 = vmatpush1.msra.mxu0 %v2259
        %2308 = vmatprep.subr.mxu0 0.0
        %2309 = vmatpush1.msra.mxu0 0.0
        %2310 = vmatprep.subr.mxu0 0.0
        %2311 = vmatpush1.msra.mxu0 0.0
        %2312 = vmatprep.subr.mxu0 0.0
        %2313 = vmatpush1.msra.mxu0 0.0
        %2314 = vmatprep.subr.mxu0 0.0
        %2315 = vmatpush1.msra.mxu0 0.0
        %2316 = vmatprep.subr.mxu0 0.0
        %2317 = vmatpush1.msra.mxu0 0.0
        %2318 = vmatprep.subr.mxu0 0.0
        %2319 = vmatpush1.msra.mxu0 0.0
        %2320 = vmatprep.subr.mxu0 0.0
        %2321 = vmatpush1.msra.mxu0 0.0
        %2322 = vmatprep.subr.mxu0 0.0
        %2323 = vmatpush1.msra.mxu0 0.0
        %2324 = vmatprep.subr.mxu0 0.0
        %2325 = vmatpush1.msra.mxu0 0.0
        %2326 = vmatprep.subr.mxu0 0.0
        %2327 = vmatpush1.msra.mxu0 0.0
        %2328 = vmatprep.subr.mxu0 0.0
        %2329 = vmatpush1.msra.mxu0 0.0
        %2330 = vmatprep.subr.mxu0 0.0
        %2331 = vmatpush1.msra.mxu0 0.0
        %2332 = vmatprep.subr.mxu0 0.0
        %2333 = vmatpush1.msra.mxu0 0.0
        %2334 = vmatprep.subr.mxu0 0.0
        %2335 = vmatpush1.msra.mxu0 0.0
        %2336 = vmatprep.subr.mxu0 0.0
        %2337 = vmatpush1.msra.mxu0 0.0
        %2338 = vmatprep.subr.mxu0 0.0
        %2339 = vmatpush1.msra.mxu0 0.0
        %2340 = vmatprep.subr.mxu0 0.0
        %2341 = vmatpush1.msra.mxu0 0.0
        %2342 = vmatprep.subr.mxu0 0.0
        %2343 = vmatpush1.msra.mxu0 0.0
        %2344 = vmatprep.subr.mxu0 0.0
        %2345 = vmatpush1.msra.mxu0 0.0
        %2346 = vmatprep.subr.mxu0 0.0
        %2347 = vmatpush1.msra.mxu0 0.0
        %2348 = vmatprep.mubr.f32.mxu0 0.0
        %2349 = vmatmul.mubr.f32.gmra.mrb[0].mxu0 %v2261
        %v2350 = vpop.f32.mrb[0].mxu0
        %v2351 = vadd.f32 0.0, %v2350
        %v2352 = vpop.f32.mrb[0].mxu0
        %2353 = vmatprep.mubr.f32.mxu0 0.0
        %2354 = vmatmul.mubr.f32.gmra.mrb[0].mxu0 %v2264
        %v2355 = vpop.f32.mrb[0].mxu0
        %v2356 = vadd.f32 0.0, %v2355
        %v2357 = vpop.f32.mrb[0].mxu0
        %2358 = vmatprep.mubr.f32.mxu0 0.0
        %2359 = vmatmul.mubr.f32.gmra.mrb[0].mxu0 %v2267
        %v2360 = vpop.f32.mrb[0].mxu0
        %v2361 = vadd.f32 0.0, %v2360
        %v2362 = vpop.f32.mrb[0].mxu0
        %2363 = vmatprep.mubr.f32.mxu0 0.0
        %2364 = vmatmul.mubr.f32.gmra.mrb[0].mxu0 %v2270
        %v2365 = vpop.f32.mrb[0].mxu0
        %v2366 = vadd.f32 0.0, %v2365
        %v2367 = vpop.f32.mrb[0].mxu0
        %2368 = vmatprep.mubr.f32.mxu0 0.0
        %2369 = vmatmul.mubr.f32.gmra.mrb[0].mxu0 %v2273
        %v2370 = vpop.f32.mrb[0].mxu0
        %v2371 = vadd.f32 0.0, %v2370
        %v2372 = vpop.f32.mrb[0].mxu0
        %2373 = vmatprep.mubr.f32.mxu0 0.0
        %2374 = vmatmul.mubr.f32.gmra.mrb[0].mxu0 %v2276
        %v2375 = vpop.f32.mrb[0].mxu0
        %v2376 = vadd.f32 0.0, %v2375
        %v2377 = vpop.f32.mrb[0].mxu0
        %2378 = vmatprep.mubr.f32.mxu0 0.0
        %2379 = vmatmul.mubr.f32.gmra.mrb[0].mxu0 %v2279
        %v2380 = vpop.f32.mrb[0].mxu0
        %v2381 = vadd.f32 0.0, %v2380
        %v2382 = vpop.f32.mrb[0].mxu0
        %2383 = vmatprep.mubr.f32.mxu0 0.0
        %2384 = vmatmul.mubr.f32.gmra.mrb[0].mxu0 %v2282
        %v2385 = vpop.f32.mrb[0].mxu0
        %v2386 = vadd.f32 0.0, %v2385
        %v2387 = vpop.f32.mrb[0].mxu0
        %2388 = vdwg.mxu0
        %v2389 = vmul.f32 %v2351, %v2351
        %v2390 = vmul.f32 %v2356, %v2356
        %v2391 = vmul.f32 %v2361, %v2361
        %v2392 = vmul.f32 %v2366, %v2366
        %v2393 = vmul.f32 %v2371, %v2371
        %v2394 = vmul.f32 %v2376, %v2376
        %v2395 = vmul.f32 %v2381, %v2381
        %v2396 = vmul.f32 %v2386, %v2386
        %v2397 = vmul.f32 %v2351, %v2389
        %v2398 = vmul.f32 %v2356, %v2390
        %v2399 = vmul.f32 %v2361, %v2391
        %v2400 = vmul.f32 %v2366, %v2392
        %v2401 = vmul.f32 %v2371, %v2393
        %v2402 = vmul.f32 %v2376, %v2394
        %v2403 = vmul.f32 %v2381, %v2395
        %v2404 = vmul.f32 %v2386, %v2396
        %v2405 = vmul.f32 %v2397, 0.044715
        %v2406 = vmul.f32 %v2398, 0.044715
        %v2407 = vmul.f32 %v2399, 0.044715
        %v2408 = vmul.f32 %v2400, 0.044715
        %v2409 = vmul.f32 %v2401, 0.044715
        %v2410 = vmul.f32 %v2402, 0.044715
        %v2411 = vmul.f32 %v2403, 0.044715
        %v2412 = vmul.f32 %v2404, 0.044715
        %v2413 = vadd.f32 %v2351, %v2405
        %v2414 = vadd.f32 %v2356, %v2406
        %v2415 = vadd.f32 %v2361, %v2407
        %v2416 = vadd.f32 %v2366, %v2408
        %v2417 = vadd.f32 %v2371, %v2409
        %v2418 = vadd.f32 %v2376, %v2410
        %v2419 = vadd.f32 %v2381, %v2411
        %v2420 = vadd.f32 %v2386, %v2412
        %v2421 = vmul.f32 %v2413, 0.7978846
        %v2422 = vmul.f32 %v2414, 0.7978846
        %v2423 = vmul.f32 %v2415, 0.7978846
        %v2424 = vmul.f32 %v2416, 0.7978846
        %v2425 = vmul.f32 %v2417, 0.7978846
        %v2426 = vmul.f32 %v2418, 0.7978846
        %v2427 = vmul.f32 %v2419, 0.7978846
        %v2428 = vmul.f32 %v2420, 0.7978846
        %v2429 = vtanh.pop %v2421
        %v2430 = vtanh.pop %v2422
        %v2431 = vtanh.pop %v2423
        %v2432 = vtanh.pop %v2424
        %v2433 = vtanh.pop %v2425
        %v2434 = vtanh.pop %v2426
        %v2435 = vtanh.pop %v2427
        %v2436 = vtanh.pop %v2428
        %v2437 = vadd.f32 %v2429, 1.0
        %v2438 = vadd.f32 %v2430, 1.0
        %v2439 = vadd.f32 %v2431, 1.0
        %v2440 = vadd.f32 %v2432, 1.0
        %v2441 = vadd.f32 %v2433, 1.0
        %v2442 = vadd.f32 %v2434, 1.0
        %v2443 = vadd.f32 %v2435, 1.0
        %v2444 = vadd.f32 %v2436, 1.0
        %v2445 = vmul.f32 %v2437, 0.5
        %v2446 = vmul.f32 %v2438, 0.5
        %v2447 = vmul.f32 %v2439, 0.5
        %v2448 = vmul.f32 %v2440, 0.5
        %v2449 = vmul.f32 %v2441, 0.5
        %v2450 = vmul.f32 %v2442, 0.5
        %v2451 = vmul.f32 %v2443, 0.5
        %v2452 = vmul.f32 %v2444, 0.5
        %v2453 = vmul.f32 %v2351, %v2445
        %v2454 = vmul.f32 %v2356, %v2446
        %v2455 = vmul.f32 %v2361, %v2447
        %v2456 = vmul.f32 %v2366, %v2448
        %v2457 = vmul.f32 %v2371, %v2449
        %v2458 = vmul.f32 %v2376, %v2450
        %v2459 = vmul.f32 %v2381, %v2451
        %v2460 = vmul.f32 %v2386, %v2452
        %2461 = vst.msk [vmem:[#allocation5] sm:$0xff] %vm612, %v2453
        %2462 = vst.msk [vmem:[#allocation5 + $0x8] sm:$0xff] %vm612, %v2454
        %2463 = vst.msk [vmem:[#allocation5 + $0x10] sm:$0xff] %vm612, %v2455
        %2464 = vst.msk [vmem:[#allocation5 + $0x18] sm:$0xff] %vm612, %v2456
        %2465 = vst.msk [vmem:[#allocation5 + $0x20] sm:$0xff] %vm612, %v2457
        %2466 = vst.msk [vmem:[#allocation5 + $0x28] sm:$0xff] %vm612, %v2458
        %2467 = vst.msk [vmem:[#allocation5 + $0x30] sm:$0xff] %vm612, %v2459
        %2468 = vst.msk [vmem:[#allocation5 + $0x38] sm:$0x7f] %vm2119, %v2460
        %v2469 = vld [vmem:[#allocation5] ss:$2 sm:$0xff]
        %s2470 = scalar_lea.vmem [#allocation5], 16
        %v2471 = vld [vmem:[%s2470] ss:$2 sm:$0xff]
        %s2472 = scalar_lea.vmem [#allocation5], 32
        %v2473 = vld [vmem:[%s2472] ss:$2 sm:$0xff]
        %s2474 = scalar_lea.vmem [#allocation5], 48
        %v2475 = vld [vmem:[%s2474] ss:$2 sm:$0x7f]
        %s2476 = scalar_lea.vmem [#allocation5], 1
        %v2477 = vld [vmem:[%s2476] ss:$2 sm:$0xff]
        %s2478 = scalar_lea.vmem [#allocation5], 17
        %v2479 = vld [vmem:[%s2478] ss:$2 sm:$0xff]
        %s2480 = scalar_lea.vmem [#allocation5], 33
        %v2481 = vld [vmem:[%s2480] ss:$2 sm:$0xff]
        %s2482 = scalar_lea.vmem [#allocation5], 49
        %v2483 = vld [vmem:[%s2482] ss:$2 sm:$0x7f]
        %s2484 = scalar_lea.vmem [#allocation5], 2
        %v2485 = vld [vmem:[%s2484] ss:$2 sm:$0xff]
        %s2486 = scalar_lea.vmem [#allocation5], 18
        %v2487 = vld [vmem:[%s2486] ss:$2 sm:$0xff]
        %s2488 = scalar_lea.vmem [#allocation5], 34
        %v2489 = vld [vmem:[%s2488] ss:$2 sm:$0xff]
        %s2490 = scalar_lea.vmem [#allocation5], 50
        %v2491 = vld [vmem:[%s2490] ss:$2 sm:$0x7f]
        %2496 = vrot.lane.b32.xlu0 %v2477, 32
        %v2497 = vpop.permute.xlu0 %2496
        %2498 = vrot.lane.b32.xlu0 %v2479, 32
        %v2499 = vpop.permute.xlu0 %2498
        %2500 = vrot.lane.b32.xlu0 %v2481, 32
        %v2501 = vpop.permute.xlu0 %2500
        %2502 = vrot.lane.b32.xlu0 %v2483, 32
        %v2503 = vpop.permute.xlu0 %2502
        %2512 = vrot.lane.b32.xlu0 %v2485, 64
        %v2513 = vpop.permute.xlu0 %2512
        %2514 = vrot.lane.b32.xlu0 %v2487, 64
        %v2515 = vpop.permute.xlu0 %2514
        %2516 = vrot.lane.b32.xlu0 %v2489, 64
        %v2517 = vpop.permute.xlu0 %2516
        %2518 = vrot.lane.b32.xlu0 %v2491, 64
        %v2519 = vpop.permute.xlu0 %2518
        %v2524 = vsel %vm612, %v2469, %v2497
        %v2525 = vsel %vm612, %v2471, %v2499
        %v2526 = vsel %vm612, %v2473, %v2501
        %v2527 = vsel %vm612, %v2475, %v2503
        %v2528 = vsel %vm976, %v2524, %v2513
        %v2529 = vsel %vm976, %v2525, %v2515
        %v2530 = vsel %vm976, %v2526, %v2517
        %v2531 = vsel %vm976, %v2527, %v2519
        %v2532 = vld [vmem:[%s1 + $0x180] sm:$0xff]
        %v2533 = vld [vmem:[%s1 + $0x188] sm:$0xff]
        %v2534 = vld [vmem:[%s1 + $0x190] sm:$0xff]
        %v2535 = vld [vmem:[%s1 + $0x198] sm:$0xff]
        %v2536 = vld [vmem:[%s1 + $0x1a0] sm:$0xff]
        %v2537 = vld [vmem:[%s1 + $0x1a8] sm:$0xff]
        %v2538 = vld [vmem:[%s1 + $0x1b0] sm:$0xff]
        %v2539 = vld [vmem:[%s1 + $0x1b8] sm:$0xff]
        %v2540 = vld [vmem:[%s1 + $0x1c0] sm:$0xff]
        %v2541 = vld [vmem:[%s1 + $0x1c8] sm:$0xff]
        %v2542 = vld [vmem:[%s1 + $0x1d0] sm:$0xff]
        %v2543 = vld [vmem:[%s1 + $0x1d8] sm:$0xff]
        %v2545 = vsel %vm978, %v2528, 0
        %v2548 = vsel %vm978, %v2529, 0
        %v2551 = vsel %vm978, %v2530, 0
        %v2554 = vsel %vm978, %v2531, 0
        %2556 = vmatprep.subr.mxu0 0.0
        %2557 = vmatpush1.msra.mxu0 %v2532
        %2558 = vmatprep.subr.mxu0 0.0
        %2559 = vmatpush1.msra.mxu0 %v2533
        %2560 = vmatprep.subr.mxu0 0.0
        %2561 = vmatpush1.msra.mxu0 %v2534
        %2562 = vmatprep.subr.mxu0 0.0
        %2563 = vmatpush1.msra.mxu0 %v2535
        %2564 = vmatprep.subr.mxu0 0.0
        %2565 = vmatpush1.msra.mxu0 %v2536
        %2566 = vmatprep.subr.mxu0 0.0
        %2567 = vmatpush1.msra.mxu0 %v2537
        %2568 = vmatprep.subr.mxu0 0.0
        %2569 = vmatpush1.msra.mxu0 %v2538
        %2570 = vmatprep.subr.mxu0 0.0
        %2571 = vmatpush1.msra.mxu0 %v2539
        %2572 = vmatprep.subr.mxu0 0.0
        %2573 = vmatpush1.msra.mxu0 %v2540
        %2574 = vmatprep.subr.mxu0 0.0
        %2575 = vmatpush1.msra.mxu0 %v2541
        %2576 = vmatprep.subr.mxu0 0.0
        %2577 = vmatpush1.msra.mxu0 %v2542
        %2578 = vmatprep.subr.mxu0 0.0
        %2579 = vmatpush1.msra.mxu0 %v2543
        %2580 = vmatprep.subr.mxu0 0.0
        %2581 = vmatpush1.msra.mxu0 0.0
        %2582 = vmatprep.subr.mxu0 0.0
        %2583 = vmatpush1.msra.mxu0 0.0
        %2584 = vmatprep.subr.mxu0 0.0
        %2585 = vmatpush1.msra.mxu0 0.0
        %2586 = vmatprep.subr.mxu0 0.0
        %2587 = vmatpush1.msra.mxu0 0.0
        %2588 = vmatprep.subr.mxu0 0.0
        %2589 = vmatpush1.msra.mxu0 0.0
        %2590 = vmatprep.subr.mxu0 0.0
        %2591 = vmatpush1.msra.mxu0 0.0
        %2592 = vmatprep.subr.mxu0 0.0
        %2593 = vmatpush1.msra.mxu0 0.0
        %2594 = vmatprep.subr.mxu0 0.0
        %2595 = vmatpush1.msra.mxu0 0.0
        %2596 = vmatprep.subr.mxu0 0.0
        %2597 = vmatpush1.msra.mxu0 0.0
        %2598 = vmatprep.subr.mxu0 0.0
        %2599 = vmatpush1.msra.mxu0 0.0
        %2600 = vmatprep.subr.mxu0 0.0
        %2601 = vmatpush1.msra.mxu0 0.0
        %2602 = vmatprep.subr.mxu0 0.0
        %2603 = vmatpush1.msra.mxu0 0.0
        %2604 = vmatprep.subr.mxu0 0.0
        %2605 = vmatpush1.msra.mxu0 0.0
        %2606 = vmatprep.subr.mxu0 0.0
        %2607 = vmatpush1.msra.mxu0 0.0
        %2608 = vmatprep.subr.mxu0 0.0
        %2609 = vmatpush1.msra.mxu0 0.0
        %2610 = vmatprep.subr.mxu0 0.0
        %2611 = vmatpush1.msra.mxu0 0.0
        %2612 = vmatprep.subr.mxu0 0.0
        %2613 = vmatpush1.msra.mxu0 0.0
        %2614 = vmatprep.subr.mxu0 0.0
        %2615 = vmatpush1.msra.mxu0 0.0
        %2616 = vmatprep.subr.mxu0 0.0
        %2617 = vmatpush1.msra.mxu0 0.0
        %2618 = vmatprep.subr.mxu0 0.0
        %2619 = vmatpush1.msra.mxu0 0.0
        %2620 = vmatprep.mubr.f32.mxu0 0.0
        %2621 = vmatmul.mubr.f32.gmra.mrb[0].mxu0 %v2545
        %v2622 = vpop.f32.mrb[0].mxu0
        %v2623 = vadd.f32 0.0, %v2622
        %v2624 = vpop.f32.mrb[0].mxu0
        %2625 = vmatprep.mubr.f32.mxu0 0.0
        %2626 = vmatmul.mubr.f32.gmra.mrb[0].mxu0 %v2548
        %v2627 = vpop.f32.mrb[0].mxu0
        %v2628 = vadd.f32 0.0, %v2627
        %v2629 = vpop.f32.mrb[0].mxu0
        %2630 = vmatprep.mubr.f32.mxu0 0.0
        %2631 = vmatmul.mubr.f32.gmra.mrb[0].mxu0 %v2551
        %v2632 = vpop.f32.mrb[0].mxu0
        %v2633 = vadd.f32 0.0, %v2632
        %v2634 = vpop.f32.mrb[0].mxu0
        %2635 = vmatprep.mubr.f32.mxu0 0.0
        %2636 = vmatmul.mubr.f32.gmra.mrb[0].mxu0 %v2554
        %v2637 = vpop.f32.mrb[0].mxu0
        %v2638 = vadd.f32 0.0, %v2637
        %v2639 = vpop.f32.mrb[0].mxu0
        %2640 = vdwg.mxu0
        %v2641 = vmul.f32 %v2623, %v2623
        %v2642 = vmul.f32 %v2628, %v2628
        %v2643 = vmul.f32 %v2633, %v2633
        %v2644 = vmul.f32 %v2638, %v2638
        %v2645 = vmul.f32 %v2623, %v2641
        %v2646 = vmul.f32 %v2628, %v2642
        %v2647 = vmul.f32 %v2633, %v2643
        %v2648 = vmul.f32 %v2638, %v2644
        %v2649 = vmul.f32 %v2645, 0.044715
        %v2650 = vmul.f32 %v2646, 0.044715
        %v2651 = vmul.f32 %v2647, 0.044715
        %v2652 = vmul.f32 %v2648, 0.044715
        %v2653 = vadd.f32 %v2623, %v2649
        %v2654 = vadd.f32 %v2628, %v2650
        %v2655 = vadd.f32 %v2633, %v2651
        %v2656 = vadd.f32 %v2638, %v2652
        %v2657 = vmul.f32 %v2653, 0.7978846
        %v2658 = vmul.f32 %v2654, 0.7978846
        %v2659 = vmul.f32 %v2655, 0.7978846
        %v2660 = vmul.f32 %v2656, 0.7978846
        %v2661 = vtanh.pop %v2657
        %v2662 = vtanh.pop %v2658
        %v2663 = vtanh.pop %v2659
        %v2664 = vtanh.pop %v2660
        %v2665 = vadd.f32 %v2661, 1.0
        %v2666 = vadd.f32 %v2662, 1.0
        %v2667 = vadd.f32 %v2663, 1.0
        %v2668 = vadd.f32 %v2664, 1.0
        %v2669 = vmul.f32 %v2665, 0.5
        %v2670 = vmul.f32 %v2666, 0.5
        %v2671 = vmul.f32 %v2667, 0.5
        %v2672 = vmul.f32 %v2668, 0.5
        %v2673 = vmul.f32 %v2623, %v2669
        %v2674 = vmul.f32 %v2628, %v2670
        %v2675 = vmul.f32 %v2633, %v2671
        %v2676 = vmul.f32 %v2638, %v2672
        %2677 = vst.msk [vmem:[#allocation4] sm:$0xff] %vm612, %v2673
        %2678 = vst.msk [vmem:[#allocation4 + $0x8] sm:$0xff] %vm612, %v2674
        %2679 = vst.msk [vmem:[#allocation4 + $0x10] sm:$0xff] %vm612, %v2675
        %2680 = vst.msk [vmem:[#allocation4 + $0x18] sm:$0x7f] %vm2119, %v2676
        %v2681 = vld [vmem:[#allocation4] ss:$2 sm:$0xff]
        %v2682 = vld [vmem:[%s2122] ss:$2 sm:$0x7f]
        %v2683 = vld [vmem:[%s2136] ss:$2 sm:$0xff]
        %v2684 = vld [vmem:[%s2138] ss:$2 sm:$0x7f]
        %2687 = vrot.lane.b32.xlu0 %v2683, 32
        %v2688 = vpop.permute.xlu0 %2687
        %2689 = vrot.lane.b32.xlu0 %v2684, 32
        %v2690 = vpop.permute.xlu0 %2689
        %v2693 = vsel %vm612, %v2681, %v2688
        %v2694 = vsel %vm612, %v2682, %v2690
        %v2695 = vld [vmem:[%s1 + $0x1e0] sm:$0xff]
        %v2696 = vld [vmem:[%s1 + $0x1e8] sm:$0xff]
        %v2697 = vld [vmem:[%s1 + $0x1f0] sm:$0xff]
        %v2698 = vld [vmem:[%s1 + $0x1f8] sm:$0xff]
        %v2699 = vld [vmem:[%s1 + $0x200] sm:$0xff]
        %v2700 = vld [vmem:[%s1 + $0x208] sm:$0xff]
        %v2701 = vld [vmem:[%s1 + $0x210] sm:$0xff]
        %v2702 = vld [vmem:[%s1 + $0x218] sm:$0xff]
        %v2704 = vsel %vm976, %v2693, 0
        %v2707 = vsel %vm976, %v2694, 0
        %2709 = vmatprep.subr.mxu0 0.0
        %2710 = vmatpush1.msra.mxu0 %v2695
        %2711 = vmatprep.subr.mxu0 0.0
        %2712 = vmatpush1.msra.mxu0 %v2696
        %2713 = vmatprep.subr.mxu0 0.0
        %2714 = vmatpush1.msra.mxu0 %v2697
        %2715 = vmatprep.subr.mxu0 0.0
        %2716 = vmatpush1.msra.mxu0 %v2698
        %2717 = vmatprep.subr.mxu0 0.0
        %2718 = vmatpush1.msra.mxu0 %v2699
        %2719 = vmatprep.subr.mxu0 0.0
        %2720 = vmatpush1.msra.mxu0 %v2700
        %2721 = vmatprep.subr.mxu0 0.0
        %2722 = vmatpush1.msra.mxu0 %v2701
        %2723 = vmatprep.subr.mxu0 0.0
        %2724 = vmatpush1.msra.mxu0 %v2702
        %2725 = vmatprep.subr.mxu0 0.0
        %2726 = vmatpush1.msra.mxu0 0.0
        %2727 = vmatprep.subr.mxu0 0.0
        %2728 = vmatpush1.msra.mxu0 0.0
        %2729 = vmatprep.subr.mxu0 0.0
        %2730 = vmatpush1.msra.mxu0 0.0
        %2731 = vmatprep.subr.mxu0 0.0
        %2732 = vmatpush1.msra.mxu0 0.0
        %2733 = vmatprep.subr.mxu0 0.0
        %2734 = vmatpush1.msra.mxu0 0.0
        %2735 = vmatprep.subr.mxu0 0.0
        %2736 = vmatpush1.msra.mxu0 0.0
        %2737 = vmatprep.subr.mxu0 0.0
        %2738 = vmatpush1.msra.mxu0 0.0
        %2739 = vmatprep.subr.mxu0 0.0
        %2740 = vmatpush1.msra.mxu0 0.0
        %2741 = vmatprep.subr.mxu0 0.0
        %2742 = vmatpush1.msra.mxu0 0.0
        %2743 = vmatprep.subr.mxu0 0.0
        %2744 = vmatpush1.msra.mxu0 0.0
        %2745 = vmatprep.subr.mxu0 0.0
        %2746 = vmatpush1.msra.mxu0 0.0
        %2747 = vmatprep.subr.mxu0 0.0
        %2748 = vmatpush1.msra.mxu0 0.0
        %2749 = vmatprep.subr.mxu0 0.0
        %2750 = vmatpush1.msra.mxu0 0.0
        %2751 = vmatprep.subr.mxu0 0.0
        %2752 = vmatpush1.msra.mxu0 0.0
        %2753 = vmatprep.subr.mxu0 0.0
        %2754 = vmatpush1.msra.mxu0 0.0
        %2755 = vmatprep.subr.mxu0 0.0
        %2756 = vmatpush1.msra.mxu0 0.0
        %2757 = vmatprep.subr.mxu0 0.0
        %2758 = vmatpush1.msra.mxu0 0.0
        %2759 = vmatprep.subr.mxu0 0.0
        %2760 = vmatpush1.msra.mxu0 0.0
        %2761 = vmatprep.subr.mxu0 0.0
        %2762 = vmatpush1.msra.mxu0 0.0
        %2763 = vmatprep.subr.mxu0 0.0
        %2764 = vmatpush1.msra.mxu0 0.0
        %2765 = vmatprep.subr.mxu0 0.0
        %2766 = vmatpush1.msra.mxu0 0.0
        %2767 = vmatprep.subr.mxu0 0.0
        %2768 = vmatpush1.msra.mxu0 0.0
        %2769 = vmatprep.subr.mxu0 0.0
        %2770 = vmatpush1.msra.mxu0 0.0
        %2771 = vmatprep.subr.mxu0 0.0
        %2772 = vmatpush1.msra.mxu0 0.0
        %2773 = vmatprep.mubr.f32.mxu0 0.0
        %2774 = vmatmul.mubr.f32.gmra.mrb[0].mxu0 %v2704
        %v2775 = vpop.f32.mrb[0].mxu0
        %v2776 = vadd.f32 0.0, %v2775
        %v2777 = vpop.f32.mrb[0].mxu0
        %2778 = vmatprep.mubr.f32.mxu0 0.0
        %2779 = vmatmul.mubr.f32.gmra.mrb[0].mxu0 %v2707
        %v2780 = vpop.f32.mrb[0].mxu0
        %v2781 = vadd.f32 0.0, %v2780
        %v2782 = vpop.f32.mrb[0].mxu0
        %2783 = vdwg.mxu0
        %v2784 = vmul.f32 %v2776, %v2776
        %v2785 = vmul.f32 %v2781, %v2781
        %v2786 = vmul.f32 %v2776, %v2784
        %v2787 = vmul.f32 %v2781, %v2785
        %v2788 = vmul.f32 %v2786, 0.044715
        %v2789 = vmul.f32 %v2787, 0.044715
        %v2790 = vadd.f32 %v2776, %v2788
        %v2791 = vadd.f32 %v2781, %v2789
        %v2792 = vmul.f32 %v2790, 0.7978846
        %v2793 = vmul.f32 %v2791, 0.7978846
        %v2794 = vtanh.pop %v2792
        %v2795 = vtanh.pop %v2793
        %v2796 = vadd.f32 %v2794, 1.0
        %v2797 = vadd.f32 %v2795, 1.0
        %v2798 = vmul.f32 %v2796, 0.5
        %v2799 = vmul.f32 %v2797, 0.5
        %v2800 = vmul.f32 %v2776, %v2798
        %v2801 = vmul.f32 %v2781, %v2799
        %2802 = vst.msk [vmem:[#allocation5] sm:$0xff] %vm612, %v2800
        %2803 = vst.msk [vmem:[#allocation5 + $0x8] sm:$0x7f] %vm2119, %v2801
        %v2804 = vld [vmem:[#allocation5] ss:$2 sm:$0x7f]
        %v2805 = vld [vmem:[%s2476] ss:$2 sm:$0x7f]
        %2807 = vrot.lane.b32.xlu0 %v2805, 32
        %v2808 = vpop.permute.xlu0 %2807
        %v2810 = vsel %vm612, %v2804, %v2808
        %v2811 = vld [vmem:[%s1 + $0x220] sm:$0xff]
        %v2812 = vld [vmem:[%s1 + $0x228] sm:$0xff]
        %v2813 = vld [vmem:[%s1 + $0x230] sm:$0xff]
        %v2814 = vld [vmem:[%s1 + $0x238] sm:$0xff]
        %v2815 = vld [vmem:[%s1 + $0x240] sm:$0xff]
        %v2816 = vld [vmem:[%s1 + $0x248] sm:$0xff]
        %v2817 = vld [vmem:[%s1 + $0x250] sm:$0xff]
        %v2818 = vld [vmem:[%s1 + $0x258] sm:$0xff]
        %v2820 = vsel %vm976, %v2810, 0
        %2822 = vmatprep.subr.mxu0 0.0
        %2823 = vmatpush1.msra.mxu0 %v2811
        %2824 = vmatprep.subr.mxu0 0.0
        %2825 = vmatpush1.msra.mxu0 %v2812
        %2826 = vmatprep.subr.mxu0 0.0
        %2827 = vmatpush1.msra.mxu0 %v2813
        %2828 = vmatprep.subr.mxu0 0.0
        %2829 = vmatpush1.msra.mxu0 %v2814
        %2830 = vmatprep.subr.mxu0 0.0
        %2831 = vmatpush1.msra.mxu0 %v2815
        %2832 = vmatprep.subr.mxu0 0.0
        %2833 = vmatpush1.msra.mxu0 %v2816
        %2834 = vmatprep.subr.mxu0 0.0
        %2835 = vmatpush1.msra.mxu0 %v2817
        %2836 = vmatprep.subr.mxu0 0.0
        %2837 = vmatpush1.msra.mxu0 %v2818
        %2838 = vmatprep.subr.mxu0 0.0
        %2839 = vmatpush1.msra.mxu0 0.0
        %2840 = vmatprep.subr.mxu0 0.0
        %2841 = vmatpush1.msra.mxu0 0.0
        %2842 = vmatprep.subr.mxu0 0.0
        %2843 = vmatpush1.msra.mxu0 0.0
        %2844 = vmatprep.subr.mxu0 0.0
        %2845 = vmatpush1.msra.mxu0 0.0
        %2846 = vmatprep.subr.mxu0 0.0
        %2847 = vmatpush1.msra.mxu0 0.0
        %2848 = vmatprep.subr.mxu0 0.0
        %2849 = vmatpush1.msra.mxu0 0.0
        %2850 = vmatprep.subr.mxu0 0.0
        %2851 = vmatpush1.msra.mxu0 0.0
        %2852 = vmatprep.subr.mxu0 0.0
        %2853 = vmatpush1.msra.mxu0 0.0
        %2854 = vmatprep.subr.mxu0 0.0
        %2855 = vmatpush1.msra.mxu0 0.0
        %2856 = vmatprep.subr.mxu0 0.0
        %2857 = vmatpush1.msra.mxu0 0.0
        %2858 = vmatprep.subr.mxu0 0.0
        %2859 = vmatpush1.msra.mxu0 0.0
        %2860 = vmatprep.subr.mxu0 0.0
        %2861 = vmatpush1.msra.mxu0 0.0
        %2862 = vmatprep.subr.mxu0 0.0
        %2863 = vmatpush1.msra.mxu0 0.0
        %2864 = vmatprep.subr.mxu0 0.0
        %2865 = vmatpush1.msra.mxu0 0.0
        %2866 = vmatprep.subr.mxu0 0.0
        %2867 = vmatpush1.msra.mxu0 0.0
        %2868 = vmatprep.subr.mxu0 0.0
        %2869 = vmatpush1.msra.mxu0 0.0
        %2870 = vmatprep.subr.mxu0 0.0
        %2871 = vmatpush1.msra.mxu0 0.0
        %2872 = vmatprep.subr.mxu0 0.0
        %2873 = vmatpush1.msra.mxu0 0.0
        %2874 = vmatprep.subr.mxu0 0.0
        %2875 = vmatpush1.msra.mxu0 0.0
        %2876 = vmatprep.subr.mxu0 0.0
        %2877 = vmatpush1.msra.mxu0 0.0
        %2878 = vmatprep.subr.mxu0 0.0
        %2879 = vmatpush1.msra.mxu0 0.0
        %2880 = vmatprep.subr.mxu0 0.0
        %2881 = vmatpush1.msra.mxu0 0.0
        %2882 = vmatprep.subr.mxu0 0.0
        %2883 = vmatpush1.msra.mxu0 0.0
        %2884 = vmatprep.subr.mxu0 0.0
        %2885 = vmatpush1.msra.mxu0 0.0
        %2886 = vmatprep.mubr.f32.mxu0 0.0
        %2887 = vmatmul.mubr.f32.gmra.mrb[0].mxu0 %v2820
        %v2888 = vpop.f32.mrb[0].mxu0
        %v2889 = vadd.f32 0.0, %v2888
        %v2890 = vpop.f32.mrb[0].mxu0
        %2891 = vdwg.mxu0
        %v2892 = vmul.f32 %v2889, %v2889
        %v2893 = vmul.f32 %v2889, %v2892
        %v2894 = vmul.f32 %v2893, 0.044715
        %v2895 = vadd.f32 %v2889, %v2894
        %v2896 = vmul.f32 %v2895, 0.7978846
        %v2897 = vtanh.pop %v2896
        %v2898 = vadd.f32 %v2897, 1.0
        %v2899 = vmul.f32 %v2898, 0.5
        %v2900 = vmul.f32 %v2889, %v2899
        %v2901 = vld [vmem:[%s1 + $0x462] sm:$0x1]
        %v2902 = vld [vmem:[%s1 + $0x463] sm:$0x1]
        %v2903 = vsel %vm2119, %v2900, 0.0
        %2904 = vadd.xlane.f32.xlu0 %v2903
        %v2905 = vpop.xlane.xlu0 %2904
        %v2906 = vrcp.pop 32.0
        %v2907 = vmul.f32 %v2905, %v2906
        %v2908 = vsub.f32 %v2900, %v2907
        %v2909 = vmul.f32 %v2908, %v2908
        %v2910 = vsel %vm2119, %v2909, 0.0
        %2911 = vadd.xlane.f32.xlu0 %v2910
        %v2912 = vpop.xlane.xlu0 %2911
        %v2913 = vmul.f32 %v2912, %v2906
        %v2914 = vadd.f32 %v2913, 1e-05
        %v2915 = vrsqrt.pop %v2914
        %v2916 = vmul.f32 %v2908, %v2915
        %v2917 = vlaneseq
        %v2918 = vshrl.u32 %v2917, 7
        %v2919 = vsub.s32 0, %v2918
        %v2920 = vrot.slane %v2901, %v2919
        %v2921 = vmul.f32 %v2916, %v2920
        %v2922 = vlaneseq
        %v2923 = vshrl.u32 %v2922, 7
        %v2924 = vsub.s32 0, %v2923
        %v2925 = vrot.slane %v2902, %v2924
        %v2926 = vadd.f32 %v2921, %v2925
        %v2927 = vld [vmem:[%s1 + $0x260] sm:$0xff]
        %v2928 = vld [vmem:[%s1 + $0x268] sm:$0xff]
        %v2929 = vld [vmem:[%s1 + $0x270] sm:$0xff]
        %v2930 = vld [vmem:[%s1 + $0x278] sm:$0xff]
        %v2931 = vld [vmem:[%s1 + $0x464] sm:$0x1]
        %v2932 = vlaneseq
        %v2933 = vshrl.u32 %v2932, 7
        %v2934 = vsub.s32 0, %v2933
        %v2935 = vrot.slane %v2931, %v2934
        %v2937 = vsel %vm612, %v2926, 0
        %2939 = vmatprep.subr.mxu0 0.0
        %2940 = vmatpush1.msra.mxu0 %v2927
        %2941 = vmatprep.subr.mxu0 0.0
        %2942 = vmatpush1.msra.mxu0 %v2928
        %2943 = vmatprep.subr.mxu0 0.0
        %2944 = vmatpush1.msra.mxu0 %v2929
        %2945 = vmatprep.subr.mxu0 0.0
        %2946 = vmatpush1.msra.mxu0 %v2930
        %2947 = vmatprep.subr.mxu0 0.0
        %2948 = vmatpush1.msra.mxu0 0.0
        %2949 = vmatprep.subr.mxu0 0.0
        %2950 = vmatpush1.msra.mxu0 0.0
        %2951 = vmatprep.subr.mxu0 0.0
        %2952 = vmatpush1.msra.mxu0 0.0
        %2953 = vmatprep.subr.mxu0 0.0
        %2954 = vmatpush1.msra.mxu0 0.0
        %2955 = vmatprep.subr.mxu0 0.0
        %2956 = vmatpush1.msra.mxu0 0.0
        %2957 = vmatprep.subr.mxu0 0.0
        %2958 = vmatpush1.msra.mxu0 0.0
        %2959 = vmatprep.subr.mxu0 0.0
        %2960 = vmatpush1.msra.mxu0 0.0
        %2961 = vmatprep.subr.mxu0 0.0
        %2962 = vmatpush1.msra.mxu0 0.0
        %2963 = vmatprep.subr.mxu0 0.0
        %2964 = vmatpush1.msra.mxu0 0.0
        %2965 = vmatprep.subr.mxu0 0.0
        %2966 = vmatpush1.msra.mxu0 0.0
        %2967 = vmatprep.subr.mxu0 0.0
        %2968 = vmatpush1.msra.mxu0 0.0
        %2969 = vmatprep.subr.mxu0 0.0
        %2970 = vmatpush1.msra.mxu0 0.0
        %2971 = vmatprep.subr.mxu0 0.0
        %2972 = vmatpush1.msra.mxu0 0.0
        %2973 = vmatprep.subr.mxu0 0.0
        %2974 = vmatpush1.msra.mxu0 0.0
        %2975 = vmatprep.subr.mxu0 0.0
        %2976 = vmatpush1.msra.mxu0 0.0
        %2977 = vmatprep.subr.mxu0 0.0
        %2978 = vmatpush1.msra.mxu0 0.0
        %2979 = vmatprep.subr.mxu0 0.0
        %2980 = vmatpush1.msra.mxu0 0.0
        %2981 = vmatprep.subr.mxu0 0.0
        %2982 = vmatpush1.msra.mxu0 0.0
        %2983 = vmatprep.subr.mxu0 0.0
        %2984 = vmatpush1.msra.mxu0 0.0
        %2985 = vmatprep.subr.mxu0 0.0
        %2986 = vmatpush1.msra.mxu0 0.0
        %2987 = vmatprep.subr.mxu0 0.0
        %2988 = vmatpush1.msra.mxu0 0.0
        %2989 = vmatprep.subr.mxu0 0.0
        %2990 = vmatpush1.msra.mxu0 0.0
        %2991 = vmatprep.subr.mxu0 0.0
        %2992 = vmatpush1.msra.mxu0 0.0
        %2993 = vmatprep.subr.mxu0 0.0
        %2994 = vmatpush1.msra.mxu0 0.0
        %2995 = vmatprep.subr.mxu0 0.0
        %2996 = vmatpush1.msra.mxu0 0.0
        %2997 = vmatprep.subr.mxu0 0.0
        %2998 = vmatpush1.msra.mxu0 0.0
        %2999 = vmatprep.subr.mxu0 0.0
        %3000 = vmatpush1.msra.mxu0 0.0
        %3001 = vmatprep.subr.mxu0 0.0
        %3002 = vmatpush1.msra.mxu0 0.0
        %3003 = vmatprep.mubr.f32.mxu0 0.0
        %3004 = vmatmul.mubr.f32.gmra.mrb[0].mxu0 %v2937
        %v3005 = vpop.f32.mrb[0].mxu0
        %v3006 = vadd.f32 %v2935, %v3005
        %v3007 = vpop.f32.mrb[0].mxu0
        %3008 = vdwg.mxu0
        %vm3009 = vcmask 254976
        %3010 = vst.msk [vmem:[#allocation4] sm:$0x3] %vm3009, 0.0
        %3011 = vst.msk [vmem:[#allocation4 + $0x2] sm:$0x7f] %vm2119, %v3006
        %3012 = vst.msk [vmem:[#allocation4 + $0x9] sm:$0x3] %vm3009, 0.0
        %v3013 = vld [vmem:[#allocation4] sm:$0xff]
        %v3014 = vld [vmem:[#allocation4 + $0x1] sm:$0xff]
        %v3015 = vld [vmem:[#allocation4 + $0x2] sm:$0xff]
        %v3016 = vld [vmem:[#allocation4 + $0x3] sm:$0xff]
        %3018 = vrot.lane.b32.xlu0 %v3014, 32
        %v3019 = vpop.permute.xlu0 %3018
        %3022 = vrot.lane.b32.xlu0 %v3015, 64
        %v3023 = vpop.permute.xlu0 %3022
        %3026 = vrot.lane.b32.xlu0 %v3016, 96
        %v3027 = vpop.permute.xlu0 %3026
        %v3029 = vsel %vm612, %v3013, %v3019
        %v3030 = vsel %vm976, %v3029, %v3023
        %v3031 = vsel %vm978, %v3030, %v3027
        %v3032 = vld [vmem:[%s1 + $0x280] sm:$0xff]
        %v3033 = vld [vmem:[%s1 + $0x288] sm:$0xff]
        %v3034 = vld [vmem:[%s1 + $0x290] sm:$0xff]
        %v3035 = vld [vmem:[%s1 + $0x298] sm:$0xff]
        %v3036 = vld [vmem:[%s1 + $0x2a0] sm:$0xff]
        %v3037 = vld [vmem:[%s1 + $0x2a8] sm:$0xff]
        %v3038 = vld [vmem:[%s1 + $0x2b0] sm:$0xff]
        %v3039 = vld [vmem:[%s1 + $0x2b8] sm:$0xff]
        %v3040 = vld [vmem:[%s1 + $0x2c0] sm:$0xff]
        %v3041 = vld [vmem:[%s1 + $0x2c8] sm:$0xff]
        %v3042 = vld [vmem:[%s1 + $0x2d0] sm:$0xff]
        %v3043 = vld [vmem:[%s1 + $0x2d8] sm:$0xff]
        %v3044 = vld [vmem:[%s1 + $0x2e0] sm:$0xff]
        %v3045 = vld [vmem:[%s1 + $0x2e8] sm:$0xff]
        %v3046 = vld [vmem:[%s1 + $0x2f0] sm:$0xff]
        %v3047 = vld [vmem:[%s1 + $0x2f8] sm:$0xff]
        %v3048 = vld [vmem:[%s1 + $0x465] sm:$0x1]
        %v3049 = vlaneseq
        %v3050 = vshrl.u32 %v3049, 7
        %v3051 = vsub.s32 0, %v3050
        %v3052 = vrot.slane %v3048, %v3051
        %3053 = vmatprep.subr.mxu0 0.0
        %3054 = vmatpush1.msra.mxu0 %v3032
        %3055 = vmatprep.subr.mxu0 0.0
        %3056 = vmatpush1.msra.mxu0 %v3033
        %3057 = vmatprep.subr.mxu0 0.0
        %3058 = vmatpush1.msra.mxu0 %v3034
        %3059 = vmatprep.subr.mxu0 0.0
        %3060 = vmatpush1.msra.mxu0 %v3035
        %3061 = vmatprep.subr.mxu0 0.0
        %3062 = vmatpush1.msra.mxu0 %v3036
        %3063 = vmatprep.subr.mxu0 0.0
        %3064 = vmatpush1.msra.mxu0 %v3037
        %3065 = vmatprep.subr.mxu0 0.0
        %3066 = vmatpush1.msra.mxu0 %v3038
        %3067 = vmatprep.subr.mxu0 0.0
        %3068 = vmatpush1.msra.mxu0 %v3039
        %3069 = vmatprep.subr.mxu0 0.0
        %3070 = vmatpush1.msra.mxu0 %v3040
        %3071 = vmatprep.subr.mxu0 0.0
        %3072 = vmatpush1.msra.mxu0 %v3041
        %3073 = vmatprep.subr.mxu0 0.0
        %3074 = vmatpush1.msra.mxu0 %v3042
        %3075 = vmatprep.subr.mxu0 0.0
        %3076 = vmatpush1.msra.mxu0 %v3043
        %3077 = vmatprep.subr.mxu0 0.0
        %3078 = vmatpush1.msra.mxu0 %v3044
        %3079 = vmatprep.subr.mxu0 0.0
        %3080 = vmatpush1.msra.mxu0 %v3045
        %3081 = vmatprep.subr.mxu0 0.0
        %3082 = vmatpush1.msra.mxu0 %v3046
        %3083 = vmatprep.subr.mxu0 0.0
        %3084 = vmatpush1.msra.mxu0 %v3047
        %3085 = vmatprep.subr.mxu0 0.0
        %3086 = vmatpush1.msra.mxu0 0.0
        %3087 = vmatprep.subr.mxu0 0.0
        %3088 = vmatpush1.msra.mxu0 0.0
        %3089 = vmatprep.subr.mxu0 0.0
        %3090 = vmatpush1.msra.mxu0 0.0
        %3091 = vmatprep.subr.mxu0 0.0
        %3092 = vmatpush1.msra.mxu0 0.0
        %3093 = vmatprep.subr.mxu0 0.0
        %3094 = vmatpush1.msra.mxu0 0.0
        %3095 = vmatprep.subr.mxu0 0.0
        %3096 = vmatpush1.msra.mxu0 0.0
        %3097 = vmatprep.subr.mxu0 0.0
        %3098 = vmatpush1.msra.mxu0 0.0
        %3099 = vmatprep.subr.mxu0 0.0
        %3100 = vmatpush1.msra.mxu0 0.0
        %3101 = vmatprep.subr.mxu0 0.0
        %3102 = vmatpush1.msra.mxu0 0.0
        %3103 = vmatprep.subr.mxu0 0.0
        %3104 = vmatpush1.msra.mxu0 0.0
        %3105 = vmatprep.subr.mxu0 0.0
        %3106 = vmatpush1.msra.mxu0 0.0
        %3107 = vmatprep.subr.mxu0 0.0
        %3108 = vmatpush1.msra.mxu0 0.0
        %3109 = vmatprep.subr.mxu0 0.0
        %3110 = vmatpush1.msra.mxu0 0.0
        %3111 = vmatprep.subr.mxu0 0.0
        %3112 = vmatpush1.msra.mxu0 0.0
        %3113 = vmatprep.subr.mxu0 0.0
        %3114 = vmatpush1.msra.mxu0 0.0
        %3115 = vmatprep.subr.mxu0 0.0
        %3116 = vmatpush1.msra.mxu0 0.0
        %3117 = vmatprep.mubr.f32.mxu0 0.0
        %3118 = vmatmul.mubr.f32.gmra.mrb[0].mxu0 %v3031
        %v3119 = vpop.f32.mrb[0].mxu0
        %v3120 = vadd.f32 %v3052, %v3119
        %v3121 = vpop.f32.mrb[0].mxu0
        %3122 = vdwg.mxu0
        %v3123 = vmul.f32 %v3120, %v3120
        %v3124 = vmul.f32 %v3120, %v3123
        %v3125 = vmul.f32 %v3124, 0.044715
        %v3126 = vadd.f32 %v3120, %v3125
        %v3127 = vmul.f32 %v3126, 0.7978846
        %v3128 = vtanh.pop %v3127
        %v3129 = vadd.f32 %v3128, 1.0
        %v3130 = vmul.f32 %v3129, 0.5
        %v3131 = vmul.f32 %v3120, %v3130
        %v3132 = vadd.f32 %v3006, %v3131
        %v3133 = vld [vmem:[%s1 + $0x466] sm:$0x1]
        %v3134 = vld [vmem:[%s1 + $0x467] sm:$0x1]
        %v3135 = vsel %vm2119, %v3132, 0.0
        %3136 = vadd.xlane.f32.xlu0 %v3135
        %v3137 = vpop.xlane.xlu0 %3136
        %v3138 = vmul.f32 %v3137, %v2906
        %v3139 = vsub.f32 %v3132, %v3138
        %v3140 = vmul.f32 %v3139, %v3139
        %v3141 = vsel %vm2119, %v3140, 0.0
        %3142 = vadd.xlane.f32.xlu0 %v3141
        %v3143 = vpop.xlane.xlu0 %3142
        %v3144 = vmul.f32 %v3143, %v2906
        %v3145 = vadd.f32 %v3144, 1e-05
        %v3146 = vrsqrt.pop %v3145
        %v3147 = vmul.f32 %v3139, %v3146
        %v3148 = vlaneseq
        %v3149 = vshrl.u32 %v3148, 7
        %v3150 = vsub.s32 0, %v3149
        %v3151 = vrot.slane %v3133, %v3150
        %v3152 = vmul.f32 %v3147, %v3151
        %v3153 = vlaneseq
        %v3154 = vshrl.u32 %v3153, 7
        %v3155 = vsub.s32 0, %v3154
        %v3156 = vrot.slane %v3134, %v3155
        %v3157 = vadd.f32 %v3152, %v3156
        %v3158 = vld [vmem:[%s1 + $0x300] sm:$0xff]
        %v3159 = vld [vmem:[%s1 + $0x308] sm:$0xff]
        %v3160 = vld [vmem:[%s1 + $0x310] sm:$0xff]
        %v3161 = vld [vmem:[%s1 + $0x318] sm:$0xff]
        %v3162 = vld [vmem:[%s1 + $0x468] sm:$0x1]
        %v3163 = vlaneseq
        %v3164 = vshrl.u32 %v3163, 7
        %v3165 = vsub.s32 0, %v3164
        %v3166 = vrot.slane %v3162, %v3165
        %v3168 = vsel %vm612, %v3157, 0
        %3170 = vmatprep.subr.mxu0 0.0
        %3171 = vmatpush1.msra.mxu0 %v3158
        %3172 = vmatprep.subr.mxu0 0.0
        %3173 = vmatpush1.msra.mxu0 %v3159
        %3174 = vmatprep.subr.mxu0 0.0
        %3175 = vmatpush1.msra.mxu0 %v3160
        %3176 = vmatprep.subr.mxu0 0.0
        %3177 = vmatpush1.msra.mxu0 %v3161
        %3178 = vmatprep.subr.mxu0 0.0
        %3179 = vmatpush1.msra.mxu0 0.0
        %3180 = vmatprep.subr.mxu0 0.0
        %3181 = vmatpush1.msra.mxu0 0.0
        %3182 = vmatprep.subr.mxu0 0.0
        %3183 = vmatpush1.msra.mxu0 0.0
        %3184 = vmatprep.subr.mxu0 0.0
        %3185 = vmatpush1.msra.mxu0 0.0
        %3186 = vmatprep.subr.mxu0 0.0
        %3187 = vmatpush1.msra.mxu0 0.0
        %3188 = vmatprep.subr.mxu0 0.0
        %3189 = vmatpush1.msra.mxu0 0.0
        %3190 = vmatprep.subr.mxu0 0.0
        %3191 = vmatpush1.msra.mxu0 0.0
        %3192 = vmatprep.subr.mxu0 0.0
        %3193 = vmatpush1.msra.mxu0 0.0
        %3194 = vmatprep.subr.mxu0 0.0
        %3195 = vmatpush1.msra.mxu0 0.0
        %3196 = vmatprep.subr.mxu0 0.0
        %3197 = vmatpush1.msra.mxu0 0.0
        %3198 = vmatprep.subr.mxu0 0.0
        %3199 = vmatpush1.msra.mxu0 0.0
        %3200 = vmatprep.subr.mxu0 0.0
        %3201 = vmatpush1.msra.mxu0 0.0
        %3202 = vmatprep.subr.mxu0 0.0
        %3203 = vmatpush1.msra.mxu0 0.0
        %3204 = vmatprep.subr.mxu0 0.0
        %3205 = vmatpush1.msra.mxu0 0.0
        %3206 = vmatprep.subr.mxu0 0.0
        %3207 = vmatpush1.msra.mxu0 0.0
        %3208 = vmatprep.subr.mxu0 0.0
        %3209 = vmatpush1.msra.mxu0 0.0
        %3210 = vmatprep.subr.mxu0 0.0
        %3211 = vmatpush1.msra.mxu0 0.0
        %3212 = vmatprep.subr.mxu0 0.0
        %3213 = vmatpush1.msra.mxu0 0.0
        %3214 = vmatprep.subr.mxu0 0.0
        %3215 = vmatpush1.msra.mxu0 0.0
        %3216 = vmatprep.subr.mxu0 0.0
        %3217 = vmatpush1.msra.mxu0 0.0
        %3218 = vmatprep.subr.mxu0 0.0
        %3219 = vmatpush1.msra.mxu0 0.0
        %3220 = vmatprep.subr.mxu0 0.0
        %3221 = vmatpush1.msra.mxu0 0.0
        %3222 = vmatprep.subr.mxu0 0.0
        %3223 = vmatpush1.msra.mxu0 0.0
        %3224 = vmatprep.subr.mxu0 0.0
        %3225 = vmatpush1.msra.mxu0 0.0
        %3226 = vmatprep.subr.mxu0 0.0
        %3227 = vmatpush1.msra.mxu0 0.0
        %3228 = vmatprep.subr.mxu0 0.0
        %3229 = vmatpush1.msra.mxu0 0.0
        %3230 = vmatprep.subr.mxu0 0.0
        %3231 = vmatpush1.msra.mxu0 0.0
        %3232 = vmatprep.subr.mxu0 0.0
        %3233 = vmatpush1.msra.mxu0 0.0
        %3234 = vmatprep.mubr.f32.mxu0 0.0
        %3235 = vmatmul.mubr.f32.gmra.mrb[0].mxu0 %v3168
        %v3236 = vpop.f32.mrb[0].mxu0
        %v3237 = vadd.f32 %v3166, %v3236
        %v3238 = vpop.f32.mrb[0].mxu0
        %3239 = vdwg.mxu0
        %v3240 = vmul.f32 %v3237, 0.25
        %3242 = vrot.lane.b32.xlu0 %v3237, 96
        %v3243 = vpop.permute.xlu0 %3242
        %vm3244 = vcmask 130048
        %v3246 = vsel %vm3244, %v3240, 0
        %v3248 = vsel %vm3244, %v3243, 0
        %3250 = vmatprep.subr.mxu0 0.0
        %3251 = vmatpush1.xpose.msra.mxu0 %v3248
        %3252 = vmatprep.subr.mxu0 0.0
        %3253 = vmatpush1.xpose.msra.mxu0 0.0
        %3254 = vmatprep.subr.mxu0 0.0
        %3255 = vmatpush1.xpose.msra.mxu0 0.0
        %3256 = vmatprep.subr.mxu0 0.0
        %3257 = vmatpush1.xpose.msra.mxu0 0.0
        %3258 = vmatprep.subr.mxu0 0.0
        %3259 = vmatpush1.xpose.msra.mxu0 0.0
        %3260 = vmatprep.subr.mxu0 0.0
        %3261 = vmatpush1.xpose.msra.mxu0 0.0
        %3262 = vmatprep.subr.mxu0 0.0
        %3263 = vmatpush1.xpose.msra.mxu0 0.0
        %3264 = vmatprep.subr.mxu0 0.0
        %3265 = vmatpush1.xpose.msra.mxu0 0.0
        %3266 = vmatprep.subr.mxu0 0.0
        %3267 = vmatpush1.xpose.msra.mxu0 0.0
        %3268 = vmatprep.subr.mxu0 0.0
        %3269 = vmatpush1.xpose.msra.mxu0 0.0
        %3270 = vmatprep.subr.mxu0 0.0
        %3271 = vmatpush1.xpose.msra.mxu0 0.0
        %3272 = vmatprep.subr.mxu0 0.0
        %3273 = vmatpush1.xpose.msra.mxu0 0.0
        %3274 = vmatprep.subr.mxu0 0.0
        %3275 = vmatpush1.xpose.msra.mxu0 0.0
        %3276 = vmatprep.subr.mxu0 0.0
        %3277 = vmatpush1.xpose.msra.mxu0 0.0
        %3278 = vmatprep.subr.mxu0 0.0
        %3279 = vmatpush1.xpose.msra.mxu0 0.0
        %3280 = vmatprep.subr.mxu0 0.0
        %3281 = vmatpush1.xpose.msra.mxu0 0.0
        %3282 = vmatprep.subr.mxu0 0.0
        %3283 = vmatpush1.xpose.msra.mxu0 0.0
        %3284 = vmatprep.subr.mxu0 0.0
        %3285 = vmatpush1.xpose.msra.mxu0 0.0
        %3286 = vmatprep.subr.mxu0 0.0
        %3287 = vmatpush1.xpose.msra.mxu0 0.0
        %3288 = vmatprep.subr.mxu0 0.0
        %3289 = vmatpush1.xpose.msra.mxu0 0.0
        %3290 = vmatprep.subr.mxu0 0.0
        %3291 = vmatpush1.xpose.msra.mxu0 0.0
        %3292 = vmatprep.subr.mxu0 0.0
        %3293 = vmatpush1.xpose.msra.mxu0 0.0
        %3294 = vmatprep.subr.mxu0 0.0
        %3295 = vmatpush1.xpose.msra.mxu0 0.0
        %3296 = vmatprep.subr.mxu0 0.0
        %3297 = vmatpush1.xpose.msra.mxu0 0.0
        %3298 = vmatprep.subr.mxu0 0.0
        %3299 = vmatpush1.xpose.msra.mxu0 0.0
        %3300 = vmatprep.subr.mxu0 0.0
        %3301 = vmatpush1.xpose.msra.mxu0 0.0
        %3302 = vmatprep.subr.mxu0 0.0
        %3303 = vmatpush1.xpose.msra.mxu0 0.0
        %3304 = vmatprep.subr.mxu0 0.0
        %3305 = vmatpush1.xpose.msra.mxu0 0.0
        %3306 = vmatprep.subr.mxu0 0.0
        %3307 = vmatpush1.xpose.msra.mxu0 0.0
        %3308 = vmatprep.subr.mxu0 0.0
        %3309 = vmatpush1.xpose.msra.mxu0 0.0
        %3310 = vmatprep.subr.mxu0 0.0
        %3311 = vmatpush1.xpose.msra.mxu0 0.0
        %3312 = vmatprep.subr.mxu0 0.0
        %3313 = vmatpush1.xpose.msra.mxu0 0.0
        %3314 = vmatprep.mubr.f32.mxu0 0.0
        %3315 = vmatmul.mubr.f32.gmra.mrb[0].mxu0 %v3246
        %v3316 = vpop.f32.mrb[0].mxu0
        %v3317 = vadd.f32 0.0, %v3316
        %v3318 = vpop.f32.mrb[0].mxu0
        %3319 = vdwg.mxu0
        %vm3320 = vcmask 55296
        %v3321 = vsel %vm3320, %v3317, -inf
        %3322 = vmax.xlane.f32.xlu0 %v3321
        %v3323 = vpop.xlane.xlu0 %3322
        %v3324 = vsub.f32 %v3317, %v3323
        %v3325 = vmul.f32 %v3324, 1.442695
        %v3326 = vpow.pop %v3325
        %v3327 = vsel %vm3320, %v3326, 0.0
        %3328 = vadd.xlane.f32.xlu0 %v3327
        %v3329 = vpop.xlane.xlu0 %3328
        %v3330 = vrcp.pop %v3329
        %v3331 = vmul.f32 %v3326, %v3330
        %3332 = vrot.lane.b32.xlu0 %v3237, 64
        %v3333 = vpop.permute.xlu0 %3332
        %vm3334 = vcmask 56320
        %v3336 = vsel %vm3334, %v3331, 0
        %vm3338 = vcmask 1046528
        %v3339 = vsel %vm3338, %v3333, 0
        %3341 = vmatprep.subr.mxu0 0.0
        %3342 = vmatpush1.msra.mxu0 %v3339
        %3343 = vmatprep.subr.mxu0 0.0
        %3344 = vmatpush1.msra.mxu0 0.0
        %3345 = vmatprep.subr.mxu0 0.0
        %3346 = vmatpush1.msra.mxu0 0.0
        %3347 = vmatprep.subr.mxu0 0.0
        %3348 = vmatpush1.msra.mxu0 0.0
        %3349 = vmatprep.subr.mxu0 0.0
        %3350 = vmatpush1.msra.mxu0 0.0
        %3351 = vmatprep.subr.mxu0 0.0
        %3352 = vmatpush1.msra.mxu0 0.0
        %3353 = vmatprep.subr.mxu0 0.0
        %3354 = vmatpush1.msra.mxu0 0.0
        %3355 = vmatprep.subr.mxu0 0.0
        %3356 = vmatpush1.msra.mxu0 0.0
        %3357 = vmatprep.subr.mxu0 0.0
        %3358 = vmatpush1.msra.mxu0 0.0
        %3359 = vmatprep.subr.mxu0 0.0
        %3360 = vmatpush1.msra.mxu0 0.0
        %3361 = vmatprep.subr.mxu0 0.0
        %3362 = vmatpush1.msra.mxu0 0.0
        %3363 = vmatprep.subr.mxu0 0.0
        %3364 = vmatpush1.msra.mxu0 0.0
        %3365 = vmatprep.subr.mxu0 0.0
        %3366 = vmatpush1.msra.mxu0 0.0
        %3367 = vmatprep.subr.mxu0 0.0
        %3368 = vmatpush1.msra.mxu0 0.0
        %3369 = vmatprep.subr.mxu0 0.0
        %3370 = vmatpush1.msra.mxu0 0.0
        %3371 = vmatprep.subr.mxu0 0.0
        %3372 = vmatpush1.msra.mxu0 0.0
        %3373 = vmatprep.subr.mxu0 0.0
        %3374 = vmatpush1.msra.mxu0 0.0
        %3375 = vmatprep.subr.mxu0 0.0
        %3376 = vmatpush1.msra.mxu0 0.0
        %3377 = vmatprep.subr.mxu0 0.0
        %3378 = vmatpush1.msra.mxu0 0.0
        %3379 = vmatprep.subr.mxu0 0.0
        %3380 = vmatpush1.msra.mxu0 0.0
        %3381 = vmatprep.subr.mxu0 0.0
        %3382 = vmatpush1.msra.mxu0 0.0
        %3383 = vmatprep.subr.mxu0 0.0
        %3384 = vmatpush1.msra.mxu0 0.0
        %3385 = vmatprep.subr.mxu0 0.0
        %3386 = vmatpush1.msra.mxu0 0.0
        %3387 = vmatprep.subr.mxu0 0.0
        %3388 = vmatpush1.msra.mxu0 0.0
        %3389 = vmatprep.subr.mxu0 0.0
        %3390 = vmatpush1.msra.mxu0 0.0
        %3391 = vmatprep.subr.mxu0 0.0
        %3392 = vmatpush1.msra.mxu0 0.0
        %3393 = vmatprep.subr.mxu0 0.0
        %3394 = vmatpush1.msra.mxu0 0.0
        %3395 = vmatprep.subr.mxu0 0.0
        %3396 = vmatpush1.msra.mxu0 0.0
        %3397 = vmatprep.subr.mxu0 0.0
        %3398 = vmatpush1.msra.mxu0 0.0
        %3399 = vmatprep.subr.mxu0 0.0
        %3400 = vmatpush1.msra.mxu0 0.0
        %3401 = vmatprep.subr.mxu0 0.0
        %3402 = vmatpush1.msra.mxu0 0.0
        %3403 = vmatprep.subr.mxu0 0.0
        %3404 = vmatpush1.msra.mxu0 0.0
        %3405 = vmatprep.mubr.f32.mxu0 0.0
        %3406 = vmatmul.mubr.f32.gmra.mrb[0].mxu0 %v3336
        %v3407 = vpop.f32.mrb[0].mxu0
        %v3408 = vadd.f32 0.0, %v3407
        %v3409 = vpop.f32.mrb[0].mxu0
        %3410 = vdwg.mxu0
        %3411 = vrot.lane.b32.xlu0 %v3240, 112
        %v3412 = vpop.permute.xlu0 %3411
        %3413 = vrot.lane.b32.xlu0 %v3237, 80
        %v3414 = vpop.permute.xlu0 %3413
        %v3415 = vsel %vm3244, %v3412, 0
        %v3417 = vsel %vm3244, %v3414, 0
        %3419 = vmatprep.subr.mxu0 0.0
        %3420 = vmatpush1.xpose.msra.mxu0 %v3417
        %3421 = vmatprep.subr.mxu0 0.0
        %3422 = vmatpush1.xpose.msra.mxu0 0.0
        %3423 = vmatprep.subr.mxu0 0.0
        %3424 = vmatpush1.xpose.msra.mxu0 0.0
        %3425 = vmatprep.subr.mxu0 0.0
        %3426 = vmatpush1.xpose.msra.mxu0 0.0
        %3427 = vmatprep.subr.mxu0 0.0
        %3428 = vmatpush1.xpose.msra.mxu0 0.0
        %3429 = vmatprep.subr.mxu0 0.0
        %3430 = vmatpush1.xpose.msra.mxu0 0.0
        %3431 = vmatprep.subr.mxu0 0.0
        %3432 = vmatpush1.xpose.msra.mxu0 0.0
        %3433 = vmatprep.subr.mxu0 0.0
        %3434 = vmatpush1.xpose.msra.mxu0 0.0
        %3435 = vmatprep.subr.mxu0 0.0
        %3436 = vmatpush1.xpose.msra.mxu0 0.0
        %3437 = vmatprep.subr.mxu0 0.0
        %3438 = vmatpush1.xpose.msra.mxu0 0.0
        %3439 = vmatprep.subr.mxu0 0.0
        %3440 = vmatpush1.xpose.msra.mxu0 0.0
        %3441 = vmatprep.subr.mxu0 0.0
        %3442 = vmatpush1.xpose.msra.mxu0 0.0
        %3443 = vmatprep.subr.mxu0 0.0
        %3444 = vmatpush1.xpose.msra.mxu0 0.0
        %3445 = vmatprep.subr.mxu0 0.0
        %3446 = vmatpush1.xpose.msra.mxu0 0.0
        %3447 = vmatprep.subr.mxu0 0.0
        %3448 = vmatpush1.xpose.msra.mxu0 0.0
        %3449 = vmatprep.subr.mxu0 0.0
        %3450 = vmatpush1.xpose.msra.mxu0 0.0
        %3451 = vmatprep.subr.mxu0 0.0
        %3452 = vmatpush1.xpose.msra.mxu0 0.0
        %3453 = vmatprep.subr.mxu0 0.0
        %3454 = vmatpush1.xpose.msra.mxu0 0.0
        %3455 = vmatprep.subr.mxu0 0.0
        %3456 = vmatpush1.xpose.msra.mxu0 0.0
        %3457 = vmatprep.subr.mxu0 0.0
        %3458 = vmatpush1.xpose.msra.mxu0 0.0
        %3459 = vmatprep.subr.mxu0 0.0
        %3460 = vmatpush1.xpose.msra.mxu0 0.0
        %3461 = vmatprep.subr.mxu0 0.0
        %3462 = vmatpush1.xpose.msra.mxu0 0.0
        %3463 = vmatprep.subr.mxu0 0.0
        %3464 = vmatpush1.xpose.msra.mxu0 0.0
        %3465 = vmatprep.subr.mxu0 0.0
        %3466 = vmatpush1.xpose.msra.mxu0 0.0
        %3467 = vmatprep.subr.mxu0 0.0
        %3468 = vmatpush1.xpose.msra.mxu0 0.0
        %3469 = vmatprep.subr.mxu0 0.0
        %3470 = vmatpush1.xpose.msra.mxu0 0.0
        %3471 = vmatprep.subr.mxu0 0.0
        %3472 = vmatpush1.xpose.msra.mxu0 0.0
        %3473 = vmatprep.subr.mxu0 0.0
        %3474 = vmatpush1.xpose.msra.mxu0 0.0
        %3475 = vmatprep.subr.mxu0 0.0
        %3476 = vmatpush1.xpose.msra.mxu0 0.0
        %3477 = vmatprep.subr.mxu0 0.0
        %3478 = vmatpush1.xpose.msra.mxu0 0.0
        %3479 = vmatprep.subr.mxu0 0.0
        %3480 = vmatpush1.xpose.msra.mxu0 0.0
        %3481 = vmatprep.subr.mxu0 0.0
        %3482 = vmatpush1.xpose.msra.mxu0 0.0
        %3483 = vmatprep.mubr.f32.mxu0 0.0
        %3484 = vmatmul.mubr.f32.gmra.mrb[0].mxu0 %v3415
        %v3485 = vpop.f32.mrb[0].mxu0
        %v3486 = vadd.f32 0.0, %v3485
        %v3487 = vpop.f32.mrb[0].mxu0
        %3488 = vdwg.mxu0
        %v3489 = vsel %vm3320, %v3486, -inf
        %3490 = vmax.xlane.f32.xlu0 %v3489
        %v3491 = vpop.xlane.xlu0 %3490
        %v3492 = vsub.f32 %v3486, %v3491
        %v3493 = vmul.f32 %v3492, 1.442695
        %v3494 = vpow.pop %v3493
        %v3495 = vsel %vm3320, %v3494, 0.0
        %3496 = vadd.xlane.f32.xlu0 %v3495
        %v3497 = vpop.xlane.xlu0 %3496
        %v3498 = vrcp.pop %v3497
        %v3499 = vmul.f32 %v3494, %v3498
        %3500 = vrot.lane.b32.xlu0 %v3237, 48
        %v3501 = vpop.permute.xlu0 %3500
        %v3503 = vsel %vm3334, %v3499, 0
        %v3505 = vsel %vm3338, %v3501, 0
        %3507 = vmatprep.subr.mxu0 0.0
        %3508 = vmatpush1.msra.mxu0 %v3505
        %3509 = vmatprep.subr.mxu0 0.0
        %3510 = vmatpush1.msra.mxu0 0.0
        %3511 = vmatprep.subr.mxu0 0.0
        %3512 = vmatpush1.msra.mxu0 0.0
        %3513 = vmatprep.subr.mxu0 0.0
        %3514 = vmatpush1.msra.mxu0 0.0
        %3515 = vmatprep.subr.mxu0 0.0
        %3516 = vmatpush1.msra.mxu0 0.0
        %3517 = vmatprep.subr.mxu0 0.0
        %3518 = vmatpush1.msra.mxu0 0.0
        %3519 = vmatprep.subr.mxu0 0.0
        %3520 = vmatpush1.msra.mxu0 0.0
        %3521 = vmatprep.subr.mxu0 0.0
        %3522 = vmatpush1.msra.mxu0 0.0
        %3523 = vmatprep.subr.mxu0 0.0
        %3524 = vmatpush1.msra.mxu0 0.0
        %3525 = vmatprep.subr.mxu0 0.0
        %3526 = vmatpush1.msra.mxu0 0.0
        %3527 = vmatprep.subr.mxu0 0.0
        %3528 = vmatpush1.msra.mxu0 0.0
        %3529 = vmatprep.subr.mxu0 0.0
        %3530 = vmatpush1.msra.mxu0 0.0
        %3531 = vmatprep.subr.mxu0 0.0
        %3532 = vmatpush1.msra.mxu0 0.0
        %3533 = vmatprep.subr.mxu0 0.0
        %3534 = vmatpush1.msra.mxu0 0.0
        %3535 = vmatprep.subr.mxu0 0.0
        %3536 = vmatpush1.msra.mxu0 0.0
        %3537 = vmatprep.subr.mxu0 0.0
        %3538 = vmatpush1.msra.mxu0 0.0
        %3539 = vmatprep.subr.mxu0 0.0
        %3540 = vmatpush1.msra.mxu0 0.0
        %3541 = vmatprep.subr.mxu0 0.0
        %3542 = vmatpush1.msra.mxu0 0.0
        %3543 = vmatprep.subr.mxu0 0.0
        %3544 = vmatpush1.msra.mxu0 0.0
        %3545 = vmatprep.subr.mxu0 0.0
        %3546 = vmatpush1.msra.mxu0 0.0
        %3547 = vmatprep.subr.mxu0 0.0
        %3548 = vmatpush1.msra.mxu0 0.0
        %3549 = vmatprep.subr.mxu0 0.0
        %3550 = vmatpush1.msra.mxu0 0.0
        %3551 = vmatprep.subr.mxu0 0.0
        %3552 = vmatpush1.msra.mxu0 0.0
        %3553 = vmatprep.subr.mxu0 0.0
        %3554 = vmatpush1.msra.mxu0 0.0
        %3555 = vmatprep.subr.mxu0 0.0
        %3556 = vmatpush1.msra.mxu0 0.0
        %3557 = vmatprep.subr.mxu0 0.0
        %3558 = vmatpush1.msra.mxu0 0.0
        %3559 = vmatprep.subr.mxu0 0.0
        %3560 = vmatpush1.msra.mxu0 0.0
        %3561 = vmatprep.subr.mxu0 0.0
        %3562 = vmatpush1.msra.mxu0 0.0
        %3563 = vmatprep.subr.mxu0 0.0
        %3564 = vmatpush1.msra.mxu0 0.0
        %3565 = vmatprep.subr.mxu0 0.0
        %3566 = vmatpush1.msra.mxu0 0.0
        %3567 = vmatprep.subr.mxu0 0.0
        %3568 = vmatpush1.msra.mxu0 0.0
        %3569 = vmatprep.subr.mxu0 0.0
        %3570 = vmatpush1.msra.mxu0 0.0
        %3571 = vmatprep.mubr.f32.mxu0 0.0
        %3572 = vmatmul.mubr.f32.gmra.mrb[0].mxu0 %v3503
        %v3573 = vpop.f32.mrb[0].mxu0
        %v3574 = vadd.f32 0.0, %v3573
        %v3575 = vpop.f32.mrb[0].mxu0
        %3576 = vdwg.mxu0
        %3578 = vrot.lane.b32.xlu0 %v3574, 16
        %v3579 = vpop.permute.xlu0 %3578
        %v3581 = vsel %vm3244, %v3408, %v3579
        %v3582 = vld [vmem:[%s1 + $0x320] sm:$0xff]
        %v3583 = vld [vmem:[%s1 + $0x328] sm:$0xff]
        %v3584 = vld [vmem:[%s1 + $0x330] sm:$0xff]
        %v3585 = vld [vmem:[%s1 + $0x338] sm:$0xff]
        %v3586 = vld [vmem:[%s1 + $0x469] sm:$0x1]
        %v3587 = vlaneseq
        %v3588 = vshrl.u32 %v3587, 7
        %v3589 = vsub.s32 0, %v3588
        %v3590 = vrot.slane %v3586, %v3589
        %v3592 = vsel %vm612, %v3581, 0
        %3594 = vmatprep.subr.mxu0 0.0
        %3595 = vmatpush1.msra.mxu0 %v3582
        %3596 = vmatprep.subr.mxu0 0.0
        %3597 = vmatpush1.msra.mxu0 %v3583
        %3598 = vmatprep.subr.mxu0 0.0
        %3599 = vmatpush1.msra.mxu0 %v3584
        %3600 = vmatprep.subr.mxu0 0.0
        %3601 = vmatpush1.msra.mxu0 %v3585
        %3602 = vmatprep.subr.mxu0 0.0
        %3603 = vmatpush1.msra.mxu0 0.0
        %3604 = vmatprep.subr.mxu0 0.0
        %3605 = vmatpush1.msra.mxu0 0.0
        %3606 = vmatprep.subr.mxu0 0.0
        %3607 = vmatpush1.msra.mxu0 0.0
        %3608 = vmatprep.subr.mxu0 0.0
        %3609 = vmatpush1.msra.mxu0 0.0
        %3610 = vmatprep.subr.mxu0 0.0
        %3611 = vmatpush1.msra.mxu0 0.0
        %3612 = vmatprep.subr.mxu0 0.0
        %3613 = vmatpush1.msra.mxu0 0.0
        %3614 = vmatprep.subr.mxu0 0.0
        %3615 = vmatpush1.msra.mxu0 0.0
        %3616 = vmatprep.subr.mxu0 0.0
        %3617 = vmatpush1.msra.mxu0 0.0
        %3618 = vmatprep.subr.mxu0 0.0
        %3619 = vmatpush1.msra.mxu0 0.0
        %3620 = vmatprep.subr.mxu0 0.0
        %3621 = vmatpush1.msra.mxu0 0.0
        %3622 = vmatprep.subr.mxu0 0.0
        %3623 = vmatpush1.msra.mxu0 0.0
        %3624 = vmatprep.subr.mxu0 0.0
        %3625 = vmatpush1.msra.mxu0 0.0
        %3626 = vmatprep.subr.mxu0 0.0
        %3627 = vmatpush1.msra.mxu0 0.0
        %3628 = vmatprep.subr.mxu0 0.0
        %3629 = vmatpush1.msra.mxu0 0.0
        %3630 = vmatprep.subr.mxu0 0.0
        %3631 = vmatpush1.msra.mxu0 0.0
        %3632 = vmatprep.subr.mxu0 0.0
        %3633 = vmatpush1.msra.mxu0 0.0
        %3634 = vmatprep.subr.mxu0 0.0
        %3635 = vmatpush1.msra.mxu0 0.0
        %3636 = vmatprep.subr.mxu0 0.0
        %3637 = vmatpush1.msra.mxu0 0.0
        %3638 = vmatprep.subr.mxu0 0.0
        %3639 = vmatpush1.msra.mxu0 0.0
        %3640 = vmatprep.subr.mxu0 0.0
        %3641 = vmatpush1.msra.mxu0 0.0
        %3642 = vmatprep.subr.mxu0 0.0
        %3643 = vmatpush1.msra.mxu0 0.0
        %3644 = vmatprep.subr.mxu0 0.0
        %3645 = vmatpush1.msra.mxu0 0.0
        %3646 = vmatprep.subr.mxu0 0.0
        %3647 = vmatpush1.msra.mxu0 0.0
        %3648 = vmatprep.subr.mxu0 0.0
        %3649 = vmatpush1.msra.mxu0 0.0
        %3650 = vmatprep.subr.mxu0 0.0
        %3651 = vmatpush1.msra.mxu0 0.0
        %3652 = vmatprep.subr.mxu0 0.0
        %3653 = vmatpush1.msra.mxu0 0.0
        %3654 = vmatprep.subr.mxu0 0.0
        %3655 = vmatpush1.msra.mxu0 0.0
        %3656 = vmatprep.subr.mxu0 0.0
        %3657 = vmatpush1.msra.mxu0 0.0
        %3658 = vmatprep.mubr.f32.mxu0 0.0
        %3659 = vmatmul.mubr.f32.gmra.mrb[0].mxu0 %v3592
        %v3660 = vpop.f32.mrb[0].mxu0
        %v3661 = vadd.f32 %v3590, %v3660
        %v3662 = vpop.f32.mrb[0].mxu0
        %3663 = vdwg.mxu0
        %v3664 = vadd.f32 %v3157, %v3661
        %v3665 = vld [vmem:[%s1 + $0x46a] sm:$0x1]
        %v3666 = vld [vmem:[%s1 + $0x46b] sm:$0x1]
        %v3667 = vsel %vm2119, %v3664, 0.0
        %3668 = vadd.xlane.f32.xlu0 %v3667
        %v3669 = vpop.xlane.xlu0 %3668
        %v3670 = vmul.f32 %v3669, %v2906
        %v3671 = vsub.f32 %v3664, %v3670
        %v3672 = vmul.f32 %v3671, %v3671
        %v3673 = vsel %vm2119, %v3672, 0.0
        %3674 = vadd.xlane.f32.xlu0 %v3673
        %v3675 = vpop.xlane.xlu0 %3674
        %v3676 = vmul.f32 %v3675, %v2906
        %v3677 = vadd.f32 %v3676, 1e-05
        %v3678 = vrsqrt.pop %v3677
        %v3679 = vmul.f32 %v3671, %v3678
        %v3680 = vlaneseq
        %v3681 = vshrl.u32 %v3680, 7
        %v3682 = vsub.s32 0, %v3681
        %v3683 = vrot.slane %v3665, %v3682
        %v3684 = vmul.f32 %v3679, %v3683
        %v3685 = vlaneseq
        %v3686 = vshrl.u32 %v3685, 7
        %v3687 = vsub.s32 0, %v3686
        %v3688 = vrot.slane %v3666, %v3687
        %v3689 = vadd.f32 %v3684, %v3688
        %v3690 = vld [vmem:[%s1 + $0x340] sm:$0xff]
        %v3691 = vld [vmem:[%s1 + $0x348] sm:$0xff]
        %v3692 = vld [vmem:[%s1 + $0x350] sm:$0xff]
        %v3693 = vld [vmem:[%s1 + $0x358] sm:$0xff]
        %v3694 = vld [vmem:[%s1 + $0x46c] sm:$0x1]
        %v3695 = vlaneseq
        %v3696 = vshrl.u32 %v3695, 7
        %v3697 = vsub.s32 0, %v3696
        %v3698 = vrot.slane %v3694, %v3697
        %v3700 = vsel %vm612, %v3689, 0
        %3702 = vmatprep.subr.mxu0 0.0
        %3703 = vmatpush1.msra.mxu0 %v3690
        %3704 = vmatprep.subr.mxu0 0.0
        %3705 = vmatpush1.msra.mxu0 %v3691
        %3706 = vmatprep.subr.mxu0 0.0
        %3707 = vmatpush1.msra.mxu0 %v3692
        %3708 = vmatprep.subr.mxu0 0.0
        %3709 = vmatpush1.msra.mxu0 %v3693
        %3710 = vmatprep.subr.mxu0 0.0
        %3711 = vmatpush1.msra.mxu0 0.0
        %3712 = vmatprep.subr.mxu0 0.0
        %3713 = vmatpush1.msra.mxu0 0.0
        %3714 = vmatprep.subr.mxu0 0.0
        %3715 = vmatpush1.msra.mxu0 0.0
        %3716 = vmatprep.subr.mxu0 0.0
        %3717 = vmatpush1.msra.mxu0 0.0
        %3718 = vmatprep.subr.mxu0 0.0
        %3719 = vmatpush1.msra.mxu0 0.0
        %3720 = vmatprep.subr.mxu0 0.0
        %3721 = vmatpush1.msra.mxu0 0.0
        %3722 = vmatprep.subr.mxu0 0.0
        %3723 = vmatpush1.msra.mxu0 0.0
        %3724 = vmatprep.subr.mxu0 0.0
        %3725 = vmatpush1.msra.mxu0 0.0
        %3726 = vmatprep.subr.mxu0 0.0
        %3727 = vmatpush1.msra.mxu0 0.0
        %3728 = vmatprep.subr.mxu0 0.0
        %3729 = vmatpush1.msra.mxu0 0.0
        %3730 = vmatprep.subr.mxu0 0.0
        %3731 = vmatpush1.msra.mxu0 0.0
        %3732 = vmatprep.subr.mxu0 0.0
        %3733 = vmatpush1.msra.mxu0 0.0
        %3734 = vmatprep.subr.mxu0 0.0
        %3735 = vmatpush1.msra.mxu0 0.0
        %3736 = vmatprep.subr.mxu0 0.0
        %3737 = vmatpush1.msra.mxu0 0.0
        %3738 = vmatprep.subr.mxu0 0.0
        %3739 = vmatpush1.msra.mxu0 0.0
        %3740 = vmatprep.subr.mxu0 0.0
        %3741 = vmatpush1.msra.mxu0 0.0
        %3742 = vmatprep.subr.mxu0 0.0
        %3743 = vmatpush1.msra.mxu0 0.0
        %3744 = vmatprep.subr.mxu0 0.0
        %3745 = vmatpush1.msra.mxu0 0.0
        %3746 = vmatprep.subr.mxu0 0.0
        %3747 = vmatpush1.msra.mxu0 0.0
        %3748 = vmatprep.subr.mxu0 0.0
        %3749 = vmatpush1.msra.mxu0 0.0
        %3750 = vmatprep.subr.mxu0 0.0
        %3751 = vmatpush1.msra.mxu0 0.0
        %3752 = vmatprep.subr.mxu0 0.0
        %3753 = vmatpush1.msra.mxu0 0.0
        %3754 = vmatprep.subr.mxu0 0.0
        %3755 = vmatpush1.msra.mxu0 0.0
        %3756 = vmatprep.subr.mxu0 0.0
        %3757 = vmatpush1.msra.mxu0 0.0
        %3758 = vmatprep.subr.mxu0 0.0
        %3759 = vmatpush1.msra.mxu0 0.0
        %3760 = vmatprep.subr.mxu0 0.0
        %3761 = vmatpush1.msra.mxu0 0.0
        %3762 = vmatprep.subr.mxu0 0.0
        %3763 = vmatpush1.msra.mxu0 0.0
        %3764 = vmatprep.subr.mxu0 0.0
        %3765 = vmatpush1.msra.mxu0 0.0
        %3766 = vmatprep.mubr.f32.mxu0 0.0
        %3767 = vmatmul.mubr.f32.gmra.mrb[0].mxu0 %v3700
        %v3768 = vpop.f32.mrb[0].mxu0
        %v3769 = vadd.f32 %v3698, %v3768
        %v3770 = vpop.f32.mrb[0].mxu0
        %3771 = vdwg.mxu0
        %v3772 = vmul.f32 %v3769, %v3769
        %v3773 = vmul.f32 %v3769, %v3772
        %v3774 = vmul.f32 %v3773, 0.044715
        %v3775 = vadd.f32 %v3769, %v3774
        %v3776 = vmul.f32 %v3775, 0.7978846
        %v3777 = vtanh.pop %v3776
        %v3778 = vadd.f32 %v3777, 1.0
        %v3779 = vmul.f32 %v3778, 0.5
        %v3780 = vmul.f32 %v3769, %v3779
        %v3781 = vld [vmem:[%s1 + $0x360] sm:$0xff]
        %v3782 = vld [vmem:[%s1 + $0x368] sm:$0xff]
        %v3783 = vld [vmem:[%s1 + $0x370] sm:$0xff]
        %v3784 = vld [vmem:[%s1 + $0x378] sm:$0xff]
        %v3785 = vld [vmem:[%s1 + $0x380] sm:$0xff]
        %v3786 = vld [vmem:[%s1 + $0x388] sm:$0xff]
        %v3787 = vld [vmem:[%s1 + $0x390] sm:$0xff]
        %v3788 = vld [vmem:[%s1 + $0x398] sm:$0xff]
        %v3789 = vld [vmem:[%s1 + $0x46d] sm:$0x1]
        %v3790 = vlaneseq
        %v3791 = vshrl.u32 %v3790, 7
        %v3792 = vsub.s32 0, %v3791
        %v3793 = vrot.slane %v3789, %v3792
        %v3795 = vsel %vm976, %v3780, 0
        %3797 = vmatprep.subr.mxu0 0.0
        %3798 = vmatpush1.msra.mxu0 %v3781
        %3799 = vmatprep.subr.mxu0 0.0
        %3800 = vmatpush1.msra.mxu0 %v3782
        %3801 = vmatprep.subr.mxu0 0.0
        %3802 = vmatpush1.msra.mxu0 %v3783
        %3803 = vmatprep.subr.mxu0 0.0
        %3804 = vmatpush1.msra.mxu0 %v3784
        %3805 = vmatprep.subr.mxu0 0.0
        %3806 = vmatpush1.msra.mxu0 %v3785
        %3807 = vmatprep.subr.mxu0 0.0
        %3808 = vmatpush1.msra.mxu0 %v3786
        %3809 = vmatprep.subr.mxu0 0.0
        %3810 = vmatpush1.msra.mxu0 %v3787
        %3811 = vmatprep.subr.mxu0 0.0
        %3812 = vmatpush1.msra.mxu0 %v3788
        %3813 = vmatprep.subr.mxu0 0.0
        %3814 = vmatpush1.msra.mxu0 0.0
        %3815 = vmatprep.subr.mxu0 0.0
        %3816 = vmatpush1.msra.mxu0 0.0
        %3817 = vmatprep.subr.mxu0 0.0
        %3818 = vmatpush1.msra.mxu0 0.0
        %3819 = vmatprep.subr.mxu0 0.0
        %3820 = vmatpush1.msra.mxu0 0.0
        %3821 = vmatprep.subr.mxu0 0.0
        %3822 = vmatpush1.msra.mxu0 0.0
        %3823 = vmatprep.subr.mxu0 0.0
        %3824 = vmatpush1.msra.mxu0 0.0
        %3825 = vmatprep.subr.mxu0 0.0
        %3826 = vmatpush1.msra.mxu0 0.0
        %3827 = vmatprep.subr.mxu0 0.0
        %3828 = vmatpush1.msra.mxu0 0.0
        %3829 = vmatprep.subr.mxu0 0.0
        %3830 = vmatpush1.msra.mxu0 0.0
        %3831 = vmatprep.subr.mxu0 0.0
        %3832 = vmatpush1.msra.mxu0 0.0
        %3833 = vmatprep.subr.mxu0 0.0
        %3834 = vmatpush1.msra.mxu0 0.0
        %3835 = vmatprep.subr.mxu0 0.0
        %3836 = vmatpush1.msra.mxu0 0.0
        %3837 = vmatprep.subr.mxu0 0.0
        %3838 = vmatpush1.msra.mxu0 0.0
        %3839 = vmatprep.subr.mxu0 0.0
        %3840 = vmatpush1.msra.mxu0 0.0
        %3841 = vmatprep.subr.mxu0 0.0
        %3842 = vmatpush1.msra.mxu0 0.0
        %3843 = vmatprep.subr.mxu0 0.0
        %3844 = vmatpush1.msra.mxu0 0.0
        %3845 = vmatprep.subr.mxu0 0.0
        %3846 = vmatpush1.msra.mxu0 0.0
        %3847 = vmatprep.subr.mxu0 0.0
        %3848 = vmatpush1.msra.mxu0 0.0
        %3849 = vmatprep.subr.mxu0 0.0
        %3850 = vmatpush1.msra.mxu0 0.0
        %3851 = vmatprep.subr.mxu0 0.0
        %3852 = vmatpush1.msra.mxu0 0.0
        %3853 = vmatprep.subr.mxu0 0.0
        %3854 = vmatpush1.msra.mxu0 0.0
        %3855 = vmatprep.subr.mxu0 0.0
        %3856 = vmatpush1.msra.mxu0 0.0
        %3857 = vmatprep.subr.mxu0 0.0
        %3858 = vmatpush1.msra.mxu0 0.0
        %3859 = vmatprep.subr.mxu0 0.0
        %3860 = vmatpush1.msra.mxu0 0.0
        %3861 = vmatprep.mubr.f32.mxu0 0.0
        %3862 = vmatmul.mubr.f32.gmra.mrb[0].mxu0 %v3795
        %v3863 = vpop.f32.mrb[0].mxu0
        %v3864 = vadd.f32 %v3793, %v3863
        %v3865 = vpop.f32.mrb[0].mxu0
        %3866 = vdwg.mxu0
        %v3867 = vadd.f32 %v3689, %v3864
        %v3868 = vld [vmem:[%s1 + $0x46e] sm:$0x1]
        %v3869 = vld [vmem:[%s1 + $0x46f] sm:$0x1]
        %v3870 = vsel %vm2119, %v3867, 0.0
        %3871 = vadd.xlane.f32.xlu0 %v3870
        %v3872 = vpop.xlane.xlu0 %3871
        %v3873 = vmul.f32 %v3872, %v2906
        %v3874 = vsub.f32 %v3867, %v3873
        %v3875 = vmul.f32 %v3874, %v3874
        %v3876 = vsel %vm2119, %v3875, 0.0
        %3877 = vadd.xlane.f32.xlu0 %v3876
        %v3878 = vpop.xlane.xlu0 %3877
        %v3879 = vmul.f32 %v3878, %v2906
        %v3880 = vadd.f32 %v3879, 1e-05
        %v3881 = vrsqrt.pop %v3880
        %v3882 = vmul.f32 %v3874, %v3881
        %v3883 = vlaneseq
        %v3884 = vshrl.u32 %v3883, 7
        %v3885 = vsub.s32 0, %v3884
        %v3886 = vrot.slane %v3868, %v3885
        %v3887 = vmul.f32 %v3882, %v3886
        %v3888 = vlaneseq
        %v3889 = vshrl.u32 %v3888, 7
        %v3890 = vsub.s32 0, %v3889
        %v3891 = vrot.slane %v3869, %v3890
        %v3892 = vadd.f32 %v3887, %v3891
        %v3893 = vld [vmem:[%s1 + $0x3a0] sm:$0xff]
        %v3894 = vld [vmem:[%s1 + $0x3a8] sm:$0xff]
        %v3895 = vld [vmem:[%s1 + $0x3b0] sm:$0xff]
        %v3896 = vld [vmem:[%s1 + $0x3b8] sm:$0xff]
        %v3897 = vld [vmem:[%s1 + $0x470] sm:$0x1]
        %v3898 = vlaneseq
        %v3899 = vshrl.u32 %v3898, 7
        %v3900 = vsub.s32 0, %v3899
        %v3901 = vrot.slane %v3897, %v3900
        %v3903 = vsel %vm612, %v3892, 0
        %3905 = vmatprep.subr.mxu0 0.0
        %3906 = vmatpush1.msra.mxu0 %v3893
        %3907 = vmatprep.subr.mxu0 0.0
        %3908 = vmatpush1.msra.mxu0 %v3894
        %3909 = vmatprep.subr.mxu0 0.0
        %3910 = vmatpush1.msra.mxu0 %v3895
        %3911 = vmatprep.subr.mxu0 0.0
        %3912 = vmatpush1.msra.mxu0 %v3896
        %3913 = vmatprep.subr.mxu0 0.0
        %3914 = vmatpush1.msra.mxu0 0.0
        %3915 = vmatprep.subr.mxu0 0.0
        %3916 = vmatpush1.msra.mxu0 0.0
        %3917 = vmatprep.subr.mxu0 0.0
        %3918 = vmatpush1.msra.mxu0 0.0
        %3919 = vmatprep.subr.mxu0 0.0
        %3920 = vmatpush1.msra.mxu0 0.0
        %3921 = vmatprep.subr.mxu0 0.0
        %3922 = vmatpush1.msra.mxu0 0.0
        %3923 = vmatprep.subr.mxu0 0.0
        %3924 = vmatpush1.msra.mxu0 0.0
        %3925 = vmatprep.subr.mxu0 0.0
        %3926 = vmatpush1.msra.mxu0 0.0
        %3927 = vmatprep.subr.mxu0 0.0
        %3928 = vmatpush1.msra.mxu0 0.0
        %3929 = vmatprep.subr.mxu0 0.0
        %3930 = vmatpush1.msra.mxu0 0.0
        %3931 = vmatprep.subr.mxu0 0.0
        %3932 = vmatpush1.msra.mxu0 0.0
        %3933 = vmatprep.subr.mxu0 0.0
        %3934 = vmatpush1.msra.mxu0 0.0
        %3935 = vmatprep.subr.mxu0 0.0
        %3936 = vmatpush1.msra.mxu0 0.0
        %3937 = vmatprep.subr.mxu0 0.0
        %3938 = vmatpush1.msra.mxu0 0.0
        %3939 = vmatprep.subr.mxu0 0.0
        %3940 = vmatpush1.msra.mxu0 0.0
        %3941 = vmatprep.subr.mxu0 0.0
        %3942 = vmatpush1.msra.mxu0 0.0
        %3943 = vmatprep.subr.mxu0 0.0
        %3944 = vmatpush1.msra.mxu0 0.0
        %3945 = vmatprep.subr.mxu0 0.0
        %3946 = vmatpush1.msra.mxu0 0.0
        %3947 = vmatprep.subr.mxu0 0.0
        %3948 = vmatpush1.msra.mxu0 0.0
        %3949 = vmatprep.subr.mxu0 0.0
        %3950 = vmatpush1.msra.mxu0 0.0
        %3951 = vmatprep.subr.mxu0 0.0
        %3952 = vmatpush1.msra.mxu0 0.0
        %3953 = vmatprep.subr.mxu0 0.0
        %3954 = vmatpush1.msra.mxu0 0.0
        %3955 = vmatprep.subr.mxu0 0.0
        %3956 = vmatpush1.msra.mxu0 0.0
        %3957 = vmatprep.subr.mxu0 0.0
        %3958 = vmatpush1.msra.mxu0 0.0
        %3959 = vmatprep.subr.mxu0 0.0
        %3960 = vmatpush1.msra.mxu0 0.0
        %3961 = vmatprep.subr.mxu0 0.0
        %3962 = vmatpush1.msra.mxu0 0.0
        %3963 = vmatprep.subr.mxu0 0.0
        %3964 = vmatpush1.msra.mxu0 0.0
        %3965 = vmatprep.subr.mxu0 0.0
        %3966 = vmatpush1.msra.mxu0 0.0
        %3967 = vmatprep.subr.mxu0 0.0
        %3968 = vmatpush1.msra.mxu0 0.0
        %3969 = vmatprep.mubr.f32.mxu0 0.0
        %3970 = vmatmul.mubr.f32.gmra.mrb[0].mxu0 %v3903
        %v3971 = vpop.f32.mrb[0].mxu0
        %v3972 = vadd.f32 %v3901, %v3971
        %v3973 = vpop.f32.mrb[0].mxu0
        %3974 = vdwg.mxu0
        %v3975 = vmul.f32 %v3972, 0.25
        %3977 = vrot.lane.b32.xlu0 %v3972, 96
        %v3978 = vpop.permute.xlu0 %3977
        %v3980 = vsel %vm3244, %v3975, 0
        %v3982 = vsel %vm3244, %v3978, 0
        %3984 = vmatprep.subr.mxu0 0.0
        %3985 = vmatpush1.xpose.msra.mxu0 %v3982
        %3986 = vmatprep.subr.mxu0 0.0
        %3987 = vmatpush1.xpose.msra.mxu0 0.0
        %3988 = vmatprep.subr.mxu0 0.0
        %3989 = vmatpush1.xpose.msra.mxu0 0.0
        %3990 = vmatprep.subr.mxu0 0.0
        %3991 = vmatpush1.xpose.msra.mxu0 0.0
        %3992 = vmatprep.subr.mxu0 0.0
        %3993 = vmatpush1.xpose.msra.mxu0 0.0
        %3994 = vmatprep.subr.mxu0 0.0
        %3995 = vmatpush1.xpose.msra.mxu0 0.0
        %3996 = vmatprep.subr.mxu0 0.0
        %3997 = vmatpush1.xpose.msra.mxu0 0.0
        %3998 = vmatprep.subr.mxu0 0.0
        %3999 = vmatpush1.xpose.msra.mxu0 0.0
        %4000 = vmatprep.subr.mxu0 0.0
        %4001 = vmatpush1.xpose.msra.mxu0 0.0
        %4002 = vmatprep.subr.mxu0 0.0
        %4003 = vmatpush1.xpose.msra.mxu0 0.0
        %4004 = vmatprep.subr.mxu0 0.0
        %4005 = vmatpush1.xpose.msra.mxu0 0.0
        %4006 = vmatprep.subr.mxu0 0.0
        %4007 = vmatpush1.xpose.msra.mxu0 0.0
        %4008 = vmatprep.subr.mxu0 0.0
        %4009 = vmatpush1.xpose.msra.mxu0 0.0
        %4010 = vmatprep.subr.mxu0 0.0
        %4011 = vmatpush1.xpose.msra.mxu0 0.0
        %4012 = vmatprep.subr.mxu0 0.0
        %4013 = vmatpush1.xpose.msra.mxu0 0.0
        %4014 = vmatprep.subr.mxu0 0.0
        %4015 = vmatpush1.xpose.msra.mxu0 0.0
        %4016 = vmatprep.subr.mxu0 0.0
        %4017 = vmatpush1.xpose.msra.mxu0 0.0
        %4018 = vmatprep.subr.mxu0 0.0
        %4019 = vmatpush1.xpose.msra.mxu0 0.0
        %4020 = vmatprep.subr.mxu0 0.0
        %4021 = vmatpush1.xpose.msra.mxu0 0.0
        %4022 = vmatprep.subr.mxu0 0.0
        %4023 = vmatpush1.xpose.msra.mxu0 0.0
        %4024 = vmatprep.subr.mxu0 0.0
        %4025 = vmatpush1.xpose.msra.mxu0 0.0
        %4026 = vmatprep.subr.mxu0 0.0
        %4027 = vmatpush1.xpose.msra.mxu0 0.0
        %4028 = vmatprep.subr.mxu0 0.0
        %4029 = vmatpush1.xpose.msra.mxu0 0.0
        %4030 = vmatprep.subr.mxu0 0.0
        %4031 = vmatpush1.xpose.msra.mxu0 0.0
        %4032 = vmatprep.subr.mxu0 0.0
        %4033 = vmatpush1.xpose.msra.mxu0 0.0
        %4034 = vmatprep.subr.mxu0 0.0
        %4035 = vmatpush1.xpose.msra.mxu0 0.0
        %4036 = vmatprep.subr.mxu0 0.0
        %4037 = vmatpush1.xpose.msra.mxu0 0.0
        %4038 = vmatprep.subr.mxu0 0.0
        %4039 = vmatpush1.xpose.msra.mxu0 0.0
        %4040 = vmatprep.subr.mxu0 0.0
        %4041 = vmatpush1.xpose.msra.mxu0 0.0
        %4042 = vmatprep.subr.mxu0 0.0
        %4043 = vmatpush1.xpose.msra.mxu0 0.0
        %4044 = vmatprep.subr.mxu0 0.0
        %4045 = vmatpush1.xpose.msra.mxu0 0.0
        %4046 = vmatprep.subr.mxu0 0.0
        %4047 = vmatpush1.xpose.msra.mxu0 0.0
        %4048 = vmatprep.mubr.f32.mxu0 0.0
        %4049 = vmatmul.mubr.f32.gmra.mrb[0].mxu0 %v3980
        %v4050 = vpop.f32.mrb[0].mxu0
        %v4051 = vadd.f32 0.0, %v4050
        %v4052 = vpop.f32.mrb[0].mxu0
        %4053 = vdwg.mxu0
        %v4054 = vsel %vm3320, %v4051, -inf
        %4055 = vmax.xlane.f32.xlu0 %v4054
        %v4056 = vpop.xlane.xlu0 %4055
        %v4057 = vsub.f32 %v4051, %v4056
        %v4058 = vmul.f32 %v4057, 1.442695
        %v4059 = vpow.pop %v4058
        %v4060 = vsel %vm3320, %v4059, 0.0
        %4061 = vadd.xlane.f32.xlu0 %v4060
        %v4062 = vpop.xlane.xlu0 %4061
        %v4063 = vrcp.pop %v4062
        %v4064 = vmul.f32 %v4059, %v4063
        %4065 = vrot.lane.b32.xlu0 %v3972, 64
        %v4066 = vpop.permute.xlu0 %4065
        %v4068 = vsel %vm3334, %v4064, 0
        %v4070 = vsel %vm3338, %v4066, 0
        %4072 = vmatprep.subr.mxu0 0.0
        %4073 = vmatpush1.msra.mxu0 %v4070
        %4074 = vmatprep.subr.mxu0 0.0
        %4075 = vmatpush1.msra.mxu0 0.0
        %4076 = vmatprep.subr.mxu0 0.0
        %4077 = vmatpush1.msra.mxu0 0.0
        %4078 = vmatprep.subr.mxu0 0.0
        %4079 = vmatpush1.msra.mxu0 0.0
        %4080 = vmatprep.subr.mxu0 0.0
        %4081 = vmatpush1.msra.mxu0 0.0
        %4082 = vmatprep.subr.mxu0 0.0
        %4083 = vmatpush1.msra.mxu0 0.0
        %4084 = vmatprep.subr.mxu0 0.0
        %4085 = vmatpush1.msra.mxu0 0.0
        %4086 = vmatprep.subr.mxu0 0.0
        %4087 = vmatpush1.msra.mxu0 0.0
        %4088 = vmatprep.subr.mxu0 0.0
        %4089 = vmatpush1.msra.mxu0 0.0
        %4090 = vmatprep.subr.mxu0 0.0
        %4091 = vmatpush1.msra.mxu0 0.0
        %4092 = vmatprep.subr.mxu0 0.0
        %4093 = vmatpush1.msra.mxu0 0.0
        %4094 = vmatprep.subr.mxu0 0.0
        %4095 = vmatpush1.msra.mxu0 0.0
        %4096 = vmatprep.subr.mxu0 0.0
        %4097 = vmatpush1.msra.mxu0 0.0
        %4098 = vmatprep.subr.mxu0 0.0
        %4099 = vmatpush1.msra.mxu0 0.0
        %4100 = vmatprep.subr.mxu0 0.0
        %4101 = vmatpush1.msra.mxu0 0.0
        %4102 = vmatprep.subr.mxu0 0.0
        %4103 = vmatpush1.msra.mxu0 0.0
        %4104 = vmatprep.subr.mxu0 0.0
        %4105 = vmatpush1.msra.mxu0 0.0
        %4106 = vmatprep.subr.mxu0 0.0
        %4107 = vmatpush1.msra.mxu0 0.0
        %4108 = vmatprep.subr.mxu0 0.0
        %4109 = vmatpush1.msra.mxu0 0.0
        %4110 = vmatprep.subr.mxu0 0.0
        %4111 = vmatpush1.msra.mxu0 0.0
        %4112 = vmatprep.subr.mxu0 0.0
        %4113 = vmatpush1.msra.mxu0 0.0
        %4114 = vmatprep.subr.mxu0 0.0
        %4115 = vmatpush1.msra.mxu0 0.0
        %4116 = vmatprep.subr.mxu0 0.0
        %4117 = vmatpush1.msra.mxu0 0.0
        %4118 = vmatprep.subr.mxu0 0.0
        %4119 = vmatpush1.msra.mxu0 0.0
        %4120 = vmatprep.subr.mxu0 0.0
        %4121 = vmatpush1.msra.mxu0 0.0
        %4122 = vmatprep.subr.mxu0 0.0
        %4123 = vmatpush1.msra.mxu0 0.0
        %4124 = vmatprep.subr.mxu0 0.0
        %4125 = vmatpush1.msra.mxu0 0.0
        %4126 = vmatprep.subr.mxu0 0.0
        %4127 = vmatpush1.msra.mxu0 0.0
        %4128 = vmatprep.subr.mxu0 0.0
        %4129 = vmatpush1.msra.mxu0 0.0
        %4130 = vmatprep.subr.mxu0 0.0
        %4131 = vmatpush1.msra.mxu0 0.0
        %4132 = vmatprep.subr.mxu0 0.0
        %4133 = vmatpush1.msra.mxu0 0.0
        %4134 = vmatprep.subr.mxu0 0.0
        %4135 = vmatpush1.msra.mxu0 0.0
        %4136 = vmatprep.mubr.f32.mxu0 0.0
        %4137 = vmatmul.mubr.f32.gmra.mrb[0].mxu0 %v4068
        %v4138 = vpop.f32.mrb[0].mxu0
        %v4139 = vadd.f32 0.0, %v4138
        %v4140 = vpop.f32.mrb[0].mxu0
        %4141 = vdwg.mxu0
        %4142 = vrot.lane.b32.xlu0 %v3975, 112
        %v4143 = vpop.permute.xlu0 %4142
        %4144 = vrot.lane.b32.xlu0 %v3972, 80
        %v4145 = vpop.permute.xlu0 %4144
        %v4146 = vsel %vm3244, %v4143, 0
        %v4148 = vsel %vm3244, %v4145, 0
        %4150 = vmatprep.subr.mxu0 0.0
        %4151 = vmatpush1.xpose.msra.mxu0 %v4148
        %4152 = vmatprep.subr.mxu0 0.0
        %4153 = vmatpush1.xpose.msra.mxu0 0.0
        %4154 = vmatprep.subr.mxu0 0.0
        %4155 = vmatpush1.xpose.msra.mxu0 0.0
        %4156 = vmatprep.subr.mxu0 0.0
        %4157 = vmatpush1.xpose.msra.mxu0 0.0
        %4158 = vmatprep.subr.mxu0 0.0
        %4159 = vmatpush1.xpose.msra.mxu0 0.0
        %4160 = vmatprep.subr.mxu0 0.0
        %4161 = vmatpush1.xpose.msra.mxu0 0.0
        %4162 = vmatprep.subr.mxu0 0.0
        %4163 = vmatpush1.xpose.msra.mxu0 0.0
        %4164 = vmatprep.subr.mxu0 0.0
        %4165 = vmatpush1.xpose.msra.mxu0 0.0
        %4166 = vmatprep.subr.mxu0 0.0
        %4167 = vmatpush1.xpose.msra.mxu0 0.0
        %4168 = vmatprep.subr.mxu0 0.0
        %4169 = vmatpush1.xpose.msra.mxu0 0.0
        %4170 = vmatprep.subr.mxu0 0.0
        %4171 = vmatpush1.xpose.msra.mxu0 0.0
        %4172 = vmatprep.subr.mxu0 0.0
        %4173 = vmatpush1.xpose.msra.mxu0 0.0
        %4174 = vmatprep.subr.mxu0 0.0
        %4175 = vmatpush1.xpose.msra.mxu0 0.0
        %4176 = vmatprep.subr.mxu0 0.0
        %4177 = vmatpush1.xpose.msra.mxu0 0.0
        %4178 = vmatprep.subr.mxu0 0.0
        %4179 = vmatpush1.xpose.msra.mxu0 0.0
        %4180 = vmatprep.subr.mxu0 0.0
        %4181 = vmatpush1.xpose.msra.mxu0 0.0
        %4182 = vmatprep.subr.mxu0 0.0
        %4183 = vmatpush1.xpose.msra.mxu0 0.0
        %4184 = vmatprep.subr.mxu0 0.0
        %4185 = vmatpush1.xpose.msra.mxu0 0.0
        %4186 = vmatprep.subr.mxu0 0.0
        %4187 = vmatpush1.xpose.msra.mxu0 0.0
        %4188 = vmatprep.subr.mxu0 0.0
        %4189 = vmatpush1.xpose.msra.mxu0 0.0
        %4190 = vmatprep.subr.mxu0 0.0
        %4191 = vmatpush1.xpose.msra.mxu0 0.0
        %4192 = vmatprep.subr.mxu0 0.0
        %4193 = vmatpush1.xpose.msra.mxu0 0.0
        %4194 = vmatprep.subr.mxu0 0.0
        %4195 = vmatpush1.xpose.msra.mxu0 0.0
        %4196 = vmatprep.subr.mxu0 0.0
        %4197 = vmatpush1.xpose.msra.mxu0 0.0
        %4198 = vmatprep.subr.mxu0 0.0
        %4199 = vmatpush1.xpose.msra.mxu0 0.0
        %4200 = vmatprep.subr.mxu0 0.0
        %4201 = vmatpush1.xpose.msra.mxu0 0.0
        %4202 = vmatprep.subr.mxu0 0.0
        %4203 = vmatpush1.xpose.msra.mxu0 0.0
        %4204 = vmatprep.subr.mxu0 0.0
        %4205 = vmatpush1.xpose.msra.mxu0 0.0
        %4206 = vmatprep.subr.mxu0 0.0
        %4207 = vmatpush1.xpose.msra.mxu0 0.0
        %4208 = vmatprep.subr.mxu0 0.0
        %4209 = vmatpush1.xpose.msra.mxu0 0.0
        %4210 = vmatprep.subr.mxu0 0.0
        %4211 = vmatpush1.xpose.msra.mxu0 0.0
        %4212 = vmatprep.subr.mxu0 0.0
        %4213 = vmatpush1.xpose.msra.mxu0 0.0
        %4214 = vmatprep.mubr.f32.mxu0 0.0
        %4215 = vmatmul.mubr.f32.gmra.mrb[0].mxu0 %v4146
        %v4216 = vpop.f32.mrb[0].mxu0
        %v4217 = vadd.f32 0.0, %v4216
        %v4218 = vpop.f32.mrb[0].mxu0
        %4219 = vdwg.mxu0
        %v4220 = vsel %vm3320, %v4217, -inf
        %4221 = vmax.xlane.f32.xlu0 %v4220
        %v4222 = vpop.xlane.xlu0 %4221
        %v4223 = vsub.f32 %v4217, %v4222
        %v4224 = vmul.f32 %v4223, 1.442695
        %v4225 = vpow.pop %v4224
        %v4226 = vsel %vm3320, %v4225, 0.0
        %4227 = vadd.xlane.f32.xlu0 %v4226
        %v4228 = vpop.xlane.xlu0 %4227
        %v4229 = vrcp.pop %v4228
        %v4230 = vmul.f32 %v4225, %v4229
        %4231 = vrot.lane.b32.xlu0 %v3972, 48
        %v4232 = vpop.permute.xlu0 %4231
        %v4234 = vsel %vm3334, %v4230, 0
        %v4236 = vsel %vm3338, %v4232, 0
        %4238 = vmatprep.subr.mxu0 0.0
        %4239 = vmatpush1.msra.mxu0 %v4236
        %4240 = vmatprep.subr.mxu0 0.0
        %4241 = vmatpush1.msra.mxu0 0.0
        %4242 = vmatprep.subr.mxu0 0.0
        %4243 = vmatpush1.msra.mxu0 0.0
        %4244 = vmatprep.subr.mxu0 0.0
        %4245 = vmatpush1.msra.mxu0 0.0
        %4246 = vmatprep.subr.mxu0 0.0
        %4247 = vmatpush1.msra.mxu0 0.0
        %4248 = vmatprep.subr.mxu0 0.0
        %4249 = vmatpush1.msra.mxu0 0.0
        %4250 = vmatprep.subr.mxu0 0.0
        %4251 = vmatpush1.msra.mxu0 0.0
        %4252 = vmatprep.subr.mxu0 0.0
        %4253 = vmatpush1.msra.mxu0 0.0
        %4254 = vmatprep.subr.mxu0 0.0
        %4255 = vmatpush1.msra.mxu0 0.0
        %4256 = vmatprep.subr.mxu0 0.0
        %4257 = vmatpush1.msra.mxu0 0.0
        %4258 = vmatprep.subr.mxu0 0.0
        %4259 = vmatpush1.msra.mxu0 0.0
        %4260 = vmatprep.subr.mxu0 0.0
        %4261 = vmatpush1.msra.mxu0 0.0
        %4262 = vmatprep.subr.mxu0 0.0
        %4263 = vmatpush1.msra.mxu0 0.0
        %4264 = vmatprep.subr.mxu0 0.0
        %4265 = vmatpush1.msra.mxu0 0.0
        %4266 = vmatprep.subr.mxu0 0.0
        %4267 = vmatpush1.msra.mxu0 0.0
        %4268 = vmatprep.subr.mxu0 0.0
        %4269 = vmatpush1.msra.mxu0 0.0
        %4270 = vmatprep.subr.mxu0 0.0
        %4271 = vmatpush1.msra.mxu0 0.0
        %4272 = vmatprep.subr.mxu0 0.0
        %4273 = vmatpush1.msra.mxu0 0.0
        %4274 = vmatprep.subr.mxu0 0.0
        %4275 = vmatpush1.msra.mxu0 0.0
        %4276 = vmatprep.subr.mxu0 0.0
        %4277 = vmatpush1.msra.mxu0 0.0
        %4278 = vmatprep.subr.mxu0 0.0
        %4279 = vmatpush1.msra.mxu0 0.0
        %4280 = vmatprep.subr.mxu0 0.0
        %4281 = vmatpush1.msra.mxu0 0.0
        %4282 = vmatprep.subr.mxu0 0.0
        %4283 = vmatpush1.msra.mxu0 0.0
        %4284 = vmatprep.subr.mxu0 0.0
        %4285 = vmatpush1.msra.mxu0 0.0
        %4286 = vmatprep.subr.mxu0 0.0
        %4287 = vmatpush1.msra.mxu0 0.0
        %4288 = vmatprep.subr.mxu0 0.0
        %4289 = vmatpush1.msra.mxu0 0.0
        %4290 = vmatprep.subr.mxu0 0.0
        %4291 = vmatpush1.msra.mxu0 0.0
        %4292 = vmatprep.subr.mxu0 0.0
        %4293 = vmatpush1.msra.mxu0 0.0
        %4294 = vmatprep.subr.mxu0 0.0
        %4295 = vmatpush1.msra.mxu0 0.0
        %4296 = vmatprep.subr.mxu0 0.0
        %4297 = vmatpush1.msra.mxu0 0.0
        %4298 = vmatprep.subr.mxu0 0.0
        %4299 = vmatpush1.msra.mxu0 0.0
        %4300 = vmatprep.subr.mxu0 0.0
        %4301 = vmatpush1.msra.mxu0 0.0
        %4302 = vmatprep.mubr.f32.mxu0 0.0
        %4303 = vmatmul.mubr.f32.gmra.mrb[0].mxu0 %v4234
        %v4304 = vpop.f32.mrb[0].mxu0
        %v4305 = vadd.f32 0.0, %v4304
        %v4306 = vpop.f32.mrb[0].mxu0
        %4307 = vdwg.mxu0
        %4309 = vrot.lane.b32.xlu0 %v4305, 16
        %v4310 = vpop.permute.xlu0 %4309
        %v4312 = vsel %vm3244, %v4139, %v4310
        %v4313 = vld [vmem:[%s1 + $0x3c0] sm:$0xff]
        %v4314 = vld [vmem:[%s1 + $0x3c8] sm:$0xff]
        %v4315 = vld [vmem:[%s1 + $0x3d0] sm:$0xff]
        %v4316 = vld [vmem:[%s1 + $0x3d8] sm:$0xff]
        %v4317 = vld [vmem:[%s1 + $0x471] sm:$0x1]
        %v4318 = vlaneseq
        %v4319 = vshrl.u32 %v4318, 7
        %v4320 = vsub.s32 0, %v4319
        %v4321 = vrot.slane %v4317, %v4320
        %v4323 = vsel %vm612, %v4312, 0
        %4325 = vmatprep.subr.mxu0 0.0
        %4326 = vmatpush1.msra.mxu0 %v4313
        %4327 = vmatprep.subr.mxu0 0.0
        %4328 = vmatpush1.msra.mxu0 %v4314
        %4329 = vmatprep.subr.mxu0 0.0
        %4330 = vmatpush1.msra.mxu0 %v4315
        %4331 = vmatprep.subr.mxu0 0.0
        %4332 = vmatpush1.msra.mxu0 %v4316
        %4333 = vmatprep.subr.mxu0 0.0
        %4334 = vmatpush1.msra.mxu0 0.0
        %4335 = vmatprep.subr.mxu0 0.0
        %4336 = vmatpush1.msra.mxu0 0.0
        %4337 = vmatprep.subr.mxu0 0.0
        %4338 = vmatpush1.msra.mxu0 0.0
        %4339 = vmatprep.subr.mxu0 0.0
        %4340 = vmatpush1.msra.mxu0 0.0
        %4341 = vmatprep.subr.mxu0 0.0
        %4342 = vmatpush1.msra.mxu0 0.0
        %4343 = vmatprep.subr.mxu0 0.0
        %4344 = vmatpush1.msra.mxu0 0.0
        %4345 = vmatprep.subr.mxu0 0.0
        %4346 = vmatpush1.msra.mxu0 0.0
        %4347 = vmatprep.subr.mxu0 0.0
        %4348 = vmatpush1.msra.mxu0 0.0
        %4349 = vmatprep.subr.mxu0 0.0
        %4350 = vmatpush1.msra.mxu0 0.0
        %4351 = vmatprep.subr.mxu0 0.0
        %4352 = vmatpush1.msra.mxu0 0.0
        %4353 = vmatprep.subr.mxu0 0.0
        %4354 = vmatpush1.msra.mxu0 0.0
        %4355 = vmatprep.subr.mxu0 0.0
        %4356 = vmatpush1.msra.mxu0 0.0
        %4357 = vmatprep.subr.mxu0 0.0
        %4358 = vmatpush1.msra.mxu0 0.0
        %4359 = vmatprep.subr.mxu0 0.0
        %4360 = vmatpush1.msra.mxu0 0.0
        %4361 = vmatprep.subr.mxu0 0.0
        %4362 = vmatpush1.msra.mxu0 0.0
        %4363 = vmatprep.subr.mxu0 0.0
        %4364 = vmatpush1.msra.mxu0 0.0
        %4365 = vmatprep.subr.mxu0 0.0
        %4366 = vmatpush1.msra.mxu0 0.0
        %4367 = vmatprep.subr.mxu0 0.0
        %4368 = vmatpush1.msra.mxu0 0.0
        %4369 = vmatprep.subr.mxu0 0.0
        %4370 = vmatpush1.msra.mxu0 0.0
        %4371 = vmatprep.subr.mxu0 0.0
        %4372 = vmatpush1.msra.mxu0 0.0
        %4373 = vmatprep.subr.mxu0 0.0
        %4374 = vmatpush1.msra.mxu0 0.0
        %4375 = vmatprep.subr.mxu0 0.0
        %4376 = vmatpush1.msra.mxu0 0.0
        %4377 = vmatprep.subr.mxu0 0.0
        %4378 = vmatpush1.msra.mxu0 0.0
        %4379 = vmatprep.subr.mxu0 0.0
        %4380 = vmatpush1.msra.mxu0 0.0
        %4381 = vmatprep.subr.mxu0 0.0
        %4382 = vmatpush1.msra.mxu0 0.0
        %4383 = vmatprep.subr.mxu0 0.0
        %4384 = vmatpush1.msra.mxu0 0.0
        %4385 = vmatprep.subr.mxu0 0.0
        %4386 = vmatpush1.msra.mxu0 0.0
        %4387 = vmatprep.subr.mxu0 0.0
        %4388 = vmatpush1.msra.mxu0 0.0
        %4389 = vmatprep.mubr.f32.mxu0 0.0
        %4390 = vmatmul.mubr.f32.gmra.mrb[0].mxu0 %v4323
        %v4391 = vpop.f32.mrb[0].mxu0
        %v4392 = vadd.f32 %v4321, %v4391
        %v4393 = vpop.f32.mrb[0].mxu0
        %4394 = vdwg.mxu0
        %v4395 = vadd.f32 %v3892, %v4392
        %v4396 = vld [vmem:[%s1 + $0x472] sm:$0x1]
        %v4397 = vld [vmem:[%s1 + $0x473] sm:$0x1]
        %v4398 = vsel %vm2119, %v4395, 0.0
        %4399 = vadd.xlane.f32.xlu0 %v4398
        %v4400 = vpop.xlane.xlu0 %4399
        %v4401 = vmul.f32 %v4400, %v2906
        %v4402 = vsub.f32 %v4395, %v4401
        %v4403 = vmul.f32 %v4402, %v4402
        %v4404 = vsel %vm2119, %v4403, 0.0
        %4405 = vadd.xlane.f32.xlu0 %v4404
        %v4406 = vpop.xlane.xlu0 %4405
        %v4407 = vmul.f32 %v4406, %v2906
        %v4408 = vadd.f32 %v4407, 1e-05
        %v4409 = vrsqrt.pop %v4408
        %v4410 = vmul.f32 %v4402, %v4409
        %v4411 = vlaneseq
        %v4412 = vshrl.u32 %v4411, 7
        %v4413 = vsub.s32 0, %v4412
        %v4414 = vrot.slane %v4396, %v4413
        %v4415 = vmul.f32 %v4410, %v4414
        %v4416 = vlaneseq
        %v4417 = vshrl.u32 %v4416, 7
        %v4418 = vsub.s32 0, %v4417
        %v4419 = vrot.slane %v4397, %v4418
        %v4420 = vadd.f32 %v4415, %v4419
        %v4421 = vld [vmem:[%s1 + $0x3e0] sm:$0xff]
        %v4422 = vld [vmem:[%s1 + $0x3e8] sm:$0xff]
        %v4423 = vld [vmem:[%s1 + $0x3f0] sm:$0xff]
        %v4424 = vld [vmem:[%s1 + $0x3f8] sm:$0xff]
        %v4425 = vld [vmem:[%s1 + $0x474] sm:$0x1]
        %v4426 = vlaneseq
        %v4427 = vshrl.u32 %v4426, 7
        %v4428 = vsub.s32 0, %v4427
        %v4429 = vrot.slane %v4425, %v4428
        %v4431 = vsel %vm612, %v4420, 0
        %4433 = vmatprep.subr.mxu0 0.0
        %4434 = vmatpush1.msra.mxu0 %v4421
        %4435 = vmatprep.subr.mxu0 0.0
        %4436 = vmatpush1.msra.mxu0 %v4422
        %4437 = vmatprep.subr.mxu0 0.0
        %4438 = vmatpush1.msra.mxu0 %v4423
        %4439 = vmatprep.subr.mxu0 0.0
        %4440 = vmatpush1.msra.mxu0 %v4424
        %4441 = vmatprep.subr.mxu0 0.0
        %4442 = vmatpush1.msra.mxu0 0.0
        %4443 = vmatprep.subr.mxu0 0.0
        %4444 = vmatpush1.msra.mxu0 0.0
        %4445 = vmatprep.subr.mxu0 0.0
        %4446 = vmatpush1.msra.mxu0 0.0
        %4447 = vmatprep.subr.mxu0 0.0
        %4448 = vmatpush1.msra.mxu0 0.0
        %4449 = vmatprep.subr.mxu0 0.0
        %4450 = vmatpush1.msra.mxu0 0.0
        %4451 = vmatprep.subr.mxu0 0.0
        %4452 = vmatpush1.msra.mxu0 0.0
        %4453 = vmatprep.subr.mxu0 0.0
        %4454 = vmatpush1.msra.mxu0 0.0
        %4455 = vmatprep.subr.mxu0 0.0
        %4456 = vmatpush1.msra.mxu0 0.0
        %4457 = vmatprep.subr.mxu0 0.0
        %4458 = vmatpush1.msra.mxu0 0.0
        %4459 = vmatprep.subr.mxu0 0.0
        %4460 = vmatpush1.msra.mxu0 0.0
        %4461 = vmatprep.subr.mxu0 0.0
        %4462 = vmatpush1.msra.mxu0 0.0
        %4463 = vmatprep.subr.mxu0 0.0
        %4464 = vmatpush1.msra.mxu0 0.0
        %4465 = vmatprep.subr.mxu0 0.0
        %4466 = vmatpush1.msra.mxu0 0.0
        %4467 = vmatprep.subr.mxu0 0.0
        %4468 = vmatpush1.msra.mxu0 0.0
        %4469 = vmatprep.subr.mxu0 0.0
        %4470 = vmatpush1.msra.mxu0 0.0
        %4471 = vmatprep.subr.mxu0 0.0
        %4472 = vmatpush1.msra.mxu0 0.0
        %4473 = vmatprep.subr.mxu0 0.0
        %4474 = vmatpush1.msra.mxu0 0.0
        %4475 = vmatprep.subr.mxu0 0.0
        %4476 = vmatpush1.msra.mxu0 0.0
        %4477 = vmatprep.subr.mxu0 0.0
        %4478 = vmatpush1.msra.mxu0 0.0
        %4479 = vmatprep.subr.mxu0 0.0
        %4480 = vmatpush1.msra.mxu0 0.0
        %4481 = vmatprep.subr.mxu0 0.0
        %4482 = vmatpush1.msra.mxu0 0.0
        %4483 = vmatprep.subr.mxu0 0.0
        %4484 = vmatpush1.msra.mxu0 0.0
        %4485 = vmatprep.subr.mxu0 0.0
        %4486 = vmatpush1.msra.mxu0 0.0
        %4487 = vmatprep.subr.mxu0 0.0
        %4488 = vmatpush1.msra.mxu0 0.0
        %4489 = vmatprep.subr.mxu0 0.0
        %4490 = vmatpush1.msra.mxu0 0.0
        %4491 = vmatprep.subr.mxu0 0.0
        %4492 = vmatpush1.msra.mxu0 0.0
        %4493 = vmatprep.subr.mxu0 0.0
        %4494 = vmatpush1.msra.mxu0 0.0
        %4495 = vmatprep.subr.mxu0 0.0
        %4496 = vmatpush1.msra.mxu0 0.0
        %4497 = vmatprep.mubr.f32.mxu0 0.0
        %4498 = vmatmul.mubr.f32.gmra.mrb[0].mxu0 %v4431
        %v4499 = vpop.f32.mrb[0].mxu0
        %v4500 = vadd.f32 %v4429, %v4499
        %v4501 = vpop.f32.mrb[0].mxu0
        %4502 = vdwg.mxu0
        %v4503 = vmul.f32 %v4500, %v4500
        %v4504 = vmul.f32 %v4500, %v4503
        %v4505 = vmul.f32 %v4504, 0.044715
        %v4506 = vadd.f32 %v4500, %v4505
        %v4507 = vmul.f32 %v4506, 0.7978846
        %v4508 = vtanh.pop %v4507
        %v4509 = vadd.f32 %v4508, 1.0
        %v4510 = vmul.f32 %v4509, 0.5
        %v4511 = vmul.f32 %v4500, %v4510
        %v4512 = vld [vmem:[%s1 + $0x400] sm:$0xff]
        %v4513 = vld [vmem:[%s1 + $0x408] sm:$0xff]
        %v4514 = vld [vmem:[%s1 + $0x410] sm:$0xff]
        %v4515 = vld [vmem:[%s1 + $0x418] sm:$0xff]
        %v4516 = vld [vmem:[%s1 + $0x420] sm:$0xff]
        %v4517 = vld [vmem:[%s1 + $0x428] sm:$0xff]
        %v4518 = vld [vmem:[%s1 + $0x430] sm:$0xff]
        %v4519 = vld [vmem:[%s1 + $0x438] sm:$0xff]
        %v4520 = vld [vmem:[%s1 + $0x475] sm:$0x1]
        %v4521 = vlaneseq
        %v4522 = vshrl.u32 %v4521, 7
        %v4523 = vsub.s32 0, %v4522
        %v4524 = vrot.slane %v4520, %v4523
        %v4526 = vsel %vm976, %v4511, 0
        %4528 = vmatprep.subr.mxu0 0.0
        %4529 = vmatpush1.msra.mxu0 %v4512
        %4530 = vmatprep.subr.mxu0 0.0
        %4531 = vmatpush1.msra.mxu0 %v4513
        %4532 = vmatprep.subr.mxu0 0.0
        %4533 = vmatpush1.msra.mxu0 %v4514
        %4534 = vmatprep.subr.mxu0 0.0
        %4535 = vmatpush1.msra.mxu0 %v4515
        %4536 = vmatprep.subr.mxu0 0.0
        %4537 = vmatpush1.msra.mxu0 %v4516
        %4538 = vmatprep.subr.mxu0 0.0
        %4539 = vmatpush1.msra.mxu0 %v4517
        %4540 = vmatprep.subr.mxu0 0.0
        %4541 = vmatpush1.msra.mxu0 %v4518
        %4542 = vmatprep.subr.mxu0 0.0
        %4543 = vmatpush1.msra.mxu0 %v4519
        %4544 = vmatprep.subr.mxu0 0.0
        %4545 = vmatpush1.msra.mxu0 0.0
        %4546 = vmatprep.subr.mxu0 0.0
        %4547 = vmatpush1.msra.mxu0 0.0
        %4548 = vmatprep.subr.mxu0 0.0
        %4549 = vmatpush1.msra.mxu0 0.0
        %4550 = vmatprep.subr.mxu0 0.0
        %4551 = vmatpush1.msra.mxu0 0.0
        %4552 = vmatprep.subr.mxu0 0.0
        %4553 = vmatpush1.msra.mxu0 0.0
        %4554 = vmatprep.subr.mxu0 0.0
        %4555 = vmatpush1.msra.mxu0 0.0
        %4556 = vmatprep.subr.mxu0 0.0
        %4557 = vmatpush1.msra.mxu0 0.0
        %4558 = vmatprep.subr.mxu0 0.0
        %4559 = vmatpush1.msra.mxu0 0.0
        %4560 = vmatprep.subr.mxu0 0.0
        %4561 = vmatpush1.msra.mxu0 0.0
        %4562 = vmatprep.subr.mxu0 0.0
        %4563 = vmatpush1.msra.mxu0 0.0
        %4564 = vmatprep.subr.mxu0 0.0
        %4565 = vmatpush1.msra.mxu0 0.0
        %4566 = vmatprep.subr.mxu0 0.0
        %4567 = vmatpush1.msra.mxu0 0.0
        %4568 = vmatprep.subr.mxu0 0.0
        %4569 = vmatpush1.msra.mxu0 0.0
        %4570 = vmatprep.subr.mxu0 0.0
        %4571 = vmatpush1.msra.mxu0 0.0
        %4572 = vmatprep.subr.mxu0 0.0
        %4573 = vmatpush1.msra.mxu0 0.0
        %4574 = vmatprep.subr.mxu0 0.0
        %4575 = vmatpush1.msra.mxu0 0.0
        %4576 = vmatprep.subr.mxu0 0.0
        %4577 = vmatpush1.msra.mxu0 0.0
        %4578 = vmatprep.subr.mxu0 0.0
        %4579 = vmatpush1.msra.mxu0 0.0
        %4580 = vmatprep.subr.mxu0 0.0
        %4581 = vmatpush1.msra.mxu0 0.0
        %4582 = vmatprep.subr.mxu0 0.0
        %4583 = vmatpush1.msra.mxu0 0.0
        %4584 = vmatprep.subr.mxu0 0.0
        %4585 = vmatpush1.msra.mxu0 0.0
        %4586 = vmatprep.subr.mxu0 0.0
        %4587 = vmatpush1.msra.mxu0 0.0
        %4588 = vmatprep.subr.mxu0 0.0
        %4589 = vmatpush1.msra.mxu0 0.0
        %4590 = vmatprep.subr.mxu0 0.0
        %4591 = vmatpush1.msra.mxu0 0.0
        %4592 = vmatprep.mubr.f32.mxu0 0.0
        %4593 = vmatmul.mubr.f32.gmra.mrb[0].mxu0 %v4526
        %v4594 = vpop.f32.mrb[0].mxu0
        %v4595 = vadd.f32 %v4524, %v4594
        %v4596 = vpop.f32.mrb[0].mxu0
        %4597 = vdwg.mxu0
        %v4598 = vadd.f32 %v4420, %v4595
        %v4599 = vld [vmem:[%s1 + $0x476] sm:$0x1]
        %v4600 = vld [vmem:[%s1 + $0x477] sm:$0x1]
        %v4601 = vsel %vm2119, %v4598, 0.0
        %4602 = vadd.xlane.f32.xlu0 %v4601
        %v4603 = vpop.xlane.xlu0 %4602
        %v4604 = vmul.f32 %v4603, %v2906
        %v4605 = vsub.f32 %v4598, %v4604
        %v4606 = vmul.f32 %v4605, %v4605
        %v4607 = vsel %vm2119, %v4606, 0.0
        %4608 = vadd.xlane.f32.xlu0 %v4607
        %v4609 = vpop.xlane.xlu0 %4608
        %v4610 = vmul.f32 %v4609, %v2906
        %v4611 = vadd.f32 %v4610, 1e-05
        %v4612 = vrsqrt.pop %v4611
        %v4613 = vmul.f32 %v4605, %v4612
        %v4614 = vlaneseq
        %v4615 = vshrl.u32 %v4614, 7
        %v4616 = vsub.s32 0, %v4615
        %v4617 = vrot.slane %v4599, %v4616
        %v4618 = vmul.f32 %v4613, %v4617
        %v4619 = vlaneseq
        %v4620 = vshrl.u32 %v4619, 7
        %v4621 = vsub.s32 0, %v4620
        %v4622 = vrot.slane %v4600, %v4621
        %v4623 = vadd.f32 %v4618, %v4622
        %v4624 = vld [vmem:[%s1 + $0x440] sm:$0xff]
        %v4625 = vld [vmem:[%s1 + $0x448] sm:$0xff]
        %v4626 = vld [vmem:[%s1 + $0x450] sm:$0xff]
        %v4627 = vld [vmem:[%s1 + $0x458] sm:$0xff]
        %v4628 = vld [vmem:[%s1 + $0x478] sm:$0x1]
        %v4629 = vlaneseq
        %v4630 = vshrl.u32 %v4629, 7
        %v4631 = vsub.s32 0, %v4630
        %v4632 = vrot.slane %v4628, %v4631
        %v4634 = vsel %vm612, %v4623, 0
        %4636 = vmatprep.subr.mxu0 0.0
        %4637 = vmatpush1.msra.mxu0 %v4624
        %4638 = vmatprep.subr.mxu0 0.0
        %4639 = vmatpush1.msra.mxu0 %v4625
        %4640 = vmatprep.subr.mxu0 0.0
        %4641 = vmatpush1.msra.mxu0 %v4626
        %4642 = vmatprep.subr.mxu0 0.0
        %4643 = vmatpush1.msra.mxu0 %v4627
        %4644 = vmatprep.subr.mxu0 0.0
        %4645 = vmatpush1.msra.mxu0 0.0
        %4646 = vmatprep.subr.mxu0 0.0
        %4647 = vmatpush1.msra.mxu0 0.0
        %4648 = vmatprep.subr.mxu0 0.0
        %4649 = vmatpush1.msra.mxu0 0.0
        %4650 = vmatprep.subr.mxu0 0.0
        %4651 = vmatpush1.msra.mxu0 0.0
        %4652 = vmatprep.subr.mxu0 0.0
        %4653 = vmatpush1.msra.mxu0 0.0
        %4654 = vmatprep.subr.mxu0 0.0
        %4655 = vmatpush1.msra.mxu0 0.0
        %4656 = vmatprep.subr.mxu0 0.0
        %4657 = vmatpush1.msra.mxu0 0.0
        %4658 = vmatprep.subr.mxu0 0.0
        %4659 = vmatpush1.msra.mxu0 0.0
        %4660 = vmatprep.subr.mxu0 0.0
        %4661 = vmatpush1.msra.mxu0 0.0
        %4662 = vmatprep.subr.mxu0 0.0
        %4663 = vmatpush1.msra.mxu0 0.0
        %4664 = vmatprep.subr.mxu0 0.0
        %4665 = vmatpush1.msra.mxu0 0.0
        %4666 = vmatprep.subr.mxu0 0.0
        %4667 = vmatpush1.msra.mxu0 0.0
        %4668 = vmatprep.subr.mxu0 0.0
        %4669 = vmatpush1.msra.mxu0 0.0
        %4670 = vmatprep.subr.mxu0 0.0
        %4671 = vmatpush1.msra.mxu0 0.0
        %4672 = vmatprep.subr.mxu0 0.0
        %4673 = vmatpush1.msra.mxu0 0.0
        %4674 = vmatprep.subr.mxu0 0.0
        %4675 = vmatpush1.msra.mxu0 0.0
        %4676 = vmatprep.subr.mxu0 0.0
        %4677 = vmatpush1.msra.mxu0 0.0
        %4678 = vmatprep.subr.mxu0 0.0
        %4679 = vmatpush1.msra.mxu0 0.0
        %4680 = vmatprep.subr.mxu0 0.0
        %4681 = vmatpush1.msra.mxu0 0.0
        %4682 = vmatprep.subr.mxu0 0.0
        %4683 = vmatpush1.msra.mxu0 0.0
        %4684 = vmatprep.subr.mxu0 0.0
        %4685 = vmatpush1.msra.mxu0 0.0
        %4686 = vmatprep.subr.mxu0 0.0
        %4687 = vmatpush1.msra.mxu0 0.0
        %4688 = vmatprep.subr.mxu0 0.0
        %4689 = vmatpush1.msra.mxu0 0.0
        %4690 = vmatprep.subr.mxu0 0.0
        %4691 = vmatpush1.msra.mxu0 0.0
        %4692 = vmatprep.subr.mxu0 0.0
        %4693 = vmatpush1.msra.mxu0 0.0
        %4694 = vmatprep.subr.mxu0 0.0
        %4695 = vmatpush1.msra.mxu0 0.0
        %4696 = vmatprep.subr.mxu0 0.0
        %4697 = vmatpush1.msra.mxu0 0.0
        %4698 = vmatprep.subr.mxu0 0.0
        %4699 = vmatpush1.msra.mxu0 0.0
        %4700 = vmatprep.mubr.f32.mxu0 0.0
        %4701 = vmatmul.mubr.f32.gmra.mrb[0].mxu0 %v4634
        %v4702 = vpop.f32.mrb[0].mxu0
        %v4703 = vadd.f32 %v4632, %v4702
        %v4704 = vpop.f32.mrb[0].mxu0
        %4705 = vdwg.mxu0
        %4706 = vxpose.xlu0.b32.start [1/16] %v4703, 128
        %4707 = vxpose.xlu0.b32.cont [2/16] 0.0, 128
        %4708 = vxpose.xlu0.b32.cont [3/16] 0.0, 128
        %4709 = vxpose.xlu0.b32.cont [4/16] 0.0, 128
        %4710 = vxpose.xlu0.b32.cont [5/16] 0.0, 128
        %4711 = vxpose.xlu0.b32.cont [6/16] 0.0, 128
        %4712 = vxpose.xlu0.b32.cont [7/16] 0.0, 128
        %4713 = vxpose.xlu0.b32.cont [8/16] 0.0, 128
        %4714 = vxpose.xlu0.b32.cont [9/16] 0.0, 128
        %4715 = vxpose.xlu0.b32.cont [10/16] 0.0, 128
        %4716 = vxpose.xlu0.b32.cont [11/16] 0.0, 128
        %4717 = vxpose.xlu0.b32.cont [12/16] 0.0, 128
        %4718 = vxpose.xlu0.b32.cont [13/16] 0.0, 128
        %4719 = vxpose.xlu0.b32.cont [14/16] 0.0, 128
        %4720 = vxpose.xlu0.b32.cont [15/16] 0.0, 128
        %4721 = vxpose.xlu0.b32.end [16/16] 0.0, 128
        %v4722 = vpop.trf.xlu0
        %v4723 = vpop.trf.xlu0
        %v4724 = vpop.trf.xlu0
        %v4725 = vpop.trf.xlu0
        %v4726 = vpop.trf.xlu0
        %v4727 = vpop.trf.xlu0
        %v4728 = vpop.trf.xlu0
        %v4729 = vpop.trf.xlu0
        %v4730 = vpop.trf.xlu0
        %v4731 = vpop.trf.xlu0
        %v4732 = vpop.trf.xlu0
        %v4733 = vpop.trf.xlu0
        %v4734 = vpop.trf.xlu0
        %v4735 = vpop.trf.xlu0
        %v4736 = vpop.trf.xlu0
        %v4737 = vpop.trf.xlu0
        %v4738 = vsel %vm3334, %v4722, -inf
        %v4739 = vsel %vm3334, %v4723, -inf
        %v4740 = vsel %vm3334, %v4724, -inf
        %v4741 = vsel %vm3334, %v4725, -inf
        %v4742 = vmax.f32 %v4738, %v4739
        %v4743 = vmax.f32 %v4740, %v4741
        %v4744 = vmax.f32 %v4742, %v4743
        %v4745 = vrot.slane %v4744, 4
        %v4746 = vmax.f32 %v4744, %v4745
        %v4747 = vrot.slane %v4746, 2
        %v4748 = vmax.f32 %v4746, %v4747
        %v4749 = vrot.slane %v4748, 1
        %v4750 = vmax.f32 %v4748, %v4749
        %v4751 = vlaneseq
        %v4752 = vshrl.u32 %v4751, 7
        %v4753 = vadd.s32 %v4752, 8
        %v4754 = vadd.s32 %v4752, 16
        %v4755 = vadd.s32 %v4752, 24
        %v4756 = vcvt.s32.f32 %v4752
        %v4757 = vcvt.s32.f32 %v4753
        %v4758 = vcvt.s32.f32 %v4754
        %v4759 = vcvt.s32.f32 %v4755
        %vm4760 = vcmp.ge.f32.partialorder %v4722, %v4750
        %vm4761 = vcmp.ge.f32.partialorder %v4723, %v4750
        %vm4762 = vcmp.ge.f32.partialorder %v4724, %v4750
        %vm4763 = vcmp.ge.f32.partialorder %v4725, %v4750
        %v4764 = vsel %vm4760, %v4756, 32.0
        %v4765 = vsel %vm4761, %v4757, 32.0
        %v4766 = vsel %vm4762, %v4758, 32.0
        %v4767 = vsel %vm4763, %v4759, 32.0
        %v4768 = vsel %vm3334, %v4764, inf
        %v4769 = vsel %vm3334, %v4765, inf
        %v4770 = vsel %vm3334, %v4766, inf
        %v4771 = vsel %vm3334, %v4767, inf
        %v4772 = vmin.f32 %v4768, %v4769
        %v4773 = vmin.f32 %v4770, %v4771
        %v4774 = vmin.f32 %v4772, %v4773
        %v4775 = vrot.slane %v4774, 4
        %v4776 = vmin.f32 %v4774, %v4775
        %v4777 = vrot.slane %v4776, 2
        %v4778 = vmin.f32 %v4776, %v4777
        %v4779 = vrot.slane %v4778, 1
        %v4780 = vmin.f32 %v4778, %v4779
        %v4781 = vcvt.f32.s32.to.zero.pseudo %v4780
        %vm4782 = vcmask 49152
        %4783 = vst.msk [vmem:[%s135] sm:$0x1] %vm4782, %v4781
        %s4784 = sand.u32 %s71, 1
        %s4785 = scalar_lea.sflag [#allocation7], %s4784
        %s4786 = sand.u32 %s71, 1
        %s4787 = scalar_lea.vmem [#allocation6], %s4786
        // Predicated region
        $region29: #{wav2vec2_forward.1} parent=27 // pred_check
          %p4788 = pneg %p81
        $region30: #{wav2vec2_forward.1} parent=27 // pred_check_branch
          %4790 = sbr.rel (%p4788) target = $region32
        $region31: #{wav2vec2_forward.1} parent=27 // pred_region
          %s4792 = ssub.s32 16, 16
          %4793 = vsyncadd %s4785, %s4792
          %s4794 = smul.addr %s16, 16
          %s4795 = scalar_lea.hbm %s2, %s4794
          %s4797 = sshll.u32 %s4787, 4
          %s4798 = int_to_ptr.vmem [resolvable:$true] %s4797
          %4800 = dma.vmem_to_hbm [thread:$0]  %s4798, 16, %s4795, %s4785
        $region32: #{wav2vec2_forward.1} parent=27 // pred_fallthru
          _
      $region28: #{wav2vec2_forward.1} parent=5 // pred_fallthru
        _
      %p4801 = scmp.le.s32.totalorder 2, %s11
      // Predicated region
      $region33: #{wav2vec2_forward.1} parent=5 // pred_check
        %p4802 = pneg %p4801
      $region34: #{wav2vec2_forward.1} parent=5 // pred_check_branch
        %4804 = sbr.rel (%p4802) target = $region36
      $region35: #{wav2vec2_forward.1} parent=5 // pred_region
        %s4805 = ssub.s32 %s11, 2
        // Predicated region
        $region37: #{wav2vec2_forward.1} parent=35 // pred_check
          %p4806 = pneg %p87
        $region38: #{wav2vec2_forward.1} parent=35 // pred_check_branch
          %4808 = sbr.rel (%p4806) target = $region40
        $region39: #{wav2vec2_forward.1} parent=35 // pred_region
          %s4809 = sand.u32 %s72, 1
          %s4810 = scalar_lea.sflag [#allocation7], %s4809
          %s4811 = sand.u32 %s72, 1
          %s4812 = scalar_lea.vmem [#allocation6], %s4811
          %4813 = dma.done %s4810, 16
        $region40: #{wav2vec2_forward.1} parent=35 // pred_fallthru
          _
      $region36: #{wav2vec2_forward.1} parent=5 // pred_fallthru
        _
    $region6: #{wav2vec2_forward.1} parent=1 // loop_footer
      %s15 = sadd.s32 1, %s11
    $region7: #{wav2vec2_forward.1} parent=1 // loop_footer_branch
      %10 = sbr.rel target = $region3
    $region8: #{wav2vec2_forward.1} parent=1 // loop_exit
      _
    %4814 = vsyncpa [#allocation7], 1
    %s4815 = scalar_lea.sflag [#allocation7], 1
    %4816 = vsyncpa %s4815, 1

</llo_original>
